<compile_context>
chip_gen: v7x
topology: tpu7x:2x2x1
jax: 0.10.0
libtpu: 0.0.40
codegen_flags: <defaults>
</compile_context>

<pallas_src>
import functools

import jax
import jax.numpy as jnp
from jax.experimental import pallas as pl
from jax.experimental.pallas import tpu as pltpu

EPS = 1e-5
OUT_PAD = 128            # final ConvT: pad 12 output columns to a full 128-lane store
ROW_TILE_PREF = 512      # rows/tile (512-2048 is the pipelined HBM sweet spot); 512 keeps
                         # double-buffered tiles well inside v7x's 64 MiB VMEM; on
                         # v5e/v6e (128 MiB physical) this could be raised to 1024+.
VMEM_TILE_BUDGET = 40 * 1024 * 1024   # cap for double-buffered blocks (v7x headroom)
VMEM_LIMIT_BYTES = 48 * 1024 * 1024   # raised scoped-VMEM limit, still < v7x physical


# ---------------------------------------------------------------------------
# Kernels
# ---------------------------------------------------------------------------

def linear_stats_kernel(x_ref, w_ref, b_ref, y_ref, ssum_ref, ssq_ref):
    # Linear (matmul + bias) producing pre-BN activations + per-column partial stats.
    y = jnp.dot(x_ref[...].astype(jnp.bfloat16), w_ref[...],
                preferred_element_type=jnp.float32) + b_ref[...]
    y_ref[...] = y
    ssum_ref[...] = jnp.sum(y, axis=0, keepdims=True)[None]
    ssq_ref[...] = jnp.sum(y * y, axis=0, keepdims=True)[None]


def bn_relu_matmul_stats_kernel(x_ref, sc_ref, sh_ref, w_ref, b_ref,
                                y_ref, ssum_ref, ssq_ref):
    # Previous stage's BN (batch stats, precomputed affine) + ReLU, fused with the
    # next ConvT-as-matmul; emits per-column partial sums / sums-of-squares for this
    # stage's BN.  Epilogue math is f32; only the matmul operands are bf16.
    xn = jnp.maximum(x_ref[...] * sc_ref[...] + sh_ref[...], 0.0)
    y = jnp.dot(xn.astype(jnp.bfloat16), w_ref[...],
                preferred_element_type=jnp.float32) + b_ref[...]
    y_ref[...] = y
    ssum_ref[...] = jnp.sum(y, axis=0, keepdims=True)[None]
    ssq_ref[...] = jnp.sum(y * y, axis=0, keepdims=True)[None]


def bn_relu_matmul_kernel(x_ref, sc_ref, sh_ref, w_ref, b_ref, y_ref):
    # Final stage: BN + ReLU fused with the last ConvT (output columns zero-padded
    # to 128 lanes so the store path stays lane-dense).  No BN afterwards.
    xn = jnp.maximum(x_ref[...] * sc_ref[...] + sh_ref[...], 0.0)
    y_ref[...] = jnp.dot(xn.astype(jnp.bfloat16), w_ref[...],
                         preferred_element_type=jnp.float32) + b_ref[...]


# ---------------------------------------------------------------------------
# Launch helpers
# ---------------------------------------------------------------------------

def _const_index_map(ndim):
    return lambda i: (0,) * ndim


def _row_tile(n_rows, cin, cout, align):
    """Largest row tile that divides n_rows, is a multiple of `align`, and keeps
    double-buffered in/scale/shift/out blocks under the VMEM budget (and <= pref)."""
    bytes_per_row = 2 * 4 * (3 * cin + cout)     # 2 buffers x f32 x (in+scale+shift+out)
    cap = min(ROW_TILE_PREF, max(align, VMEM_TILE_BUDGET // bytes_per_row))
    best = None
    t = align
    limit = min(cap, n_rows)
    while t <= limit:
        if n_rows % t == 0:
            best = t
        t += align
    return best if best is not None else n_rows


def _launch(kernel, x_rows, consts, out_cols, n_stats, tile_rows):
    """Row-tiled pallas_call: x tiled over rows, `consts` (weights / bias / BN affine)
    use constant index_maps so they stay VMEM-resident across grid steps."""
    n_rows, cin = x_rows.shape
    assert n_rows % tile_rows == 0
    n_tiles = n_rows // tile_rows

    in_specs = [pl.BlockSpec((tile_rows, cin), lambda i: (i, 0))]
    in_specs += [pl.BlockSpec(c.shape, _const_index_map(c.ndim)) for c in consts]

    out_shape = [jax.ShapeDtypeStruct((n_rows, out_cols), jnp.float32)]
    out_specs = [pl.BlockSpec((tile_rows, out_cols), lambda i: (i, 0))]
    for _ in range(n_stats):
        out_shape.append(jax.ShapeDtypeStruct((n_tiles, 1, out_cols), jnp.float32))
        out_specs.append(pl.BlockSpec((1, 1, out_cols), lambda i: (i, 0, 0)))

    return pl.pallas_call(
        kernel,
        out_shape=tuple(out_shape),
        grid=(n_tiles,),
        in_specs=in_specs,
        out_specs=tuple(out_specs),
        compiler_params=pltpu.CompilerParams(
            dimension_semantics=("parallel",),
            vmem_limit_bytes=VMEM_LIMIT_BYTES),
    )(x_rows, *consts)


# ---------------------------------------------------------------------------
# BN glue (tiny per-channel vectors, plain JAX)
# ---------------------------------------------------------------------------

def _bn_affine(ssum, ssq, count, gamma, beta):
    mean = ssum / count
    var = jnp.maximum(ssq / count - mean * mean, 0.0)
    inv = jax.lax.rsqrt(var + EPS)
    scale = gamma * inv
    return scale, beta - mean * scale


def _fold_stats(partials, cout):
    # partials: (n_tiles, 1, 4*cout) per-column partials, column order (kh, kw, c).
    return partials.sum(axis=(0, 1)).reshape(4, cout).sum(axis=0)


# ---------------------------------------------------------------------------
# Parameter preparation (one-time layout + dtype transforms, outside the kernels)
# ---------------------------------------------------------------------------

def prepare_params(p, d):
    # Permute linear columns from (c, h, w) [PyTorch .view(B, d, 4, 4)] to (h, w, c)
    # so stage-0 output is already in rows/channels-last order.
    hh, ww, cc = jnp.meshgrid(jnp.arange(4), jnp.arange(4), jnp.arange(d), indexing="ij")
    perm = (cc * 16 + hh * 4 + ww).reshape(-1)

    def convw(w):  # (Cin, Cout, 2, 2) -> (Cin, 4*Cout), cols ordered (kh, kw, c_out)
        cin, cout = w.shape[0], w.shape[1]
        return jnp.transpose(w, (0, 2, 3, 1)).reshape(cin, 4 * cout)

    pp = {
        "w0": p["lin_w"][:, perm].astype(jnp.bfloat16),
        "b0": p["lin_b"][perm][None, :].astype(jnp.float32),
        "g0": p["bn0_g"][perm], "bt0": p["bn0_b"][perm],
        "w1": convw(p["ct1_w"]).astype(jnp.bfloat16),
        "b1": jnp.tile(p["ct1_b"], 4)[None, :].astype(jnp.float32),
        "g1": p["bn1_g"], "bt1": p["bn1_b"],
        "w2": convw(p["ct2_w"]).astype(jnp.bfloat16),
        "b2": jnp.tile(p["ct2_b"], 4)[None, :].astype(jnp.float32),
        "g2": p["bn2_g"], "bt2": p["bn2_b"],
    }
    w3 = convw(p["ct3_w"])                                   # (d//4, 12)
    w3p = jnp.zeros((w3.shape[0], OUT_PAD), jnp.float32).at[:, :12].set(w3)
    b3p = jnp.zeros((1, OUT_PAD), jnp.float32).at[0, :12].set(jnp.tile(p["ct3_b"], 4))
    pp["w3"] = w3p.astype(jnp.bfloat16)
    pp["b3"] = b3p
    return pp


# ---------------------------------------------------------------------------
# Forward pass
# ---------------------------------------------------------------------------

def dcgan_generator_forward(noise, pp, d):
    B = noise.shape[0]
    c1, c2 = d // 2, d // 4

    # Stage 0: Linear(128 -> 16*d) + partial stats for BN1d.
    t0 = _row_tile(B, 128, 16 * d, 8)
    y0, s0, q0 = _launch(linear_stats_kernel, noise.reshape(B, 128),
                         (pp["w0"], pp["b0"]), 16 * d, 2, t0)
    scale0, shift0 = _bn_affine(s0.sum(axis=(0, 1)), q0.sum(axis=(0, 1)),
                                float(B), pp["g0"], pp["bt0"])

    # Stage 1: BN1d + ReLU fused with ConvT(d -> d/2).  Rows = (b, h0, w0).
    # BN0 channels depend on (h0, w0, c): expand the affine to a (tile, d) pattern
    # (period 16 in rows) once in JAX; it stays VMEM-resident (constant index_map).
    r1 = B * 16
    x1 = y0.reshape(r1, d)
    t1 = _row_tile(r1, d, 4 * c1, 16)
    sc1 = jnp.tile(scale0.reshape(16, d), (t1 // 16, 1))
    sh1 = jnp.tile(shift0.reshape(16, d), (t1 // 16, 1))
    y1, s1, q1 = _launch(bn_relu_matmul_stats_kernel, x1,
                         (sc1, sh1, pp["w1"], pp["b1"]), 4 * c1, 2, t1)
    scale1, shift1 = _bn_affine(_fold_stats(s1, c1), _fold_stats(q1, c1),
                                float(4 * r1), pp["g1"], pp["bt1"])

    # Stage 2: BN2d + ReLU fused with ConvT(d/2 -> d/4).
    r2 = B * 64
    x2 = y1.reshape(r2, c1)
    t2 = _row_tile(r2, c1, 4 * c2, 8)
    y2, s2, q2 = _launch(bn_relu_matmul_stats_kernel, x2,
                         (scale1[None, :], shift1[None, :], pp["w2"], pp["b2"]),
                         4 * c2, 2, t2)
    scale2, shift2 = _bn_affine(_fold_stats(s2, c2), _fold_stats(q2, c2),
                                float(4 * r2), pp["g2"], pp["bt2"])

    # Stage 3: BN2d + ReLU fused with the final ConvT(d/4 -> 3), lane-padded output.
    r3 = B * 256
    x3 = y2.reshape(r3, c2)
    t3 = _row_tile(r3, c2, OUT_PAD, 8)
    (y3,) = _launch(bn_relu_matmul_kernel, x3,
                    (scale2[None, :], shift2[None, :], pp["w3"], pp["b3"]),
                    OUT_PAD, 0, t3)

    # Single layout pass in the whole network: rows (b,h0,w0,kh1,kw1,kh2,kw2) x cols
    # (kh3,kw3,c) -> NCHW (B, 3, 32, 32).
    out = y3[:, :12].reshape(B, 4, 4, 2, 2, 2, 2, 2, 2, 3)
    out = out.transpose(0, 9, 1, 3, 5, 7, 2, 4, 6, 8)
    return out.reshape(B, 3, 32, 32)


# ---------------------------------------------------------------------------
# Deterministic parameter init (shapes follow the PyTorch module with width d)
# ---------------------------------------------------------------------------

def init_params(key, d):
    ks = jax.random.split(key, 16)
    f = jnp.float32
    p = {}
    p["lin_w"] = (jax.random.normal(ks[0], (128, 4 * 4 * d)) * 0.05).astype(f)
    p["lin_b"] = (jax.random.normal(ks[1], (4 * 4 * d,)) * 0.05).astype(f)
    p["bn0_g"] = (1.0 + 0.1 * jax.random.normal(ks[2], (4 * 4 * d,))).astype(f)
    p["bn0_b"] = (0.1 * jax.random.normal(ks[3], (4 * 4 * d,))).astype(f)

    p["ct1_w"] = (jax.random.normal(ks[4], (d, d // 2, 2, 2)) * 0.05).astype(f)
    p["ct1_b"] = (jax.random.normal(ks[5], (d // 2,)) * 0.05).astype(f)
    p["bn1_g"] = (1.0 + 0.1 * jax.random.normal(ks[6], (d // 2,))).astype(f)
    p["bn1_b"] = (0.1 * jax.random.normal(ks[7], (d // 2,))).astype(f)

    p["ct2_w"] = (jax.random.normal(ks[8], (d // 2, d // 4, 2, 2)) * 0.05).astype(f)
    p["ct2_b"] = (jax.random.normal(ks[9], (d // 4,)) * 0.05).astype(f)
    p["bn2_g"] = (1.0 + 0.1 * jax.random.normal(ks[10], (d // 4,))).astype(f)
    p["bn2_b"] = (0.1 * jax.random.normal(ks[11], (d // 4,))).astype(f)

    p["ct3_w"] = (jax.random.normal(ks[12], (d // 4, 3, 2, 2)) * 0.05).astype(f)
    p["ct3_b"] = (jax.random.normal(ks[13], (3,)) * 0.05).astype(f)
    return p


# ---------------------------------------------------------------------------
# Pure-JAX reference (independent NCHW formulation) for correctness checking
# ---------------------------------------------------------------------------

def _ref_convt2x2(x, w, b, mm_dtype):
    y = jnp.einsum("bihw,iokl->bohkwl", x.astype(mm_dtype), w.astype(mm_dtype),
                   preferred_element_type=jnp.float32)
    Bn, Co, H, _, W, _ = y.shape
    return y.reshape(Bn, Co, 2 * H, 2 * W) + b[None, :, None, None]


def _ref_bn_relu_2d(x, g, bt):
    mean = x.mean(axis=(0, 2, 3), keepdims=True)
    var = ((x - mean) ** 2).mean(axis=(0, 2, 3), keepdims=True)
    xh = (x - mean) * jax.lax.rsqrt(var + EPS)
    return jnp.maximum(xh * g[None, :, None, None] + bt[None, :, None, None], 0.0)


def ref_forward(noise, p, d, mm_dtype):
    B = noise.shape[0]
    y = jnp.dot(noise.astype(mm_dtype), p["lin_w"].astype(mm_dtype),
                preferred_element_type=jnp.float32) + p["lin_b"]
    mean = y.mean(0)
    var = ((y - mean) ** 2).mean(0)
    y = jnp.maximum((y - mean) * jax.lax.rsqrt(var + EPS) * p["bn0_g"] + p["bn0_b"], 0.0)
    x = y.reshape(B, d, 4, 4)
    x = _ref_bn_relu_2d(_ref_convt2x2(x, p["ct1_w"], p["ct1_b"], mm_dtype),
                        p["bn1_g"], p["bn1_b"])
    x = _ref_bn_relu_2d(_ref_convt2x2(x, p["ct2_w"], p["ct2_b"], mm_dtype),
                        p["bn2_g"], p["bn2_b"])
    return _ref_convt2x2(x, p["ct3_w"], p["ct3_b"], mm_dtype)


# ---------------------------------------------------------------------------

if __name__ == "__main__":
    B = 16   # small, but large enough that stages 2/3 exercise multi-tile grids
    d = 32   # small width (module default is 256; must be divisible by 4)
    key = jax.random.PRNGKey(0)
    kp, kn = jax.random.split(key)
    params = init_params(kp, d)
    noise = jax.random.normal(kn, (B, 128), dtype=jnp.float32)

    prepped = prepare_params(params, d)
    fwd = jax.jit(functools.partial(dcgan_generator_forward, d=d))
    out = jax.block_until_ready(fwd(noise, prepped))
    assert out.shape == (B, 3, 32, 32), out.shape

    # Matched-precision reference (bf16 matmul operands, f32 stats) -> tight check.
    ref16 = ref_forward(noise, params, d, mm_dtype=jnp.bfloat16)
    err = float(jnp.max(jnp.abs(out - ref16)))
    assert err < 3e-3, f"mismatch vs matched-precision reference: {err}"

    # Full-f32 reference -> loose sanity bound on bf16 drift.
    ref32 = ref_forward(noise, params, d, mm_dtype=jnp.float32)
    err32 = float(jnp.max(jnp.abs(out - ref32)))
    assert err32 < 0.1, f"drift vs full-f32 reference too large: {err32}"

    print("KERNEL_OK")
</pallas_src>

<mosaic_0001>
module attributes {stable_mosaic.version = 11 : i64} {
  func.func @linear_stats_kernel(%arg0: i32, %arg1: memref<16x128xf32, #tpu.memory_space<vmem>>, %arg2: memref<128x512xbf16, #tpu.memory_space<vmem>>, %arg3: memref<1x512xf32, #tpu.memory_space<vmem>>, %arg4: memref<16x512xf32, #tpu.memory_space<vmem>>, %arg5: memref<1x1x512xf32, #tpu.memory_space<vmem>>, %arg6: memref<1x1x512xf32, #tpu.memory_space<vmem>>) attributes {dimension_semantics = [#tpu.dimension_semantics<parallel>], iteration_bounds = array<i64: 1>, scalar_prefetch = 0 : i64, scratch_operands = 0 : i64, tpu.core_type = #tpu.core_type<tc>, window_params = [{transform_indices = @transform_0, window_bounds = array<i64: 16, 128>}, {pipeline_mode = #tpu.pipeline_mode<synchronous>, transform_indices = @transform_1, window_bounds = array<i64: 128, 512>}, {pipeline_mode = #tpu.pipeline_mode<synchronous>, transform_indices = @transform_2, window_bounds = array<i64: 1, 512>}, {transform_indices = @transform_3, window_bounds = array<i64: 16, 512>}, {transform_indices = @transform_4, window_bounds = array<i64: 1, 1, 512>}, {transform_indices = @transform_5, window_bounds = array<i64: 1, 1, 512>}]} {
    %c0 = arith.constant 0 : index
    %c0_0 = arith.constant 0 : index
    %0 = vector.load %arg1[%c0, %c0_0] : memref<16x128xf32, #tpu.memory_space<vmem>>, vector<16x128xf32>
    %1 = arith.truncf %0 : vector<16x128xf32> to vector<16x128xbf16>
    %c0_1 = arith.constant 0 : index
    %c0_2 = arith.constant 0 : index
    %2 = vector.load %arg2[%c0_1, %c0_2] : memref<128x512xbf16, #tpu.memory_space<vmem>>, vector<128x512xbf16>
    %cst = arith.constant dense<0.000000e+00> : vector<16x512xf32>
    %3 = tpu.matmul %1, %2, %cst {dimension_numbers = #tpu.dot_dimension_numbers<[1], [0], [0], [1], [0, 0, 1, 1], [], []>} : vector<16x128xbf16>, vector<128x512xbf16>, vector<16x512xf32> -> vector<16x512xf32>
    %c0_3 = arith.constant 0 : index
    %c0_4 = arith.constant 0 : index
    %4 = vector.load %arg3[%c0_3, %c0_4] : memref<1x512xf32, #tpu.memory_space<vmem>>, vector<1x512xf32>
    %5 = vector.broadcast %4 : vector<1x512xf32> to vector<16x512xf32>
    %6 = arith.addf %3, %5 : vector<16x512xf32>
    %c0_5 = arith.constant 0 : index
    %c0_6 = arith.constant 0 : index
    %7 = vector.load %arg4[%c0_5, %c0_6] : memref<16x512xf32, #tpu.memory_space<vmem>>, vector<16x512xf32>
    tpu.vector_store %arg4[%c0_5, %c0_6], %6 {strides = array<i32>} : memref<16x512xf32, #tpu.memory_space<vmem>>, vector<16x512xf32>,
    %cst_7 = arith.constant dense<0.000000e+00> : vector<512xf32>
    %8 = vector.multi_reduction <add>, %6, %cst_7 [0] : vector<16x512xf32> to vector<512xf32>
    %9 = vector.shape_cast %8 : vector<512xf32> to vector<1x512xf32>
    %10 = vector.shape_cast %9 : vector<1x512xf32> to vector<1x1x512xf32>
    %c0_8 = arith.constant 0 : index
    %c0_9 = arith.constant 0 : index
    %c0_10 = arith.constant 0 : index
    %11 = vector.load %arg5[%c0_8, %c0_9, %c0_10] : memref<1x1x512xf32, #tpu.memory_space<vmem>>, vector<1x1x512xf32>
    tpu.vector_store %arg5[%c0_8, %c0_9, %c0_10], %10 {strides = array<i32>} : memref<1x1x512xf32, #tpu.memory_space<vmem>>, vector<1x1x512xf32>,
    %12 = arith.mulf %6, %6 : vector<16x512xf32>
    %cst_11 = arith.constant dense<0.000000e+00> : vector<512xf32>
    %13 = vector.multi_reduction <add>, %12, %cst_11 [0] : vector<16x512xf32> to vector<512xf32>
    %14 = vector.shape_cast %13 : vector<512xf32> to vector<1x512xf32>
    %15 = vector.shape_cast %14 : vector<1x512xf32> to vector<1x1x512xf32>
    %c0_12 = arith.constant 0 : index
    %c0_13 = arith.constant 0 : index
    %c0_14 = arith.constant 0 : index
    %16 = vector.load %arg6[%c0_12, %c0_13, %c0_14] : memref<1x1x512xf32, #tpu.memory_space<vmem>>, vector<1x1x512xf32>
    tpu.vector_store %arg6[%c0_12, %c0_13, %c0_14], %15 {strides = array<i32>} : memref<1x1x512xf32, #tpu.memory_space<vmem>>, vector<1x1x512xf32>,
    return
  }
  func.func @transform_0(%arg0: i32) -> (i32, i32) {
    %c0_i32 = arith.constant 0 : i32
    %c0_i32_0 = arith.constant 0 : i32
    return %arg0, %c0_i32 : i32, i32
  }
  func.func @transform_1(%arg0: i32) -> (i32, i32) {
    %c0_i32 = arith.constant 0 : i32
    %c0_i32_0 = arith.constant 0 : i32
    %c0_i32_1 = arith.constant 0 : i32
    return %c0_i32, %c0_i32_0 : i32, i32
  }
  func.func @transform_2(%arg0: i32) -> (i32, i32) {
    %c0_i32 = arith.constant 0 : i32
    %c0_i32_0 = arith.constant 0 : i32
    %c0_i32_1 = arith.constant 0 : i32
    return %c0_i32, %c0_i32_0 : i32, i32
  }
  func.func @transform_3(%arg0: i32) -> (i32, i32) {
    %c0_i32 = arith.constant 0 : i32
    %c0_i32_0 = arith.constant 0 : i32
    return %arg0, %c0_i32 : i32, i32
  }
  func.func @transform_4(%arg0: i32) -> (i32, i32, i32) {
    %c0_i32 = arith.constant 0 : i32
    %c0_i32_0 = arith.constant 0 : i32
    %c0_i32_1 = arith.constant 0 : i32
    return %arg0, %c0_i32, %c0_i32_0 : i32, i32, i32
  }
  func.func @transform_5(%arg0: i32) -> (i32, i32, i32) {
    %c0_i32 = arith.constant 0 : i32
    %c0_i32_0 = arith.constant 0 : i32
    %c0_i32_1 = arith.constant 0 : i32
    return %arg0, %c0_i32, %c0_i32_0 : i32, i32, i32
  }
}

module attributes {stable_mosaic.version = 11 : i64} {
  func.func @bn_relu_matmul_stats_kernel(%arg0: i32, %arg1: memref<256x32xf32, #tpu.memory_space<vmem>>, %arg2: memref<256x32xf32, #tpu.memory_space<vmem>>, %arg3: memref<256x32xf32, #tpu.memory_space<vmem>>, %arg4: memref<32x64xbf16, #tpu.memory_space<vmem>>, %arg5: memref<1x64xf32, #tpu.memory_space<vmem>>, %arg6: memref<256x64xf32, #tpu.memory_space<vmem>>, %arg7: memref<1x1x64xf32, #tpu.memory_space<vmem>>, %arg8: memref<1x1x64xf32, #tpu.memory_space<vmem>>) attributes {dimension_semantics = [#tpu.dimension_semantics<parallel>], iteration_bounds = array<i64: 1>, scalar_prefetch = 0 : i64, scratch_operands = 0 : i64, tpu.core_type = #tpu.core_type<tc>, window_params = [{transform_indices = @transform_0, window_bounds = array<i64: 256, 32>}, {pipeline_mode = #tpu.pipeline_mode<synchronous>, transform_indices = @transform_1, window_bounds = array<i64: 256, 32>}, {pipeline_mode = #tpu.pipeline_mode<synchronous>, transform_indices = @transform_2, window_bounds = array<i64: 256, 32>}, {pipeline_mode = #tpu.pipeline_mode<synchronous>, transform_indices = @transform_3, window_bounds = array<i64: 32, 64>}, {pipeline_mode = #tpu.pipeline_mode<synchronous>, transform_indices = @transform_4, window_bounds = array<i64: 1, 64>}, {transform_indices = @transform_5, window_bounds = array<i64: 256, 64>}, {transform_indices = @transform_6, window_bounds = array<i64: 1, 1, 64>}, {transform_indices = @transform_7, window_bounds = array<i64: 1, 1, 64>}]} {
    %c0 = arith.constant 0 : index
    %c0_0 = arith.constant 0 : index
    %0 = vector.load %arg1[%c0, %c0_0] : memref<256x32xf32, #tpu.memory_space<vmem>>, vector<256x32xf32>
    %c0_1 = arith.constant 0 : index
    %c0_2 = arith.constant 0 : index
    %1 = vector.load %arg2[%c0_1, %c0_2] : memref<256x32xf32, #tpu.memory_space<vmem>>, vector<256x32xf32>
    %2 = arith.mulf %0, %1 : vector<256x32xf32>
    %c0_3 = arith.constant 0 : index
    %c0_4 = arith.constant 0 : index
    %3 = vector.load %arg3[%c0_3, %c0_4] : memref<256x32xf32, #tpu.memory_space<vmem>>, vector<256x32xf32>
    %4 = arith.addf %2, %3 : vector<256x32xf32>
    %cst = arith.constant 0.000000e+00 : f32
    %5 = vector.broadcast %cst : f32 to vector<256x32xf32>
    %6 = arith.maximumf %4, %5 : vector<256x32xf32>
    %7 = arith.truncf %6 : vector<256x32xf32> to vector<256x32xbf16>
    %c0_5 = arith.constant 0 : index
    %c0_6 = arith.constant 0 : index
    %8 = vector.load %arg4[%c0_5, %c0_6] : memref<32x64xbf16, #tpu.memory_space<vmem>>, vector<32x64xbf16>
    %cst_7 = arith.constant dense<0.000000e+00> : vector<256x64xf32>
    %9 = tpu.matmul %7, %8, %cst_7 {dimension_numbers = #tpu.dot_dimension_numbers<[1], [0], [0], [1], [0, 0, 1, 1], [], []>} : vector<256x32xbf16>, vector<32x64xbf16>, vector<256x64xf32> -> vector<256x64xf32>
    %c0_8 = arith.constant 0 : index
    %c0_9 = arith.constant 0 : index
    %10 = vector.load %arg5[%c0_8, %c0_9] : memref<1x64xf32, #tpu.memory_space<vmem>>, vector<1x64xf32>
    %11 = vector.broadcast %10 : vector<1x64xf32> to vector<256x64xf32>
    %12 = arith.addf %9, %11 : vector<256x64xf32>
    %c0_10 = arith.constant 0 : index
    %c0_11 = arith.constant 0 : index
    %13 = vector.load %arg6[%c0_10, %c0_11] : memref<256x64xf32, #tpu.memory_space<vmem>>, vector<256x64xf32>
    tpu.vector_store %arg6[%c0_10, %c0_11], %12 {strides = array<i32>} : memref<256x64xf32, #tpu.memory_space<vmem>>, vector<256x64xf32>,
    %cst_12 = arith.constant dense<0.000000e+00> : vector<64xf32>
    %14 = vector.multi_reduction <add>, %12, %cst_12 [0] : vector<256x64xf32> to vector<64xf32>
    %15 = vector.shape_cast %14 : vector<64xf32> to vector<1x64xf32>
    %16 = vector.shape_cast %15 : vector<1x64xf32> to vector<1x1x64xf32>
    %c0_13 = arith.constant 0 : index
    %c0_14 = arith.constant 0 : index
    %c0_15 = arith.constant 0 : index
    %17 = vector.load %arg7[%c0_13, %c0_14, %c0_15] : memref<1x1x64xf32, #tpu.memory_space<vmem>>, vector<1x1x64xf32>
    tpu.vector_store %arg7[%c0_13, %c0_14, %c0_15], %16 {strides = array<i32>} : memref<1x1x64xf32, #tpu.memory_space<vmem>>, vector<1x1x64xf32>,
    %18 = arith.mulf %12, %12 : vector<256x64xf32>
    %cst_16 = arith.constant dense<0.000000e+00> : vector<64xf32>
    %19 = vector.multi_reduction <add>, %18, %cst_16 [0] : vector<256x64xf32> to vector<64xf32>
    %20 = vector.shape_cast %19 : vector<64xf32> to vector<1x64xf32>
    %21 = vector.shape_cast %20 : vector<1x64xf32> to vector<1x1x64xf32>
    %c0_17 = arith.constant 0 : index
    %c0_18 = arith.constant 0 : index
    %c0_19 = arith.constant 0 : index
    %22 = vector.load %arg8[%c0_17, %c0_18, %c0_19] : memref<1x1x64xf32, #tpu.memory_space<vmem>>, vector<1x1x64xf32>
    tpu.vector_store %arg8[%c0_17, %c0_18, %c0_19], %21 {strides = array<i32>} : memref<1x1x64xf32, #tpu.memory_space<vmem>>, vector<1x1x64xf32>,
    return
  }
  func.func @transform_0(%arg0: i32) -> (i32, i32) {
    %c0_i32 = arith.constant 0 : i32
    %c0_i32_0 = arith.constant 0 : i32
    return %arg0, %c0_i32 : i32, i32
  }
  func.func @transform_1(%arg0: i32) -> (i32, i32) {
    %c0_i32 = arith.constant 0 : i32
    %c0_i32_0 = arith.constant 0 : i32
    %c0_i32_1 = arith.constant 0 : i32
    return %c0_i32, %c0_i32_0 : i32, i32
  }
  func.func @transform_2(%arg0: i32) -> (i32, i32) {
    %c0_i32 = arith.constant 0 : i32
    %c0_i32_0 = arith.constant 0 : i32
    %c0_i32_1 = arith.constant 0 : i32
    return %c0_i32, %c0_i32_0 : i32, i32
  }
  func.func @transform_3(%arg0: i32) -> (i32, i32) {
    %c0_i32 = arith.constant 0 : i32
    %c0_i32_0 = arith.constant 0 : i32
    %c0_i32_1 = arith.constant 0 : i32
    return %c0_i32, %c0_i32_0 : i32, i32
  }
  func.func @transform_4(%arg0: i32) -> (i32, i32) {
    %c0_i32 = arith.constant 0 : i32
    %c0_i32_0 = arith.constant 0 : i32
    %c0_i32_1 = arith.constant 0 : i32
    return %c0_i32, %c0_i32_0 : i32, i32
  }
  func.func @transform_5(%arg0: i32) -> (i32, i32) {
    %c0_i32 = arith.constant 0 : i32
    %c0_i32_0 = arith.constant 0 : i32
    return %arg0, %c0_i32 : i32, i32
  }
  func.func @transform_6(%arg0: i32) -> (i32, i32, i32) {
    %c0_i32 = arith.constant 0 : i32
    %c0_i32_0 = arith.constant 0 : i32
    %c0_i32_1 = arith.constant 0 : i32
    return %arg0, %c0_i32, %c0_i32_0 : i32, i32, i32
  }
  func.func @transform_7(%arg0: i32) -> (i32, i32, i32) {
    %c0_i32 = arith.constant 0 : i32
    %c0_i32_0 = arith.constant 0 : i32
    %c0_i32_1 = arith.constant 0 : i32
    return %arg0, %c0_i32, %c0_i32_0 : i32, i32, i32
  }
}

module attributes {stable_mosaic.version = 11 : i64} {
  func.func @bn_relu_matmul_stats_kernel(%arg0: i32, %arg1: memref<512x16xf32, #tpu.memory_space<vmem>>, %arg2: memref<1x16xf32, #tpu.memory_space<vmem>>, %arg3: memref<1x16xf32, #tpu.memory_space<vmem>>, %arg4: memref<16x32xbf16, #tpu.memory_space<vmem>>, %arg5: memref<1x32xf32, #tpu.memory_space<vmem>>, %arg6: memref<512x32xf32, #tpu.memory_space<vmem>>, %arg7: memref<1x1x32xf32, #tpu.memory_space<vmem>>, %arg8: memref<1x1x32xf32, #tpu.memory_space<vmem>>) attributes {dimension_semantics = [#tpu.dimension_semantics<parallel>], iteration_bounds = array<i64: 2>, scalar_prefetch = 0 : i64, scratch_operands = 0 : i64, tpu.core_type = #tpu.core_type<tc>, window_params = [{transform_indices = @transform_0, window_bounds = array<i64: 512, 16>}, {pipeline_mode = #tpu.pipeline_mode<synchronous>, transform_indices = @transform_1, window_bounds = array<i64: 1, 16>}, {pipeline_mode = #tpu.pipeline_mode<synchronous>, transform_indices = @transform_2, window_bounds = array<i64: 1, 16>}, {pipeline_mode = #tpu.pipeline_mode<synchronous>, transform_indices = @transform_3, window_bounds = array<i64: 16, 32>}, {pipeline_mode = #tpu.pipeline_mode<synchronous>, transform_indices = @transform_4, window_bounds = array<i64: 1, 32>}, {transform_indices = @transform_5, window_bounds = array<i64: 512, 32>}, {transform_indices = @transform_6, window_bounds = array<i64: 1, 1, 32>}, {transform_indices = @transform_7, window_bounds = array<i64: 1, 1, 32>}]} {
    %c0 = arith.constant 0 : index
    %c0_0 = arith.constant 0 : index
    %0 = vector.load %arg1[%c0, %c0_0] : memref<512x16xf32, #tpu.memory_space<vmem>>, vector<512x16xf32>
    %c0_1 = arith.constant 0 : index
    %c0_2 = arith.constant 0 : index
    %1 = vector.load %arg2[%c0_1, %c0_2] : memref<1x16xf32, #tpu.memory_space<vmem>>, vector<1x16xf32>
    %2 = vector.broadcast %1 : vector<1x16xf32> to vector<512x16xf32>
    %3 = arith.mulf %0, %2 : vector<512x16xf32>
    %c0_3 = arith.constant 0 : index
    %c0_4 = arith.constant 0 : index
    %4 = vector.load %arg3[%c0_3, %c0_4] : memref<1x16xf32, #tpu.memory_space<vmem>>, vector<1x16xf32>
    %5 = vector.broadcast %4 : vector<1x16xf32> to vector<512x16xf32>
    %6 = arith.addf %3, %5 : vector<512x16xf32>
    %cst = arith.constant 0.000000e+00 : f32
    %7 = vector.broadcast %cst : f32 to vector<512x16xf32>
    %8 = arith.maximumf %6, %7 : vector<512x16xf32>
    %9 = arith.truncf %8 : vector<512x16xf32> to vector<512x16xbf16>
    %c0_5 = arith.constant 0 : index
    %c0_6 = arith.constant 0 : index
    %10 = vector.load %arg4[%c0_5, %c0_6] : memref<16x32xbf16, #tpu.memory_space<vmem>>, vector<16x32xbf16>
    %cst_7 = arith.constant dense<0.000000e+00> : vector<512x32xf32>
    %11 = tpu.matmul %9, %10, %cst_7 {dimension_numbers = #tpu.dot_dimension_numbers<[1], [0], [0], [1], [0, 0, 1, 1], [], []>} : vector<512x16xbf16>, vector<16x32xbf16>, vector<512x32xf32> -> vector<512x32xf32>
    %c0_8 = arith.constant 0 : index
    %c0_9 = arith.constant 0 : index
    %12 = vector.load %arg5[%c0_8, %c0_9] : memref<1x32xf32, #tpu.memory_space<vmem>>, vector<1x32xf32>
    %13 = vector.broadcast %12 : vector<1x32xf32> to vector<512x32xf32>
    %14 = arith.addf %11, %13 : vector<512x32xf32>
    %c0_10 = arith.constant 0 : index
    %c0_11 = arith.constant 0 : index
    %15 = vector.load %arg6[%c0_10, %c0_11] : memref<512x32xf32, #tpu.memory_space<vmem>>, vector<512x32xf32>
    tpu.vector_store %arg6[%c0_10, %c0_11], %14 {strides = array<i32>} : memref<512x32xf32, #tpu.memory_space<vmem>>, vector<512x32xf32>,
    %cst_12 = arith.constant dense<0.000000e+00> : vector<32xf32>
    %16 = vector.multi_reduction <add>, %14, %cst_12 [0] : vector<512x32xf32> to vector<32xf32>
    %17 = vector.shape_cast %16 : vector<32xf32> to vector<1x32xf32>
    %18 = vector.shape_cast %17 : vector<1x32xf32> to vector<1x1x32xf32>
    %c0_13 = arith.constant 0 : index
    %c0_14 = arith.constant 0 : index
    %c0_15 = arith.constant 0 : index
    %19 = vector.load %arg7[%c0_13, %c0_14, %c0_15] : memref<1x1x32xf32, #tpu.memory_space<vmem>>, vector<1x1x32xf32>
    tpu.vector_store %arg7[%c0_13, %c0_14, %c0_15], %18 {strides = array<i32>} : memref<1x1x32xf32, #tpu.memory_space<vmem>>, vector<1x1x32xf32>,
    %20 = arith.mulf %14, %14 : vector<512x32xf32>
    %cst_16 = arith.constant dense<0.000000e+00> : vector<32xf32>
    %21 = vector.multi_reduction <add>, %20, %cst_16 [0] : vector<512x32xf32> to vector<32xf32>
    %22 = vector.shape_cast %21 : vector<32xf32> to vector<1x32xf32>
    %23 = vector.shape_cast %22 : vector<1x32xf32> to vector<1x1x32xf32>
    %c0_17 = arith.constant 0 : index
    %c0_18 = arith.constant 0 : index
    %c0_19 = arith.constant 0 : index
    %24 = vector.load %arg8[%c0_17, %c0_18, %c0_19] : memref<1x1x32xf32, #tpu.memory_space<vmem>>, vector<1x1x32xf32>
    tpu.vector_store %arg8[%c0_17, %c0_18, %c0_19], %23 {strides = array<i32>} : memref<1x1x32xf32, #tpu.memory_space<vmem>>, vector<1x1x32xf32>,
    return
  }
  func.func @transform_0(%arg0: i32) -> (i32, i32) {
    %c0_i32 = arith.constant 0 : i32
    %c0_i32_0 = arith.constant 0 : i32
    return %arg0, %c0_i32 : i32, i32
  }
  func.func @transform_1(%arg0: i32) -> (i32, i32) {
    %c0_i32 = arith.constant 0 : i32
    %c0_i32_0 = arith.constant 0 : i32
    %c0_i32_1 = arith.constant 0 : i32
    return %c0_i32, %c0_i32_0 : i32, i32
  }
  func.func @transform_2(%arg0: i32) -> (i32, i32) {
    %c0_i32 = arith.constant 0 : i32
    %c0_i32_0 = arith.constant 0 : i32
    %c0_i32_1 = arith.constant 0 : i32
    return %c0_i32, %c0_i32_0 : i32, i32
  }
  func.func @transform_3(%arg0: i32) -> (i32, i32) {
    %c0_i32 = arith.constant 0 : i32
    %c0_i32_0 = arith.constant 0 : i32
    %c0_i32_1 = arith.constant 0 : i32
    return %c0_i32, %c0_i32_0 : i32, i32
  }
  func.func @transform_4(%arg0: i32) -> (i32, i32) {
    %c0_i32 = arith.constant 0 : i32
    %c0_i32_0 = arith.constant 0 : i32
    %c0_i32_1 = arith.constant 0 : i32
    return %c0_i32, %c0_i32_0 : i32, i32
  }
  func.func @transform_5(%arg0: i32) -> (i32, i32) {
    %c0_i32 = arith.constant 0 : i32
    %c0_i32_0 = arith.constant 0 : i32
    return %arg0, %c0_i32 : i32, i32
  }
  func.func @transform_6(%arg0: i32) -> (i32, i32, i32) {
    %c0_i32 = arith.constant 0 : i32
    %c0_i32_0 = arith.constant 0 : i32
    %c0_i32_1 = arith.constant 0 : i32
    return %arg0, %c0_i32, %c0_i32_0 : i32, i32, i32
  }
  func.func @transform_7(%arg0: i32) -> (i32, i32, i32) {
    %c0_i32 = arith.constant 0 : i32
    %c0_i32_0 = arith.constant 0 : i32
    %c0_i32_1 = arith.constant 0 : i32
    return %arg0, %c0_i32, %c0_i32_0 : i32, i32, i32
  }
}

module attributes {stable_mosaic.version = 11 : i64} {
  func.func @bn_relu_matmul_kernel(%arg0: i32, %arg1: memref<512x8xf32, #tpu.memory_space<vmem>>, %arg2: memref<1x8xf32, #tpu.memory_space<vmem>>, %arg3: memref<1x8xf32, #tpu.memory_space<vmem>>, %arg4: memref<8x128xbf16, #tpu.memory_space<vmem>>, %arg5: memref<1x128xf32, #tpu.memory_space<vmem>>, %arg6: memref<512x128xf32, #tpu.memory_space<vmem>>) attributes {dimension_semantics = [#tpu.dimension_semantics<parallel>], iteration_bounds = array<i64: 8>, scalar_prefetch = 0 : i64, scratch_operands = 0 : i64, tpu.core_type = #tpu.core_type<tc>, window_params = [{transform_indices = @transform_0, window_bounds = array<i64: 512, 8>}, {pipeline_mode = #tpu.pipeline_mode<synchronous>, transform_indices = @transform_1, window_bounds = array<i64: 1, 8>}, {pipeline_mode = #tpu.pipeline_mode<synchronous>, transform_indices = @transform_2, window_bounds = array<i64: 1, 8>}, {pipeline_mode = #tpu.pipeline_mode<synchronous>, transform_indices = @transform_3, window_bounds = array<i64: 8, 128>}, {pipeline_mode = #tpu.pipeline_mode<synchronous>, transform_indices = @transform_4, window_bounds = array<i64: 1, 128>}, {transform_indices = @transform_5, window_bounds = array<i64: 512, 128>}]} {
    %c0 = arith.constant 0 : index
    %c0_0 = arith.constant 0 : index
    %0 = vector.load %arg1[%c0, %c0_0] : memref<512x8xf32, #tpu.memory_space<vmem>>, vector<512x8xf32>
    %c0_1 = arith.constant 0 : index
    %c0_2 = arith.constant 0 : index
    %1 = vector.load %arg2[%c0_1, %c0_2] : memref<1x8xf32, #tpu.memory_space<vmem>>, vector<1x8xf32>
    %2 = vector.broadcast %1 : vector<1x8xf32> to vector<512x8xf32>
    %3 = arith.mulf %0, %2 : vector<512x8xf32>
    %c0_3 = arith.constant 0 : index
    %c0_4 = arith.constant 0 : index
    %4 = vector.load %arg3[%c0_3, %c0_4] : memref<1x8xf32, #tpu.memory_space<vmem>>, vector<1x8xf32>
    %5 = vector.broadcast %4 : vector<1x8xf32> to vector<512x8xf32>
    %6 = arith.addf %3, %5 : vector<512x8xf32>
    %cst = arith.constant 0.000000e+00 : f32
    %7 = vector.broadcast %cst : f32 to vector<512x8xf32>
    %8 = arith.maximumf %6, %7 : vector<512x8xf32>
    %9 = arith.truncf %8 : vector<512x8xf32> to vector<512x8xbf16>
    %c0_5 = arith.constant 0 : index
    %c0_6 = arith.constant 0 : index
    %10 = vector.load %arg4[%c0_5, %c0_6] : memref<8x128xbf16, #tpu.memory_space<vmem>>, vector<8x128xbf16>
    %cst_7 = arith.constant dense<0.000000e+00> : vector<512x128xf32>
    %11 = tpu.matmul %9, %10, %cst_7 {dimension_numbers = #tpu.dot_dimension_numbers<[1], [0], [0], [1], [0, 0, 1, 1], [], []>} : vector<512x8xbf16>, vector<8x128xbf16>, vector<512x128xf32> -> vector<512x128xf32>
    %c0_8 = arith.constant 0 : index
    %c0_9 = arith.constant 0 : index
    %12 = vector.load %arg5[%c0_8, %c0_9] : memref<1x128xf32, #tpu.memory_space<vmem>>, vector<1x128xf32>
    %13 = vector.broadcast %12 : vector<1x128xf32> to vector<512x128xf32>
    %14 = arith.addf %11, %13 : vector<512x128xf32>
    %c0_10 = arith.constant 0 : index
    %c0_11 = arith.constant 0 : index
    %15 = vector.load %arg6[%c0_10, %c0_11] : memref<512x128xf32, #tpu.memory_space<vmem>>, vector<512x128xf32>
    tpu.vector_store %arg6[%c0_10, %c0_11], %14 {strides = array<i32>} : memref<512x128xf32, #tpu.memory_space<vmem>>, vector<512x128xf32>,
    return
  }
  func.func @transform_0(%arg0: i32) -> (i32, i32) {
    %c0_i32 = arith.constant 0 : i32
    %c0_i32_0 = arith.constant 0 : i32
    return %arg0, %c0_i32 : i32, i32
  }
  func.func @transform_1(%arg0: i32) -> (i32, i32) {
    %c0_i32 = arith.constant 0 : i32
    %c0_i32_0 = arith.constant 0 : i32
    %c0_i32_1 = arith.constant 0 : i32
    return %c0_i32, %c0_i32_0 : i32, i32
  }
  func.func @transform_2(%arg0: i32) -> (i32, i32) {
    %c0_i32 = arith.constant 0 : i32
    %c0_i32_0 = arith.constant 0 : i32
    %c0_i32_1 = arith.constant 0 : i32
    return %c0_i32, %c0_i32_0 : i32, i32
  }
  func.func @transform_3(%arg0: i32) -> (i32, i32) {
    %c0_i32 = arith.constant 0 : i32
    %c0_i32_0 = arith.constant 0 : i32
    %c0_i32_1 = arith.constant 0 : i32
    return %c0_i32, %c0_i32_0 : i32, i32
  }
  func.func @transform_4(%arg0: i32) -> (i32, i32) {
    %c0_i32 = arith.constant 0 : i32
    %c0_i32_0 = arith.constant 0 : i32
    %c0_i32_1 = arith.constant 0 : i32
    return %c0_i32, %c0_i32_0 : i32, i32
  }
  func.func @transform_5(%arg0: i32) -> (i32, i32) {
    %c0_i32 = arith.constant 0 : i32
    %c0_i32_0 = arith.constant 0 : i32
    return %arg0, %c0_i32 : i32, i32
  }
}

</mosaic_0001>

<llo_original>
// kernel: dcgan_generator_forward.4
$region0: #{dcgan_generator_forward.4}
  #allocation0 [shape = 'u32[]', space=smem, size = 0x4, offset = 0x4, fixed_abs, tag = 'smem constant byte address 0x4 - core index']
  #allocation1 [shape = 'u32[144,128]{1,0:T(1,128)}', space=vmem, size = 0x12000, scoped, tag = 'internal scratch']
  %s0 = inlined_call_operand.hbm [shape: f32[16,128], index: 0, kind: input, shape index: {}]
  %s1 = inlined_call_operand.hbm [shape: bf16[128,512], index: 1, kind: input, shape index: {}]
  %s2 = inlined_call_operand.hbm [shape: f32[1,512], index: 2, kind: input, shape index: {}]
  %s3 = inlined_call_operand.vmem [shape: f32[16,512], index: 3, kind: output, shape index: {0}]
  %s4 = inlined_call_operand.vmem [shape: f32[1,1,512], index: 4, kind: output, shape index: {1}]
  %s5 = inlined_call_operand.vmem [shape: f32[1,1,512], index: 5, kind: output, shape index: {2}]
  %6 = xla_tuple %s3, %s4, %s5
  %s7 = sld [smem:[#allocation0]]
  $region50: #{dcgan_generator_forward.4} parent=0
    _
  %s9 = ssub.s32 1, %s7
  %s10 = scalar_select 0, %s9, %s7
  $region1: #{dcgan_generator_forward.4} parent=0
    #allocation2 [shape = 'u8[8192]{0}', space=vmem, size = 0x2000, scoped, tag = 'input window, operand 0, single buffered']
    #allocation3 [shape = 's32[1]{0}', space=sflag, size = 0x4, scoped, tag = 'scoped memory for dcgan_generator_forward.4']
    #allocation4 [shape = 'u8[131072]{0}', space=vmem, size = 0x20000, scoped, tag = 'input window, operand 1, single buffered']
    #allocation5 [shape = 's32[1]{0}', space=sflag, size = 0x4, scoped, tag = 'scoped memory for dcgan_generator_forward.4']
    #allocation6 [shape = 'u8[2048]{0}', space=vmem, size = 0x800, scoped, tag = 'input window, operand 2, single buffered']
    %11 = vsyncpa [#allocation3], 0
    %12 = vsyncpa [#allocation5], 0
    // Predicated region
    $region2: #{dcgan_generator_forward.4} parent=1 // pred_check
      _
    $region3: #{dcgan_generator_forward.4} parent=1 // pred_check_branch
      %14 = sbr.rel (0) target = $region5
    $region4: #{dcgan_generator_forward.4} parent=1 // pred_region
      %s16 = ssub.s32 256, 256
      %17 = vsyncadd [#allocation3], %s16
      %s18 = sshll.u32 [#allocation2], 4
      %s19 = int_to_ptr.vmem [resolvable:$true] %s18
      %24 = dma.hbm_to_vmem [thread:$0]  %s0, 256, %s19, [#allocation3], 128, 128, 8
    $region5: #{dcgan_generator_forward.4} parent=1 // pred_fallthru
      _
    // Predicated region
    $region6: #{dcgan_generator_forward.4} parent=1 // pred_check
      _
    $region7: #{dcgan_generator_forward.4} parent=1 // pred_check_branch
      %26 = sbr.rel (0) target = $region9
    $region8: #{dcgan_generator_forward.4} parent=1 // pred_region
      %s28 = ssub.s32 4096, 4096
      %29 = vsyncadd [#allocation5], %s28
      %s30 = sshll.u32 [#allocation4], 4
      %s31 = int_to_ptr.vmem [resolvable:$true] %s30
      %36 = dma.hbm_to_vmem [thread:$0]  %s1, 4096, %s31, [#allocation5], 256, 256, 16
    $region9: #{dcgan_generator_forward.4} parent=1 // pred_fallthru
      _
    // Predicated region
    $region10: #{dcgan_generator_forward.4} parent=1 // pred_check
      _
    $region11: #{dcgan_generator_forward.4} parent=1 // pred_check_branch
      %38 = sbr.rel (0) target = $region13
    $region12: #{dcgan_generator_forward.4} parent=1 // pred_region
      %s40 = ssub.s32 64, 64
      %41 = vsyncadd [#allocation5], %s40
      %s43 = sshll.u32 [#allocation6], 4
      %s44 = int_to_ptr.vmem [resolvable:$true] %s43
      %46 = dma.hbm_to_vmem [thread:$0]  %s2, 64, %s44, [#allocation5]
    $region13: #{dcgan_generator_forward.4} parent=1 // pred_fallthru
      _
    // Predicated region
    $region14: #{dcgan_generator_forward.4} parent=1 // pred_check
      _
    $region15: #{dcgan_generator_forward.4} parent=1 // pred_check_branch
      %48 = sbr.rel (0) target = $region17
    $region16: #{dcgan_generator_forward.4} parent=1 // pred_region
      %49 = dma.done [#allocation3], 256
    $region17: #{dcgan_generator_forward.4} parent=1 // pred_fallthru
      _
    // Predicated region
    $region18: #{dcgan_generator_forward.4} parent=1 // pred_check
      _
    $region19: #{dcgan_generator_forward.4} parent=1 // pred_check_branch
      %51 = sbr.rel (0) target = $region21
    $region20: #{dcgan_generator_forward.4} parent=1 // pred_region
      %52 = dma.done [#allocation5], 4096
    $region21: #{dcgan_generator_forward.4} parent=1 // pred_fallthru
      _
    // Predicated region
    $region22: #{dcgan_generator_forward.4} parent=1 // pred_check
      _
    $region23: #{dcgan_generator_forward.4} parent=1 // pred_check_branch
      %54 = sbr.rel (0) target = $region25
    $region24: #{dcgan_generator_forward.4} parent=1 // pred_region
      %55 = dma.done [#allocation5], 64
    $region25: #{dcgan_generator_forward.4} parent=1 // pred_fallthru
      _
    %v57 = vld [vmem:[#allocation2] sm:$0xff]
    %v58 = vld [vmem:[#allocation2 + $0x8] sm:$0xff]
    %v59 = vpack.c.bf16 %v58, %v57
    %v60 = vld [vmem:[#allocation4] sm:$0xff]
    %v61 = vld [vmem:[#allocation4 + $0x8] sm:$0xff]
    %v62 = vld [vmem:[#allocation4 + $0x10] sm:$0xff]
    %v63 = vld [vmem:[#allocation4 + $0x18] sm:$0xff]
    %v64 = vld [vmem:[#allocation4 + $0x20] sm:$0xff]
    %v65 = vld [vmem:[#allocation4 + $0x28] sm:$0xff]
    %v66 = vld [vmem:[#allocation4 + $0x30] sm:$0xff]
    %v67 = vld [vmem:[#allocation4 + $0x38] sm:$0xff]
    %v68 = vld [vmem:[#allocation4 + $0x40] sm:$0xff]
    %v69 = vld [vmem:[#allocation4 + $0x48] sm:$0xff]
    %v70 = vld [vmem:[#allocation4 + $0x50] sm:$0xff]
    %v71 = vld [vmem:[#allocation4 + $0x58] sm:$0xff]
    %v72 = vld [vmem:[#allocation4 + $0x60] sm:$0xff]
    %v73 = vld [vmem:[#allocation4 + $0x68] sm:$0xff]
    %v74 = vld [vmem:[#allocation4 + $0x70] sm:$0xff]
    %v75 = vld [vmem:[#allocation4 + $0x78] sm:$0xff]
    %v76 = vld [vmem:[#allocation4 + $0x80] sm:$0xff]
    %v77 = vld [vmem:[#allocation4 + $0x88] sm:$0xff]
    %v78 = vld [vmem:[#allocation4 + $0x90] sm:$0xff]
    %v79 = vld [vmem:[#allocation4 + $0x98] sm:$0xff]
    %v80 = vld [vmem:[#allocation4 + $0xa0] sm:$0xff]
    %v81 = vld [vmem:[#allocation4 + $0xa8] sm:$0xff]
    %v82 = vld [vmem:[#allocation4 + $0xb0] sm:$0xff]
    %v83 = vld [vmem:[#allocation4 + $0xb8] sm:$0xff]
    %v84 = vld [vmem:[#allocation4 + $0xc0] sm:$0xff]
    %v85 = vld [vmem:[#allocation4 + $0xc8] sm:$0xff]
    %v86 = vld [vmem:[#allocation4 + $0xd0] sm:$0xff]
    %v87 = vld [vmem:[#allocation4 + $0xd8] sm:$0xff]
    %v88 = vld [vmem:[#allocation4 + $0xe0] sm:$0xff]
    %v89 = vld [vmem:[#allocation4 + $0xe8] sm:$0xff]
    %v90 = vld [vmem:[#allocation4 + $0xf0] sm:$0xff]
    %v91 = vld [vmem:[#allocation4 + $0xf8] sm:$0xff]
    %v92 = vld [vmem:[#allocation6] sm:$0xf]
    %v94 = vlaneseq
    %v95 = vshrl.u32 %v94, 7
    %v96 = vsub.s32 0, %v95
    %v97 = vrot.slane %v92, %v96
    %v98 = vlaneseq
    %v99 = vshrl.u32 %v98, 7
    %v100 = vsub.s32 1, %v99
    %v101 = vrot.slane %v92, %v100
    %v102 = vlaneseq
    %v103 = vshrl.u32 %v102, 7
    %v104 = vsub.s32 2, %v103
    %v105 = vrot.slane %v92, %v104
    %v106 = vlaneseq
    %v107 = vshrl.u32 %v106, 7
    %v108 = vsub.s32 3, %v107
    %v109 = vrot.slane %v92, %v108
    %v146 = vunpack.c.l.b16 %v60
    %v147 = vunpack.c.h.b16 %v60
    %v148 = vunpack.c.l.b16 %v61
    %v149 = vunpack.c.h.b16 %v61
    %v150 = vunpack.c.l.b16 %v62
    %v151 = vunpack.c.h.b16 %v62
    %v152 = vunpack.c.l.b16 %v63
    %v153 = vunpack.c.h.b16 %v63
    %v154 = vunpack.c.l.b16 %v64
    %v155 = vunpack.c.h.b16 %v64
    %v156 = vunpack.c.l.b16 %v65
    %v157 = vunpack.c.h.b16 %v65
    %v158 = vunpack.c.l.b16 %v66
    %v159 = vunpack.c.h.b16 %v66
    %v160 = vunpack.c.l.b16 %v67
    %v161 = vunpack.c.h.b16 %v67
    %v162 = vunpack.c.l.b16 %v68
    %v163 = vunpack.c.h.b16 %v68
    %v164 = vunpack.c.l.b16 %v69
    %v165 = vunpack.c.h.b16 %v69
    %v166 = vunpack.c.l.b16 %v70
    %v167 = vunpack.c.h.b16 %v70
    %v168 = vunpack.c.l.b16 %v71
    %v169 = vunpack.c.h.b16 %v71
    %v170 = vunpack.c.l.b16 %v72
    %v171 = vunpack.c.h.b16 %v72
    %v172 = vunpack.c.l.b16 %v73
    %v173 = vunpack.c.h.b16 %v73
    %v174 = vunpack.c.l.b16 %v74
    %v175 = vunpack.c.h.b16 %v74
    %v176 = vunpack.c.l.b16 %v75
    %v177 = vunpack.c.h.b16 %v75
    %v178 = vunpack.c.l.b16 %v76
    %v179 = vunpack.c.h.b16 %v76
    %v180 = vunpack.c.l.b16 %v77
    %v181 = vunpack.c.h.b16 %v77
    %v182 = vunpack.c.l.b16 %v78
    %v183 = vunpack.c.h.b16 %v78
    %v184 = vunpack.c.l.b16 %v79
    %v185 = vunpack.c.h.b16 %v79
    %v186 = vunpack.c.l.b16 %v80
    %v187 = vunpack.c.h.b16 %v80
    %v188 = vunpack.c.l.b16 %v81
    %v189 = vunpack.c.h.b16 %v81
    %v190 = vunpack.c.l.b16 %v82
    %v191 = vunpack.c.h.b16 %v82
    %v192 = vunpack.c.l.b16 %v83
    %v193 = vunpack.c.h.b16 %v83
    %v194 = vunpack.c.l.b16 %v84
    %v195 = vunpack.c.h.b16 %v84
    %v196 = vunpack.c.l.b16 %v85
    %v197 = vunpack.c.h.b16 %v85
    %v198 = vunpack.c.l.b16 %v86
    %v199 = vunpack.c.h.b16 %v86
    %v200 = vunpack.c.l.b16 %v87
    %v201 = vunpack.c.h.b16 %v87
    %v202 = vunpack.c.l.b16 %v88
    %v203 = vunpack.c.h.b16 %v88
    %v204 = vunpack.c.l.b16 %v89
    %v205 = vunpack.c.h.b16 %v89
    %v206 = vunpack.c.l.b16 %v90
    %v207 = vunpack.c.h.b16 %v90
    %v208 = vunpack.c.l.b16 %v91
    %v209 = vunpack.c.h.b16 %v91
    %v210 = vpack.c.b16 %v150, %v146
    %v211 = vpack.c.b16 %v151, %v147
    %v212 = vpack.c.b16 %v152, %v148
    %v213 = vpack.c.b16 %v153, %v149
    %v214 = vpack.c.b16 %v158, %v154
    %v215 = vpack.c.b16 %v159, %v155
    %v216 = vpack.c.b16 %v160, %v156
    %v217 = vpack.c.b16 %v161, %v157
    %v218 = vpack.c.b16 %v166, %v162
    %v219 = vpack.c.b16 %v167, %v163
    %v220 = vpack.c.b16 %v168, %v164
    %v221 = vpack.c.b16 %v169, %v165
    %v222 = vpack.c.b16 %v174, %v170
    %v223 = vpack.c.b16 %v175, %v171
    %v224 = vpack.c.b16 %v176, %v172
    %v225 = vpack.c.b16 %v177, %v173
    %v226 = vpack.c.b16 %v182, %v178
    %v227 = vpack.c.b16 %v183, %v179
    %v228 = vpack.c.b16 %v184, %v180
    %v229 = vpack.c.b16 %v185, %v181
    %v230 = vpack.c.b16 %v190, %v186
    %v231 = vpack.c.b16 %v191, %v187
    %v232 = vpack.c.b16 %v192, %v188
    %v233 = vpack.c.b16 %v193, %v189
    %v234 = vpack.c.b16 %v198, %v194
    %v235 = vpack.c.b16 %v199, %v195
    %v236 = vpack.c.b16 %v200, %v196
    %v237 = vpack.c.b16 %v201, %v197
    %v238 = vpack.c.b16 %v206, %v202
    %v239 = vpack.c.b16 %v207, %v203
    %v240 = vpack.c.b16 %v208, %v204
    %v241 = vpack.c.b16 %v209, %v205
    %274 = vmatprep.subr.bf16.mxu0 %v211
    %275 = vmatpush1.bf16.msra.mxu0 %v210
    %276 = vmatprep.subr.bf16.mxu0 %v215
    %277 = vmatpush1.bf16.msra.mxu0 %v214
    %278 = vmatprep.subr.bf16.mxu0 %v219
    %279 = vmatpush1.bf16.msra.mxu0 %v218
    %280 = vmatprep.subr.bf16.mxu0 %v223
    %281 = vmatpush1.bf16.msra.mxu0 %v222
    %282 = vmatprep.subr.bf16.mxu0 %v227
    %283 = vmatpush1.bf16.msra.mxu0 %v226
    %284 = vmatprep.subr.bf16.mxu0 %v231
    %285 = vmatpush1.bf16.msra.mxu0 %v230
    %286 = vmatprep.subr.bf16.mxu0 %v235
    %287 = vmatpush1.bf16.msra.mxu0 %v234
    %288 = vmatprep.subr.bf16.mxu0 %v239
    %289 = vmatpush1.bf16.msra.mxu0 %v238
    %290 = vmatprep.subr.bf16.mxu0 0
    %291 = vmatpush1.bf16.msra.mxu0 0
    %292 = vmatprep.subr.bf16.mxu0 0
    %293 = vmatpush1.bf16.msra.mxu0 0
    %294 = vmatprep.subr.bf16.mxu0 0
    %295 = vmatpush1.bf16.msra.mxu0 0
    %296 = vmatprep.subr.bf16.mxu0 0
    %297 = vmatpush1.bf16.msra.mxu0 0
    %298 = vmatprep.subr.bf16.mxu0 0
    %299 = vmatpush1.bf16.msra.mxu0 0
    %300 = vmatprep.subr.bf16.mxu0 0
    %301 = vmatpush1.bf16.msra.mxu0 0
    %302 = vmatprep.subr.bf16.mxu0 0
    %303 = vmatpush1.bf16.msra.mxu0 0
    %304 = vmatprep.subr.bf16.mxu0 0
    %305 = vmatpush1.bf16.msra.mxu0 0
    %306 = vmatprep.mubr.bf16.mxu0 0
    %307 = vmatmul.mubr.bf16.gmra.mrb[0].mxu0 %v59
    %v308 = vpop.f32.mrb[0].mxu0
    %v309 = vadd.f32 %v97, %v308
    %v310 = vpop.f32.mrb[0].mxu0
    %v311 = vadd.f32 %v101, %v310
    %v312 = vpop.f32.mrb[0].mxu0
    %v313 = vadd.f32 %v97, %v312
    %v314 = vpop.f32.mrb[0].mxu0
    %v315 = vadd.f32 %v101, %v314
    %316 = vdwg.mxu0
    %317 = vmatprep.subr.bf16.mxu0 %v213
    %318 = vmatpush1.bf16.msra.mxu0 %v212
    %319 = vmatprep.subr.bf16.mxu0 %v217
    %320 = vmatpush1.bf16.msra.mxu0 %v216
    %321 = vmatprep.subr.bf16.mxu0 %v221
    %322 = vmatpush1.bf16.msra.mxu0 %v220
    %323 = vmatprep.subr.bf16.mxu0 %v225
    %324 = vmatpush1.bf16.msra.mxu0 %v224
    %325 = vmatprep.subr.bf16.mxu0 %v229
    %326 = vmatpush1.bf16.msra.mxu0 %v228
    %327 = vmatprep.subr.bf16.mxu0 %v233
    %328 = vmatpush1.bf16.msra.mxu0 %v232
    %329 = vmatprep.subr.bf16.mxu0 %v237
    %330 = vmatpush1.bf16.msra.mxu0 %v236
    %331 = vmatprep.subr.bf16.mxu0 %v241
    %332 = vmatpush1.bf16.msra.mxu0 %v240
    %333 = vmatprep.subr.bf16.mxu0 0
    %334 = vmatpush1.bf16.msra.mxu0 0
    %335 = vmatprep.subr.bf16.mxu0 0
    %336 = vmatpush1.bf16.msra.mxu0 0
    %337 = vmatprep.subr.bf16.mxu0 0
    %338 = vmatpush1.bf16.msra.mxu0 0
    %339 = vmatprep.subr.bf16.mxu0 0
    %340 = vmatpush1.bf16.msra.mxu0 0
    %341 = vmatprep.subr.bf16.mxu0 0
    %342 = vmatpush1.bf16.msra.mxu0 0
    %343 = vmatprep.subr.bf16.mxu0 0
    %344 = vmatpush1.bf16.msra.mxu0 0
    %345 = vmatprep.subr.bf16.mxu0 0
    %346 = vmatpush1.bf16.msra.mxu0 0
    %347 = vmatprep.subr.bf16.mxu0 0
    %348 = vmatpush1.bf16.msra.mxu0 0
    %349 = vmatprep.mubr.bf16.mxu0 0
    %350 = vmatmul.mubr.bf16.gmra.mrb[0].mxu0 %v59
    %v351 = vpop.f32.mrb[0].mxu0
    %v352 = vadd.f32 %v105, %v351
    %v353 = vpop.f32.mrb[0].mxu0
    %v354 = vadd.f32 %v109, %v353
    %v355 = vpop.f32.mrb[0].mxu0
    %v356 = vadd.f32 %v105, %v355
    %v357 = vpop.f32.mrb[0].mxu0
    %v358 = vadd.f32 %v109, %v357
    %359 = vdwg.mxu0
    %360 = vst [vmem:[%s3] sm:$0xff] %v309
    %361 = vst [vmem:[%s3 + $0x8] sm:$0xff] %v311
    %362 = vst [vmem:[%s3 + $0x10] sm:$0xff] %v352
    %363 = vst [vmem:[%s3 + $0x18] sm:$0xff] %v354
    %364 = vst [vmem:[%s3 + $0x20] sm:$0xff] %v313
    %365 = vst [vmem:[%s3 + $0x28] sm:$0xff] %v315
    %366 = vst [vmem:[%s3 + $0x30] sm:$0xff] %v356
    %367 = vst [vmem:[%s3 + $0x38] sm:$0xff] %v358
    %v368 = vadd.f32 %v309, %v313
    %v369 = vrot.slane %v368, 4
    %v370 = vadd.f32 %v368, %v369
    %v371 = vrot.slane %v370, 2
    %v372 = vadd.f32 %v370, %v371
    %v373 = vrot.slane %v372, 1
    %v374 = vadd.f32 %v372, %v373
    %v375 = vadd.f32 %v311, %v315
    %v376 = vrot.slane %v375, 4
    %v377 = vadd.f32 %v375, %v376
    %v378 = vrot.slane %v377, 2
    %v379 = vadd.f32 %v377, %v378
    %v380 = vrot.slane %v379, 1
    %v381 = vadd.f32 %v379, %v380
    %v382 = vadd.f32 %v352, %v356
    %v383 = vrot.slane %v382, 4
    %v384 = vadd.f32 %v382, %v383
    %v385 = vrot.slane %v384, 2
    %v386 = vadd.f32 %v384, %v385
    %v387 = vrot.slane %v386, 1
    %v388 = vadd.f32 %v386, %v387
    %v389 = vadd.f32 %v354, %v358
    %v390 = vrot.slane %v389, 4
    %v391 = vadd.f32 %v389, %v390
    %v392 = vrot.slane %v391, 2
    %v393 = vadd.f32 %v391, %v392
    %v394 = vrot.slane %v393, 1
    %v395 = vadd.f32 %v393, %v394
    %v400 = vcombine.low %v374, %v381
    %v401 = vcombine.low %v388, %v395
    %v403 = vunpack.c.l.s4 1966171168
    %v404 = vunpack.c.0.s8 %v403
    %v405 = vlaneseq
    %v406 = vshrl.u32 %v405, 7
    %v407 = vsub.s32 %v404, %v406
    %v408 = vrot.slane %v400, %v407
    %v410 = vunpack.c.l.s4 1966171168
    %v411 = vunpack.c.0.s8 %v410
    %v412 = vlaneseq
    %v413 = vshrl.u32 %v412, 7
    %v414 = vsub.s32 %v411, %v413
    %v415 = vrot.slane %v401, %v414
    %v416 = vcombine.low %v408, %v415
    %v418 = vunpack.c.l.s4 1966171168
    %v419 = vunpack.c.0.s8 %v418
    %v420 = vlaneseq
    %v421 = vshrl.u32 %v420, 7
    %v422 = vsub.s32 %v419, %v421
    %v423 = vrot.slane %v416, %v422
    %v425 = vlaneseq
    %vm426 = vcmp.ge.s32.totalorder %v425, 0
    %vm427 = vcmp.lt.s32.totalorder %v425, 512
    %vm428 = vmand %vm426, %vm427
    %429 = vst.msk [vmem:[%s4] sm:$0xf] %vm428, %v423
    %v430 = vmul.f32 %v309, %v309
    %v431 = vmul.f32 %v311, %v311
    %v432 = vmul.f32 %v352, %v352
    %v433 = vmul.f32 %v354, %v354
    %v434 = vmul.f32 %v313, %v313
    %v435 = vmul.f32 %v315, %v315
    %v436 = vmul.f32 %v356, %v356
    %v437 = vmul.f32 %v358, %v358
    %v438 = vadd.f32 %v430, %v434
    %v439 = vrot.slane %v438, 4
    %v440 = vadd.f32 %v438, %v439
    %v441 = vrot.slane %v440, 2
    %v442 = vadd.f32 %v440, %v441
    %v443 = vrot.slane %v442, 1
    %v444 = vadd.f32 %v442, %v443
    %v445 = vadd.f32 %v431, %v435
    %v446 = vrot.slane %v445, 4
    %v447 = vadd.f32 %v445, %v446
    %v448 = vrot.slane %v447, 2
    %v449 = vadd.f32 %v447, %v448
    %v450 = vrot.slane %v449, 1
    %v451 = vadd.f32 %v449, %v450
    %v452 = vadd.f32 %v432, %v436
    %v453 = vrot.slane %v452, 4
    %v454 = vadd.f32 %v452, %v453
    %v455 = vrot.slane %v454, 2
    %v456 = vadd.f32 %v454, %v455
    %v457 = vrot.slane %v456, 1
    %v458 = vadd.f32 %v456, %v457
    %v459 = vadd.f32 %v433, %v437
    %v460 = vrot.slane %v459, 4
    %v461 = vadd.f32 %v459, %v460
    %v462 = vrot.slane %v461, 2
    %v463 = vadd.f32 %v461, %v462
    %v464 = vrot.slane %v463, 1
    %v465 = vadd.f32 %v463, %v464
    %v470 = vcombine.low %v444, %v451
    %v471 = vcombine.low %v458, %v465
    %v473 = vunpack.c.l.s4 1966171168
    %v474 = vunpack.c.0.s8 %v473
    %v475 = vlaneseq
    %v476 = vshrl.u32 %v475, 7
    %v477 = vsub.s32 %v474, %v476
    %v478 = vrot.slane %v470, %v477
    %v480 = vunpack.c.l.s4 1966171168
    %v481 = vunpack.c.0.s8 %v480
    %v482 = vlaneseq
    %v483 = vshrl.u32 %v482, 7
    %v484 = vsub.s32 %v481, %v483
    %v485 = vrot.slane %v471, %v484
    %v486 = vcombine.low %v478, %v485
    %v488 = vunpack.c.l.s4 1966171168
    %v489 = vunpack.c.0.s8 %v488
    %v490 = vlaneseq
    %v491 = vshrl.u32 %v490, 7
    %v492 = vsub.s32 %v489, %v491
    %v493 = vrot.slane %v486, %v492
    %495 = vst.msk [vmem:[%s5] sm:$0xf] %vm428, %v493
    // Predicated region
    $region26: #{dcgan_generator_forward.4} parent=1 // pred_check
      _
    $region27: #{dcgan_generator_forward.4} parent=1 // pred_check_branch
      %497 = sbr.rel (0) target = $region29
    $region28: #{dcgan_generator_forward.4} parent=1 // pred_region
      _
    $region29: #{dcgan_generator_forward.4} parent=1 // pred_fallthru
      _
    // Predicated region
    $region30: #{dcgan_generator_forward.4} parent=1 // pred_check
      _
    $region31: #{dcgan_generator_forward.4} parent=1 // pred_check_branch
      %499 = sbr.rel (0) target = $region33
    $region32: #{dcgan_generator_forward.4} parent=1 // pred_region
      _
    $region33: #{dcgan_generator_forward.4} parent=1 // pred_fallthru
      _
    // Predicated region
    $region34: #{dcgan_generator_forward.4} parent=1 // pred_check
      _
    $region35: #{dcgan_generator_forward.4} parent=1 // pred_check_branch
      %501 = sbr.rel (0) target = $region37
    $region36: #{dcgan_generator_forward.4} parent=1 // pred_region
      _
    $region37: #{dcgan_generator_forward.4} parent=1 // pred_fallthru
      _
    // Predicated region
    $region38: #{dcgan_generator_forward.4} parent=1 // pred_check
      _
    $region39: #{dcgan_generator_forward.4} parent=1 // pred_check_branch
      %503 = sbr.rel (0) target = $region41
    $region40: #{dcgan_generator_forward.4} parent=1 // pred_region
      _
    $region41: #{dcgan_generator_forward.4} parent=1 // pred_fallthru
      _
    // Predicated region
    $region42: #{dcgan_generator_forward.4} parent=1 // pred_check
      _
    $region43: #{dcgan_generator_forward.4} parent=1 // pred_check_branch
      %505 = sbr.rel (0) target = $region45
    $region44: #{dcgan_generator_forward.4} parent=1 // pred_region
      _
    $region45: #{dcgan_generator_forward.4} parent=1 // pred_fallthru
      _
    // Predicated region
    $region46: #{dcgan_generator_forward.4} parent=1 // pred_check
      _
    $region47: #{dcgan_generator_forward.4} parent=1 // pred_check_branch
      %507 = sbr.rel (0) target = $region49
    $region48: #{dcgan_generator_forward.4} parent=1 // pred_region
      _
    $region49: #{dcgan_generator_forward.4} parent=1 // pred_fallthru
      _
    %508 = vsyncpa [#allocation3], 1
    %509 = vsyncpa [#allocation5], 1

// kernel: dcgan_generator_forward.5
$region0: #{dcgan_generator_forward.5}
  #allocation0 [shape = 'u32[]', space=smem, size = 0x4, offset = 0x4, fixed_abs, tag = 'smem constant byte address 0x4 - core index']
  #allocation1 [shape = 'u32[144,128]{1,0:T(1,128)}', space=vmem, size = 0x12000, scoped, tag = 'internal scratch']
  %s0 = inlined_call_operand.vmem [shape: f32[256,32], index: 0, kind: input, shape index: {}]
  %s1 = inlined_call_operand.vmem [shape: f32[256,32], index: 1, kind: input, shape index: {}]
  %s2 = inlined_call_operand.vmem [shape: f32[256,32], index: 2, kind: input, shape index: {}]
  %s3 = inlined_call_operand.hbm [shape: bf16[32,64], index: 3, kind: input, shape index: {}]
  %s4 = inlined_call_operand.hbm [shape: f32[1,64], index: 4, kind: input, shape index: {}]
  %s5 = inlined_call_operand.vmem [shape: f32[256,64], index: 5, kind: output, shape index: {0}]
  %s6 = inlined_call_operand.vmem [shape: f32[1,1,64], index: 6, kind: output, shape index: {1}]
  %s7 = inlined_call_operand.vmem [shape: f32[1,1,64], index: 7, kind: output, shape index: {2}]
  %8 = xla_tuple %s5, %s6, %s7
  %s9 = sld [smem:[#allocation0]]
  $region54: #{dcgan_generator_forward.5} parent=0
    _
  %s11 = ssub.s32 1, %s9
  %s12 = scalar_select 0, %s11, %s9
  $region1: #{dcgan_generator_forward.5} parent=0
    #allocation2 [shape = 'u8[8192]{0}', space=vmem, size = 0x2000, scoped, tag = 'input window, operand 3, single buffered']
    #allocation3 [shape = 's32[1]{0}', space=sflag, size = 0x4, scoped, tag = 'scoped memory for dcgan_generator_forward.5']
    #allocation4 [shape = 'u8[512]{0}', space=vmem, size = 0x400, scoped, tag = 'input window, operand 4, single buffered']
    #allocation5 [shape = 's32[1]{0}', space=sflag, size = 0x4, scoped, tag = 'scoped memory for dcgan_generator_forward.5']
    %13 = vsyncpa [#allocation3], 0
    %14 = vsyncpa [#allocation5], 0
    // Predicated region
    $region2: #{dcgan_generator_forward.5} parent=1 // pred_check
      _
    $region3: #{dcgan_generator_forward.5} parent=1 // pred_check_branch
      %16 = sbr.rel (0) target = $region5
    $region4: #{dcgan_generator_forward.5} parent=1 // pred_region
      _
    $region5: #{dcgan_generator_forward.5} parent=1 // pred_fallthru
      _
    // Predicated region
    $region6: #{dcgan_generator_forward.5} parent=1 // pred_check
      _
    $region7: #{dcgan_generator_forward.5} parent=1 // pred_check_branch
      %18 = sbr.rel (0) target = $region9
    $region8: #{dcgan_generator_forward.5} parent=1 // pred_region
      _
    $region9: #{dcgan_generator_forward.5} parent=1 // pred_fallthru
      _
    // Predicated region
    $region10: #{dcgan_generator_forward.5} parent=1 // pred_check
      _
    $region11: #{dcgan_generator_forward.5} parent=1 // pred_check_branch
      %20 = sbr.rel (0) target = $region13
    $region12: #{dcgan_generator_forward.5} parent=1 // pred_region
      _
    $region13: #{dcgan_generator_forward.5} parent=1 // pred_fallthru
      _
    // Predicated region
    $region14: #{dcgan_generator_forward.5} parent=1 // pred_check
      _
    $region15: #{dcgan_generator_forward.5} parent=1 // pred_check_branch
      %22 = sbr.rel (0) target = $region17
    $region16: #{dcgan_generator_forward.5} parent=1 // pred_region
      %s24 = ssub.s32 256, 256
      %25 = vsyncadd [#allocation3], %s24
      %s26 = sshll.u32 [#allocation2], 4
      %s27 = int_to_ptr.vmem [resolvable:$true] %s26
      %32 = dma.hbm_to_vmem [thread:$0]  %s3, 256, %s27, [#allocation3], 64, 64, 4
    $region17: #{dcgan_generator_forward.5} parent=1 // pred_fallthru
      _
    // Predicated region
    $region18: #{dcgan_generator_forward.5} parent=1 // pred_check
      _
    $region19: #{dcgan_generator_forward.5} parent=1 // pred_check_branch
      %34 = sbr.rel (0) target = $region21
    $region20: #{dcgan_generator_forward.5} parent=1 // pred_region
      %s36 = ssub.s32 16, 16
      %37 = vsyncadd [#allocation5], %s36
      %s39 = sshll.u32 [#allocation4], 4
      %s40 = int_to_ptr.vmem [resolvable:$true] %s39
      %42 = dma.hbm_to_vmem [thread:$0]  %s4, 16, %s40, [#allocation5]
    $region21: #{dcgan_generator_forward.5} parent=1 // pred_fallthru
      _
    // Predicated region
    $region22: #{dcgan_generator_forward.5} parent=1 // pred_check
      _
    $region23: #{dcgan_generator_forward.5} parent=1 // pred_check_branch
      %44 = sbr.rel (0) target = $region25
    $region24: #{dcgan_generator_forward.5} parent=1 // pred_region
      %45 = dma.done [#allocation3], 256
    $region25: #{dcgan_generator_forward.5} parent=1 // pred_fallthru
      _
    // Predicated region
    $region26: #{dcgan_generator_forward.5} parent=1 // pred_check
      _
    $region27: #{dcgan_generator_forward.5} parent=1 // pred_check_branch
      %47 = sbr.rel (0) target = $region29
    $region28: #{dcgan_generator_forward.5} parent=1 // pred_region
      %48 = dma.done [#allocation5], 16
    $region29: #{dcgan_generator_forward.5} parent=1 // pred_fallthru
      _
    %v50 = vld [vmem:[%s0] sm:$0xff]
    %v51 = vld [vmem:[%s0 + $0x8] sm:$0xff]
    %v52 = vld [vmem:[%s0 + $0x10] sm:$0xff]
    %v53 = vld [vmem:[%s0 + $0x18] sm:$0xff]
    %v54 = vld [vmem:[%s0 + $0x20] sm:$0xff]
    %v55 = vld [vmem:[%s0 + $0x28] sm:$0xff]
    %v56 = vld [vmem:[%s0 + $0x30] sm:$0xff]
    %v57 = vld [vmem:[%s0 + $0x38] sm:$0xff]
    %v58 = vld [vmem:[%s0 + $0x40] sm:$0xff]
    %v59 = vld [vmem:[%s0 + $0x48] sm:$0xff]
    %v60 = vld [vmem:[%s0 + $0x50] sm:$0xff]
    %v61 = vld [vmem:[%s0 + $0x58] sm:$0xff]
    %v62 = vld [vmem:[%s0 + $0x60] sm:$0xff]
    %v63 = vld [vmem:[%s0 + $0x68] sm:$0xff]
    %v64 = vld [vmem:[%s0 + $0x70] sm:$0xff]
    %v65 = vld [vmem:[%s0 + $0x78] sm:$0xff]
    %v66 = vld [vmem:[%s0 + $0x80] sm:$0xff]
    %v67 = vld [vmem:[%s0 + $0x88] sm:$0xff]
    %v68 = vld [vmem:[%s0 + $0x90] sm:$0xff]
    %v69 = vld [vmem:[%s0 + $0x98] sm:$0xff]
    %v70 = vld [vmem:[%s0 + $0xa0] sm:$0xff]
    %v71 = vld [vmem:[%s0 + $0xa8] sm:$0xff]
    %v72 = vld [vmem:[%s0 + $0xb0] sm:$0xff]
    %v73 = vld [vmem:[%s0 + $0xb8] sm:$0xff]
    %v74 = vld [vmem:[%s0 + $0xc0] sm:$0xff]
    %v75 = vld [vmem:[%s0 + $0xc8] sm:$0xff]
    %v76 = vld [vmem:[%s0 + $0xd0] sm:$0xff]
    %v77 = vld [vmem:[%s0 + $0xd8] sm:$0xff]
    %v78 = vld [vmem:[%s0 + $0xe0] sm:$0xff]
    %v79 = vld [vmem:[%s0 + $0xe8] sm:$0xff]
    %v80 = vld [vmem:[%s0 + $0xf0] sm:$0xff]
    %v81 = vld [vmem:[%s0 + $0xf8] sm:$0xff]
    %v82 = vld [vmem:[%s1] sm:$0xff]
    %v83 = vld [vmem:[%s1 + $0x8] sm:$0xff]
    %v84 = vld [vmem:[%s1 + $0x10] sm:$0xff]
    %v85 = vld [vmem:[%s1 + $0x18] sm:$0xff]
    %v86 = vld [vmem:[%s1 + $0x20] sm:$0xff]
    %v87 = vld [vmem:[%s1 + $0x28] sm:$0xff]
    %v88 = vld [vmem:[%s1 + $0x30] sm:$0xff]
    %v89 = vld [vmem:[%s1 + $0x38] sm:$0xff]
    %v90 = vld [vmem:[%s1 + $0x40] sm:$0xff]
    %v91 = vld [vmem:[%s1 + $0x48] sm:$0xff]
    %v92 = vld [vmem:[%s1 + $0x50] sm:$0xff]
    %v93 = vld [vmem:[%s1 + $0x58] sm:$0xff]
    %v94 = vld [vmem:[%s1 + $0x60] sm:$0xff]
    %v95 = vld [vmem:[%s1 + $0x68] sm:$0xff]
    %v96 = vld [vmem:[%s1 + $0x70] sm:$0xff]
    %v97 = vld [vmem:[%s1 + $0x78] sm:$0xff]
    %v98 = vld [vmem:[%s1 + $0x80] sm:$0xff]
    %v99 = vld [vmem:[%s1 + $0x88] sm:$0xff]
    %v100 = vld [vmem:[%s1 + $0x90] sm:$0xff]
    %v101 = vld [vmem:[%s1 + $0x98] sm:$0xff]
    %v102 = vld [vmem:[%s1 + $0xa0] sm:$0xff]
    %v103 = vld [vmem:[%s1 + $0xa8] sm:$0xff]
    %v104 = vld [vmem:[%s1 + $0xb0] sm:$0xff]
    %v105 = vld [vmem:[%s1 + $0xb8] sm:$0xff]
    %v106 = vld [vmem:[%s1 + $0xc0] sm:$0xff]
    %v107 = vld [vmem:[%s1 + $0xc8] sm:$0xff]
    %v108 = vld [vmem:[%s1 + $0xd0] sm:$0xff]
    %v109 = vld [vmem:[%s1 + $0xd8] sm:$0xff]
    %v110 = vld [vmem:[%s1 + $0xe0] sm:$0xff]
    %v111 = vld [vmem:[%s1 + $0xe8] sm:$0xff]
    %v112 = vld [vmem:[%s1 + $0xf0] sm:$0xff]
    %v113 = vld [vmem:[%s1 + $0xf8] sm:$0xff]
    %v114 = vmul.f32 %v50, %v82
    %v115 = vmul.f32 %v51, %v83
    %v116 = vmul.f32 %v52, %v84
    %v117 = vmul.f32 %v53, %v85
    %v118 = vmul.f32 %v54, %v86
    %v119 = vmul.f32 %v55, %v87
    %v120 = vmul.f32 %v56, %v88
    %v121 = vmul.f32 %v57, %v89
    %v122 = vmul.f32 %v58, %v90
    %v123 = vmul.f32 %v59, %v91
    %v124 = vmul.f32 %v60, %v92
    %v125 = vmul.f32 %v61, %v93
    %v126 = vmul.f32 %v62, %v94
    %v127 = vmul.f32 %v63, %v95
    %v128 = vmul.f32 %v64, %v96
    %v129 = vmul.f32 %v65, %v97
    %v130 = vmul.f32 %v66, %v98
    %v131 = vmul.f32 %v67, %v99
    %v132 = vmul.f32 %v68, %v100
    %v133 = vmul.f32 %v69, %v101
    %v134 = vmul.f32 %v70, %v102
    %v135 = vmul.f32 %v71, %v103
    %v136 = vmul.f32 %v72, %v104
    %v137 = vmul.f32 %v73, %v105
    %v138 = vmul.f32 %v74, %v106
    %v139 = vmul.f32 %v75, %v107
    %v140 = vmul.f32 %v76, %v108
    %v141 = vmul.f32 %v77, %v109
    %v142 = vmul.f32 %v78, %v110
    %v143 = vmul.f32 %v79, %v111
    %v144 = vmul.f32 %v80, %v112
    %v145 = vmul.f32 %v81, %v113
    %v146 = vld [vmem:[%s2] sm:$0xff]
    %v147 = vld [vmem:[%s2 + $0x8] sm:$0xff]
    %v148 = vld [vmem:[%s2 + $0x10] sm:$0xff]
    %v149 = vld [vmem:[%s2 + $0x18] sm:$0xff]
    %v150 = vld [vmem:[%s2 + $0x20] sm:$0xff]
    %v151 = vld [vmem:[%s2 + $0x28] sm:$0xff]
    %v152 = vld [vmem:[%s2 + $0x30] sm:$0xff]
    %v153 = vld [vmem:[%s2 + $0x38] sm:$0xff]
    %v154 = vld [vmem:[%s2 + $0x40] sm:$0xff]
    %v155 = vld [vmem:[%s2 + $0x48] sm:$0xff]
    %v156 = vld [vmem:[%s2 + $0x50] sm:$0xff]
    %v157 = vld [vmem:[%s2 + $0x58] sm:$0xff]
    %v158 = vld [vmem:[%s2 + $0x60] sm:$0xff]
    %v159 = vld [vmem:[%s2 + $0x68] sm:$0xff]
    %v160 = vld [vmem:[%s2 + $0x70] sm:$0xff]
    %v161 = vld [vmem:[%s2 + $0x78] sm:$0xff]
    %v162 = vld [vmem:[%s2 + $0x80] sm:$0xff]
    %v163 = vld [vmem:[%s2 + $0x88] sm:$0xff]
    %v164 = vld [vmem:[%s2 + $0x90] sm:$0xff]
    %v165 = vld [vmem:[%s2 + $0x98] sm:$0xff]
    %v166 = vld [vmem:[%s2 + $0xa0] sm:$0xff]
    %v167 = vld [vmem:[%s2 + $0xa8] sm:$0xff]
    %v168 = vld [vmem:[%s2 + $0xb0] sm:$0xff]
    %v169 = vld [vmem:[%s2 + $0xb8] sm:$0xff]
    %v170 = vld [vmem:[%s2 + $0xc0] sm:$0xff]
    %v171 = vld [vmem:[%s2 + $0xc8] sm:$0xff]
    %v172 = vld [vmem:[%s2 + $0xd0] sm:$0xff]
    %v173 = vld [vmem:[%s2 + $0xd8] sm:$0xff]
    %v174 = vld [vmem:[%s2 + $0xe0] sm:$0xff]
    %v175 = vld [vmem:[%s2 + $0xe8] sm:$0xff]
    %v176 = vld [vmem:[%s2 + $0xf0] sm:$0xff]
    %v177 = vld [vmem:[%s2 + $0xf8] sm:$0xff]
    %v178 = vadd.f32 %v114, %v146
    %v179 = vadd.f32 %v115, %v147
    %v180 = vadd.f32 %v116, %v148
    %v181 = vadd.f32 %v117, %v149
    %v182 = vadd.f32 %v118, %v150
    %v183 = vadd.f32 %v119, %v151
    %v184 = vadd.f32 %v120, %v152
    %v185 = vadd.f32 %v121, %v153
    %v186 = vadd.f32 %v122, %v154
    %v187 = vadd.f32 %v123, %v155
    %v188 = vadd.f32 %v124, %v156
    %v189 = vadd.f32 %v125, %v157
    %v190 = vadd.f32 %v126, %v158
    %v191 = vadd.f32 %v127, %v159
    %v192 = vadd.f32 %v128, %v160
    %v193 = vadd.f32 %v129, %v161
    %v194 = vadd.f32 %v130, %v162
    %v195 = vadd.f32 %v131, %v163
    %v196 = vadd.f32 %v132, %v164
    %v197 = vadd.f32 %v133, %v165
    %v198 = vadd.f32 %v134, %v166
    %v199 = vadd.f32 %v135, %v167
    %v200 = vadd.f32 %v136, %v168
    %v201 = vadd.f32 %v137, %v169
    %v202 = vadd.f32 %v138, %v170
    %v203 = vadd.f32 %v139, %v171
    %v204 = vadd.f32 %v140, %v172
    %v205 = vadd.f32 %v141, %v173
    %v206 = vadd.f32 %v142, %v174
    %v207 = vadd.f32 %v143, %v175
    %v208 = vadd.f32 %v144, %v176
    %v209 = vadd.f32 %v145, %v177
    %v210 = vmax.f32 %v178, 0.0
    %v211 = vmax.f32 %v179, 0.0
    %v212 = vmax.f32 %v180, 0.0
    %v213 = vmax.f32 %v181, 0.0
    %v214 = vmax.f32 %v182, 0.0
    %v215 = vmax.f32 %v183, 0.0
    %v216 = vmax.f32 %v184, 0.0
    %v217 = vmax.f32 %v185, 0.0
    %v218 = vmax.f32 %v186, 0.0
    %v219 = vmax.f32 %v187, 0.0
    %v220 = vmax.f32 %v188, 0.0
    %v221 = vmax.f32 %v189, 0.0
    %v222 = vmax.f32 %v190, 0.0
    %v223 = vmax.f32 %v191, 0.0
    %v224 = vmax.f32 %v192, 0.0
    %v225 = vmax.f32 %v193, 0.0
    %v226 = vmax.f32 %v194, 0.0
    %v227 = vmax.f32 %v195, 0.0
    %v228 = vmax.f32 %v196, 0.0
    %v229 = vmax.f32 %v197, 0.0
    %v230 = vmax.f32 %v198, 0.0
    %v231 = vmax.f32 %v199, 0.0
    %v232 = vmax.f32 %v200, 0.0
    %v233 = vmax.f32 %v201, 0.0
    %v234 = vmax.f32 %v202, 0.0
    %v235 = vmax.f32 %v203, 0.0
    %v236 = vmax.f32 %v204, 0.0
    %v237 = vmax.f32 %v205, 0.0
    %v238 = vmax.f32 %v206, 0.0
    %v239 = vmax.f32 %v207, 0.0
    %v240 = vmax.f32 %v208, 0.0
    %v241 = vmax.f32 %v209, 0.0
    %v242 = vpack.c.bf16 %v211, %v210
    %v243 = vpack.c.bf16 %v213, %v212
    %v244 = vpack.c.bf16 %v215, %v214
    %v245 = vpack.c.bf16 %v217, %v216
    %v246 = vpack.c.bf16 %v219, %v218
    %v247 = vpack.c.bf16 %v221, %v220
    %v248 = vpack.c.bf16 %v223, %v222
    %v249 = vpack.c.bf16 %v225, %v224
    %v250 = vpack.c.bf16 %v227, %v226
    %v251 = vpack.c.bf16 %v229, %v228
    %v252 = vpack.c.bf16 %v231, %v230
    %v253 = vpack.c.bf16 %v233, %v232
    %v254 = vpack.c.bf16 %v235, %v234
    %v255 = vpack.c.bf16 %v237, %v236
    %v256 = vpack.c.bf16 %v239, %v238
    %v257 = vpack.c.bf16 %v241, %v240
    %v258 = vld [vmem:[#allocation2] sm:$0xf]
    %v259 = vld [vmem:[#allocation2 + $0x4] sm:$0xf]
    %v260 = vld [vmem:[#allocation2 + $0x8] sm:$0xf]
    %v261 = vld [vmem:[#allocation2 + $0xc] sm:$0xf]
    %v262 = vld [vmem:[#allocation4] sm:$0x1]
    %v264 = vlaneseq
    %v265 = vshrl.u32 %v264, 7
    %v266 = vsub.s32 0, %v265
    %v267 = vrot.slane %v262, %v266
    %v273 = vunpack.c.l.b16 %v258
    %v274 = vunpack.c.l.b16 %v259
    %v275 = vunpack.c.l.b16 %v260
    %v276 = vunpack.c.l.b16 %v261
    %v277 = vpack.c.b16 %v274, %v273
    %v278 = vpack.c.b16 %v276, %v275
    %vm281 = vcmask 261120
    %v283 = vsel %vm281, %v242, 0
    %v286 = vsel %vm281, %v243, 0
    %v289 = vsel %vm281, %v244, 0
    %v292 = vsel %vm281, %v245, 0
    %v295 = vsel %vm281, %v246, 0
    %v298 = vsel %vm281, %v247, 0
    %v301 = vsel %vm281, %v248, 0
    %v304 = vsel %vm281, %v249, 0
    %v307 = vsel %vm281, %v250, 0
    %v310 = vsel %vm281, %v251, 0
    %v313 = vsel %vm281, %v252, 0
    %v316 = vsel %vm281, %v253, 0
    %v319 = vsel %vm281, %v254, 0
    %v322 = vsel %vm281, %v255, 0
    %v325 = vsel %vm281, %v256, 0
    %v328 = vsel %vm281, %v257, 0
    %330 = vmatprep.subr.bf16.mxu0 0
    %331 = vmatpush1.bf16.msra.mxu0 %v277
    %332 = vmatprep.subr.bf16.mxu0 0
    %333 = vmatpush1.bf16.msra.mxu0 %v278
    %334 = vmatprep.subr.bf16.mxu0 0
    %335 = vmatpush1.bf16.msra.mxu0 0
    %336 = vmatprep.subr.bf16.mxu0 0
    %337 = vmatpush1.bf16.msra.mxu0 0
    %338 = vmatprep.subr.bf16.mxu0 0
    %339 = vmatpush1.bf16.msra.mxu0 0
    %340 = vmatprep.subr.bf16.mxu0 0
    %341 = vmatpush1.bf16.msra.mxu0 0
    %342 = vmatprep.subr.bf16.mxu0 0
    %343 = vmatpush1.bf16.msra.mxu0 0
    %344 = vmatprep.subr.bf16.mxu0 0
    %345 = vmatpush1.bf16.msra.mxu0 0
    %346 = vmatprep.subr.bf16.mxu0 0
    %347 = vmatpush1.bf16.msra.mxu0 0
    %348 = vmatprep.subr.bf16.mxu0 0
    %349 = vmatpush1.bf16.msra.mxu0 0
    %350 = vmatprep.subr.bf16.mxu0 0
    %351 = vmatpush1.bf16.msra.mxu0 0
    %352 = vmatprep.subr.bf16.mxu0 0
    %353 = vmatpush1.bf16.msra.mxu0 0
    %354 = vmatprep.subr.bf16.mxu0 0
    %355 = vmatpush1.bf16.msra.mxu0 0
    %356 = vmatprep.subr.bf16.mxu0 0
    %357 = vmatpush1.bf16.msra.mxu0 0
    %358 = vmatprep.subr.bf16.mxu0 0
    %359 = vmatpush1.bf16.msra.mxu0 0
    %360 = vmatprep.subr.bf16.mxu0 0
    %361 = vmatpush1.bf16.msra.mxu0 0
    %362 = vmatprep.mubr.bf16.mxu0 0
    %363 = vmatmul.mubr.bf16.gmra.mrb[0].mxu0 %v283
    %v364 = vpop.f32.mrb[0].mxu0
    %v365 = vadd.f32 %v267, %v364
    %v366 = vpop.f32.mrb[0].mxu0
    %v367 = vpop.f32.mrb[0].mxu0
    %v368 = vadd.f32 %v267, %v367
    %v369 = vpop.f32.mrb[0].mxu0
    %370 = vmatprep.mubr.bf16.mxu0 0
    %371 = vmatmul.mubr.bf16.gmra.mrb[0].mxu0 %v286
    %v372 = vpop.f32.mrb[0].mxu0
    %v373 = vadd.f32 %v267, %v372
    %v374 = vpop.f32.mrb[0].mxu0
    %v375 = vpop.f32.mrb[0].mxu0
    %v376 = vadd.f32 %v267, %v375
    %v377 = vpop.f32.mrb[0].mxu0
    %378 = vmatprep.mubr.bf16.mxu0 0
    %379 = vmatmul.mubr.bf16.gmra.mrb[0].mxu0 %v289
    %v380 = vpop.f32.mrb[0].mxu0
    %v381 = vadd.f32 %v267, %v380
    %v382 = vpop.f32.mrb[0].mxu0
    %v383 = vpop.f32.mrb[0].mxu0
    %v384 = vadd.f32 %v267, %v383
    %v385 = vpop.f32.mrb[0].mxu0
    %386 = vmatprep.mubr.bf16.mxu0 0
    %387 = vmatmul.mubr.bf16.gmra.mrb[0].mxu0 %v292
    %v388 = vpop.f32.mrb[0].mxu0
    %v389 = vadd.f32 %v267, %v388
    %v390 = vpop.f32.mrb[0].mxu0
    %v391 = vpop.f32.mrb[0].mxu0
    %v392 = vadd.f32 %v267, %v391
    %v393 = vpop.f32.mrb[0].mxu0
    %394 = vmatprep.mubr.bf16.mxu0 0
    %395 = vmatmul.mubr.bf16.gmra.mrb[0].mxu0 %v295
    %v396 = vpop.f32.mrb[0].mxu0
    %v397 = vadd.f32 %v267, %v396
    %v398 = vpop.f32.mrb[0].mxu0
    %v399 = vpop.f32.mrb[0].mxu0
    %v400 = vadd.f32 %v267, %v399
    %v401 = vpop.f32.mrb[0].mxu0
    %402 = vmatprep.mubr.bf16.mxu0 0
    %403 = vmatmul.mubr.bf16.gmra.mrb[0].mxu0 %v298
    %v404 = vpop.f32.mrb[0].mxu0
    %v405 = vadd.f32 %v267, %v404
    %v406 = vpop.f32.mrb[0].mxu0
    %v407 = vpop.f32.mrb[0].mxu0
    %v408 = vadd.f32 %v267, %v407
    %v409 = vpop.f32.mrb[0].mxu0
    %410 = vmatprep.mubr.bf16.mxu0 0
    %411 = vmatmul.mubr.bf16.gmra.mrb[0].mxu0 %v301
    %v412 = vpop.f32.mrb[0].mxu0
    %v413 = vadd.f32 %v267, %v412
    %v414 = vpop.f32.mrb[0].mxu0
    %v415 = vpop.f32.mrb[0].mxu0
    %v416 = vadd.f32 %v267, %v415
    %v417 = vpop.f32.mrb[0].mxu0
    %418 = vmatprep.mubr.bf16.mxu0 0
    %419 = vmatmul.mubr.bf16.gmra.mrb[0].mxu0 %v304
    %v420 = vpop.f32.mrb[0].mxu0
    %v421 = vadd.f32 %v267, %v420
    %v422 = vpop.f32.mrb[0].mxu0
    %v423 = vpop.f32.mrb[0].mxu0
    %v424 = vadd.f32 %v267, %v423
    %v425 = vpop.f32.mrb[0].mxu0
    %426 = vmatprep.mubr.bf16.mxu0 0
    %427 = vmatmul.mubr.bf16.gmra.mrb[0].mxu0 %v307
    %v428 = vpop.f32.mrb[0].mxu0
    %v429 = vadd.f32 %v267, %v428
    %v430 = vpop.f32.mrb[0].mxu0
    %v431 = vpop.f32.mrb[0].mxu0
    %v432 = vadd.f32 %v267, %v431
    %v433 = vpop.f32.mrb[0].mxu0
    %434 = vmatprep.mubr.bf16.mxu0 0
    %435 = vmatmul.mubr.bf16.gmra.mrb[0].mxu0 %v310
    %v436 = vpop.f32.mrb[0].mxu0
    %v437 = vadd.f32 %v267, %v436
    %v438 = vpop.f32.mrb[0].mxu0
    %v439 = vpop.f32.mrb[0].mxu0
    %v440 = vadd.f32 %v267, %v439
    %v441 = vpop.f32.mrb[0].mxu0
    %442 = vmatprep.mubr.bf16.mxu0 0
    %443 = vmatmul.mubr.bf16.gmra.mrb[0].mxu0 %v313
    %v444 = vpop.f32.mrb[0].mxu0
    %v445 = vadd.f32 %v267, %v444
    %v446 = vpop.f32.mrb[0].mxu0
    %v447 = vpop.f32.mrb[0].mxu0
    %v448 = vadd.f32 %v267, %v447
    %v449 = vpop.f32.mrb[0].mxu0
    %450 = vmatprep.mubr.bf16.mxu0 0
    %451 = vmatmul.mubr.bf16.gmra.mrb[0].mxu0 %v316
    %v452 = vpop.f32.mrb[0].mxu0
    %v453 = vadd.f32 %v267, %v452
    %v454 = vpop.f32.mrb[0].mxu0
    %v455 = vpop.f32.mrb[0].mxu0
    %v456 = vadd.f32 %v267, %v455
    %v457 = vpop.f32.mrb[0].mxu0
    %458 = vmatprep.mubr.bf16.mxu0 0
    %459 = vmatmul.mubr.bf16.gmra.mrb[0].mxu0 %v319
    %v460 = vpop.f32.mrb[0].mxu0
    %v461 = vadd.f32 %v267, %v460
    %v462 = vpop.f32.mrb[0].mxu0
    %v463 = vpop.f32.mrb[0].mxu0
    %v464 = vadd.f32 %v267, %v463
    %v465 = vpop.f32.mrb[0].mxu0
    %466 = vmatprep.mubr.bf16.mxu0 0
    %467 = vmatmul.mubr.bf16.gmra.mrb[0].mxu0 %v322
    %v468 = vpop.f32.mrb[0].mxu0
    %v469 = vadd.f32 %v267, %v468
    %v470 = vpop.f32.mrb[0].mxu0
    %v471 = vpop.f32.mrb[0].mxu0
    %v472 = vadd.f32 %v267, %v471
    %v473 = vpop.f32.mrb[0].mxu0
    %474 = vmatprep.mubr.bf16.mxu0 0
    %475 = vmatmul.mubr.bf16.gmra.mrb[0].mxu0 %v325
    %v476 = vpop.f32.mrb[0].mxu0
    %v477 = vadd.f32 %v267, %v476
    %v478 = vpop.f32.mrb[0].mxu0
    %v479 = vpop.f32.mrb[0].mxu0
    %v480 = vadd.f32 %v267, %v479
    %v481 = vpop.f32.mrb[0].mxu0
    %482 = vmatprep.mubr.bf16.mxu0 0
    %483 = vmatmul.mubr.bf16.gmra.mrb[0].mxu0 %v328
    %v484 = vpop.f32.mrb[0].mxu0
    %v485 = vadd.f32 %v267, %v484
    %v486 = vpop.f32.mrb[0].mxu0
    %v487 = vpop.f32.mrb[0].mxu0
    %v488 = vadd.f32 %v267, %v487
    %v489 = vpop.f32.mrb[0].mxu0
    %490 = vdwg.mxu0
    %vm491 = vcmask 523264
    %492 = vst.msk [vmem:[%s5] sm:$0xff] %vm491, %v365
    %493 = vst.msk [vmem:[%s5 + $0x8] sm:$0xff] %vm491, %v368
    %494 = vst.msk [vmem:[%s5 + $0x10] sm:$0xff] %vm491, %v373
    %495 = vst.msk [vmem:[%s5 + $0x18] sm:$0xff] %vm491, %v376
    %496 = vst.msk [vmem:[%s5 + $0x20] sm:$0xff] %vm491, %v381
    %497 = vst.msk [vmem:[%s5 + $0x28] sm:$0xff] %vm491, %v384
    %498 = vst.msk [vmem:[%s5 + $0x30] sm:$0xff] %vm491, %v389
    %499 = vst.msk [vmem:[%s5 + $0x38] sm:$0xff] %vm491, %v392
    %500 = vst.msk [vmem:[%s5 + $0x40] sm:$0xff] %vm491, %v397
    %501 = vst.msk [vmem:[%s5 + $0x48] sm:$0xff] %vm491, %v400
    %502 = vst.msk [vmem:[%s5 + $0x50] sm:$0xff] %vm491, %v405
    %503 = vst.msk [vmem:[%s5 + $0x58] sm:$0xff] %vm491, %v408
    %504 = vst.msk [vmem:[%s5 + $0x60] sm:$0xff] %vm491, %v413
    %505 = vst.msk [vmem:[%s5 + $0x68] sm:$0xff] %vm491, %v416
    %506 = vst.msk [vmem:[%s5 + $0x70] sm:$0xff] %vm491, %v421
    %507 = vst.msk [vmem:[%s5 + $0x78] sm:$0xff] %vm491, %v424
    %508 = vst.msk [vmem:[%s5 + $0x80] sm:$0xff] %vm491, %v429
    %509 = vst.msk [vmem:[%s5 + $0x88] sm:$0xff] %vm491, %v432
    %510 = vst.msk [vmem:[%s5 + $0x90] sm:$0xff] %vm491, %v437
    %511 = vst.msk [vmem:[%s5 + $0x98] sm:$0xff] %vm491, %v440
    %512 = vst.msk [vmem:[%s5 + $0xa0] sm:$0xff] %vm491, %v445
    %513 = vst.msk [vmem:[%s5 + $0xa8] sm:$0xff] %vm491, %v448
    %514 = vst.msk [vmem:[%s5 + $0xb0] sm:$0xff] %vm491, %v453
    %515 = vst.msk [vmem:[%s5 + $0xb8] sm:$0xff] %vm491, %v456
    %516 = vst.msk [vmem:[%s5 + $0xc0] sm:$0xff] %vm491, %v461
    %517 = vst.msk [vmem:[%s5 + $0xc8] sm:$0xff] %vm491, %v464
    %518 = vst.msk [vmem:[%s5 + $0xd0] sm:$0xff] %vm491, %v469
    %519 = vst.msk [vmem:[%s5 + $0xd8] sm:$0xff] %vm491, %v472
    %520 = vst.msk [vmem:[%s5 + $0xe0] sm:$0xff] %vm491, %v477
    %521 = vst.msk [vmem:[%s5 + $0xe8] sm:$0xff] %vm491, %v480
    %522 = vst.msk [vmem:[%s5 + $0xf0] sm:$0xff] %vm491, %v485
    %523 = vst.msk [vmem:[%s5 + $0xf8] sm:$0xff] %vm491, %v488
    %v524 = vsel %vm491, %v365, 0.0
    %v525 = vsel %vm491, %v368, 0.0
    %v526 = vadd.f32 %v524, %v525
    %v527 = vsel %vm491, %v373, 0.0
    %v528 = vadd.f32 %v526, %v527
    %v529 = vsel %vm491, %v376, 0.0
    %v530 = vadd.f32 %v528, %v529
    %v531 = vsel %vm491, %v381, 0.0
    %v532 = vadd.f32 %v530, %v531
    %v533 = vsel %vm491, %v384, 0.0
    %v534 = vadd.f32 %v532, %v533
    %v535 = vsel %vm491, %v389, 0.0
    %v536 = vadd.f32 %v534, %v535
    %v537 = vsel %vm491, %v392, 0.0
    %v538 = vadd.f32 %v536, %v537
    %v539 = vsel %vm491, %v397, 0.0
    %v540 = vadd.f32 %v538, %v539
    %v541 = vsel %vm491, %v400, 0.0
    %v542 = vadd.f32 %v540, %v541
    %v543 = vsel %vm491, %v405, 0.0
    %v544 = vadd.f32 %v542, %v543
    %v545 = vsel %vm491, %v408, 0.0
    %v546 = vadd.f32 %v544, %v545
    %v547 = vsel %vm491, %v413, 0.0
    %v548 = vadd.f32 %v546, %v547
    %v549 = vsel %vm491, %v416, 0.0
    %v550 = vadd.f32 %v548, %v549
    %v551 = vsel %vm491, %v421, 0.0
    %v552 = vadd.f32 %v550, %v551
    %v553 = vsel %vm491, %v424, 0.0
    %v554 = vadd.f32 %v552, %v553
    %v555 = vsel %vm491, %v429, 0.0
    %v556 = vadd.f32 %v554, %v555
    %v557 = vsel %vm491, %v432, 0.0
    %v558 = vadd.f32 %v556, %v557
    %v559 = vsel %vm491, %v437, 0.0
    %v560 = vadd.f32 %v558, %v559
    %v561 = vsel %vm491, %v440, 0.0
    %v562 = vadd.f32 %v560, %v561
    %v563 = vsel %vm491, %v445, 0.0
    %v564 = vadd.f32 %v562, %v563
    %v565 = vsel %vm491, %v448, 0.0
    %v566 = vadd.f32 %v564, %v565
    %v567 = vsel %vm491, %v453, 0.0
    %v568 = vadd.f32 %v566, %v567
    %v569 = vsel %vm491, %v456, 0.0
    %v570 = vadd.f32 %v568, %v569
    %v571 = vsel %vm491, %v461, 0.0
    %v572 = vadd.f32 %v570, %v571
    %v573 = vsel %vm491, %v464, 0.0
    %v574 = vadd.f32 %v572, %v573
    %v575 = vsel %vm491, %v469, 0.0
    %v576 = vadd.f32 %v574, %v575
    %v577 = vsel %vm491, %v472, 0.0
    %v578 = vadd.f32 %v576, %v577
    %v579 = vsel %vm491, %v477, 0.0
    %v580 = vadd.f32 %v578, %v579
    %v581 = vsel %vm491, %v480, 0.0
    %v582 = vadd.f32 %v580, %v581
    %v583 = vsel %vm491, %v485, 0.0
    %v584 = vadd.f32 %v582, %v583
    %v585 = vsel %vm491, %v488, 0.0
    %v586 = vadd.f32 %v584, %v585
    %v587 = vrot.slane %v586, 4
    %v588 = vadd.f32 %v586, %v587
    %v589 = vrot.slane %v588, 2
    %v590 = vadd.f32 %v588, %v589
    %v591 = vrot.slane %v590, 1
    %v592 = vadd.f32 %v590, %v591
    %vm593 = vcmask 516096
    %594 = vst.msk [vmem:[%s6] sm:$0x1] %vm593, %v592
    %v595 = vmul.f32 %v365, %v365
    %v596 = vmul.f32 %v368, %v368
    %v597 = vmul.f32 %v373, %v373
    %v598 = vmul.f32 %v376, %v376
    %v599 = vmul.f32 %v381, %v381
    %v600 = vmul.f32 %v384, %v384
    %v601 = vmul.f32 %v389, %v389
    %v602 = vmul.f32 %v392, %v392
    %v603 = vmul.f32 %v397, %v397
    %v604 = vmul.f32 %v400, %v400
    %v605 = vmul.f32 %v405, %v405
    %v606 = vmul.f32 %v408, %v408
    %v607 = vmul.f32 %v413, %v413
    %v608 = vmul.f32 %v416, %v416
    %v609 = vmul.f32 %v421, %v421
    %v610 = vmul.f32 %v424, %v424
    %v611 = vmul.f32 %v429, %v429
    %v612 = vmul.f32 %v432, %v432
    %v613 = vmul.f32 %v437, %v437
    %v614 = vmul.f32 %v440, %v440
    %v615 = vmul.f32 %v445, %v445
    %v616 = vmul.f32 %v448, %v448
    %v617 = vmul.f32 %v453, %v453
    %v618 = vmul.f32 %v456, %v456
    %v619 = vmul.f32 %v461, %v461
    %v620 = vmul.f32 %v464, %v464
    %v621 = vmul.f32 %v469, %v469
    %v622 = vmul.f32 %v472, %v472
    %v623 = vmul.f32 %v477, %v477
    %v624 = vmul.f32 %v480, %v480
    %v625 = vmul.f32 %v485, %v485
    %v626 = vmul.f32 %v488, %v488
    %v627 = vsel %vm491, %v595, 0.0
    %v628 = vsel %vm491, %v596, 0.0
    %v629 = vadd.f32 %v627, %v628
    %v630 = vsel %vm491, %v597, 0.0
    %v631 = vadd.f32 %v629, %v630
    %v632 = vsel %vm491, %v598, 0.0
    %v633 = vadd.f32 %v631, %v632
    %v634 = vsel %vm491, %v599, 0.0
    %v635 = vadd.f32 %v633, %v634
    %v636 = vsel %vm491, %v600, 0.0
    %v637 = vadd.f32 %v635, %v636
    %v638 = vsel %vm491, %v601, 0.0
    %v639 = vadd.f32 %v637, %v638
    %v640 = vsel %vm491, %v602, 0.0
    %v641 = vadd.f32 %v639, %v640
    %v642 = vsel %vm491, %v603, 0.0
    %v643 = vadd.f32 %v641, %v642
    %v644 = vsel %vm491, %v604, 0.0
    %v645 = vadd.f32 %v643, %v644
    %v646 = vsel %vm491, %v605, 0.0
    %v647 = vadd.f32 %v645, %v646
    %v648 = vsel %vm491, %v606, 0.0
    %v649 = vadd.f32 %v647, %v648
    %v650 = vsel %vm491, %v607, 0.0
    %v651 = vadd.f32 %v649, %v650
    %v652 = vsel %vm491, %v608, 0.0
    %v653 = vadd.f32 %v651, %v652
    %v654 = vsel %vm491, %v609, 0.0
    %v655 = vadd.f32 %v653, %v654
    %v656 = vsel %vm491, %v610, 0.0
    %v657 = vadd.f32 %v655, %v656
    %v658 = vsel %vm491, %v611, 0.0
    %v659 = vadd.f32 %v657, %v658
    %v660 = vsel %vm491, %v612, 0.0
    %v661 = vadd.f32 %v659, %v660
    %v662 = vsel %vm491, %v613, 0.0
    %v663 = vadd.f32 %v661, %v662
    %v664 = vsel %vm491, %v614, 0.0
    %v665 = vadd.f32 %v663, %v664
    %v666 = vsel %vm491, %v615, 0.0
    %v667 = vadd.f32 %v665, %v666
    %v668 = vsel %vm491, %v616, 0.0
    %v669 = vadd.f32 %v667, %v668
    %v670 = vsel %vm491, %v617, 0.0
    %v671 = vadd.f32 %v669, %v670
    %v672 = vsel %vm491, %v618, 0.0
    %v673 = vadd.f32 %v671, %v672
    %v674 = vsel %vm491, %v619, 0.0
    %v675 = vadd.f32 %v673, %v674
    %v676 = vsel %vm491, %v620, 0.0
    %v677 = vadd.f32 %v675, %v676
    %v678 = vsel %vm491, %v621, 0.0
    %v679 = vadd.f32 %v677, %v678
    %v680 = vsel %vm491, %v622, 0.0
    %v681 = vadd.f32 %v679, %v680
    %v682 = vsel %vm491, %v623, 0.0
    %v683 = vadd.f32 %v681, %v682
    %v684 = vsel %vm491, %v624, 0.0
    %v685 = vadd.f32 %v683, %v684
    %v686 = vsel %vm491, %v625, 0.0
    %v687 = vadd.f32 %v685, %v686
    %v688 = vsel %vm491, %v626, 0.0
    %v689 = vadd.f32 %v687, %v688
    %v690 = vrot.slane %v689, 4
    %v691 = vadd.f32 %v689, %v690
    %v692 = vrot.slane %v691, 2
    %v693 = vadd.f32 %v691, %v692
    %v694 = vrot.slane %v693, 1
    %v695 = vadd.f32 %v693, %v694
    %696 = vst.msk [vmem:[%s7] sm:$0x1] %vm593, %v695
    // Predicated region
    $region30: #{dcgan_generator_forward.5} parent=1 // pred_check
      _
    $region31: #{dcgan_generator_forward.5} parent=1 // pred_check_branch
      %698 = sbr.rel (0) target = $region33
    $region32: #{dcgan_generator_forward.5} parent=1 // pred_region
      _
    $region33: #{dcgan_generator_forward.5} parent=1 // pred_fallthru
      _
    // Predicated region
    $region34: #{dcgan_generator_forward.5} parent=1 // pred_check
      _
    $region35: #{dcgan_generator_forward.5} parent=1 // pred_check_branch
      %700 = sbr.rel (0) target = $region37
    $region36: #{dcgan_generator_forward.5} parent=1 // pred_region
      _
    $region37: #{dcgan_generator_forward.5} parent=1 // pred_fallthru
      _
    // Predicated region
    $region38: #{dcgan_generator_forward.5} parent=1 // pred_check
      _
    $region39: #{dcgan_generator_forward.5} parent=1 // pred_check_branch
      %702 = sbr.rel (0) target = $region41
    $region40: #{dcgan_generator_forward.5} parent=1 // pred_region
      _
    $region41: #{dcgan_generator_forward.5} parent=1 // pred_fallthru
      _
    // Predicated region
    $region42: #{dcgan_generator_forward.5} parent=1 // pred_check
      _
    $region43: #{dcgan_generator_forward.5} parent=1 // pred_check_branch
      %704 = sbr.rel (0) target = $region45
    $region44: #{dcgan_generator_forward.5} parent=1 // pred_region
      _
    $region45: #{dcgan_generator_forward.5} parent=1 // pred_fallthru
      _
    // Predicated region
    $region46: #{dcgan_generator_forward.5} parent=1 // pred_check
      _
    $region47: #{dcgan_generator_forward.5} parent=1 // pred_check_branch
      %706 = sbr.rel (0) target = $region49
    $region48: #{dcgan_generator_forward.5} parent=1 // pred_region
      _
    $region49: #{dcgan_generator_forward.5} parent=1 // pred_fallthru
      _
    // Predicated region
    $region50: #{dcgan_generator_forward.5} parent=1 // pred_check
      _
    $region51: #{dcgan_generator_forward.5} parent=1 // pred_check_branch
      %708 = sbr.rel (0) target = $region53
    $region52: #{dcgan_generator_forward.5} parent=1 // pred_region
      _
    $region53: #{dcgan_generator_forward.5} parent=1 // pred_fallthru
      _
    %709 = vsyncpa [#allocation3], 1
    %710 = vsyncpa [#allocation5], 1

// kernel: dcgan_generator_forward.7
$region0: #{dcgan_generator_forward.7}
  #allocation0 [shape = 'u32[]', space=smem, size = 0x4, offset = 0x4, fixed_abs, tag = 'smem constant byte address 0x4 - core index']
  #allocation1 [shape = 'u32[144,128]{1,0:T(1,128)}', space=vmem, size = 0x12000, scoped, tag = 'internal scratch']
  %s0 = inlined_call_operand.vmem [shape: f32[4096,8], index: 0, kind: input, shape index: {}]
  %s1 = inlined_call_operand.vmem [shape: f32[1,8], index: 1, kind: input, shape index: {}]
  %s2 = inlined_call_operand.vmem [shape: f32[1,8], index: 2, kind: input, shape index: {}]
  %s3 = inlined_call_operand.vmem [shape: bf16[8,128], index: 3, kind: input, shape index: {}]
  %s4 = inlined_call_operand.vmem [shape: f32[1,128], index: 4, kind: input, shape index: {}]
  %s5 = inlined_call_operand.vmem [shape: f32[4096,128], index: 5, kind: output, shape index: {}]
  %s6 = sld [smem:[#allocation0]]
  $region53: #{dcgan_generator_forward.7} parent=0
    _
  %s8 = ssub.s32 1, %s6
  %s9 = scalar_select 0, %s8, %s6
  loop: start=0, step=1, limit=10
  $region2: #{dcgan_generator_forward.7} parent=0 // loop_pre_header
    _
  $region3: #{dcgan_generator_forward.7} parent=0 // loop_header
    %s11 = sphi 0, %s15
    %p12 = scmp.ge.s32.totalorder %s11, 10
    %s21 = sphi 0, %s23
    %s24 = sphi 0, %s21
    %s25 = sphi 0, %s24
    %s41 = sphi 0, %s25
    %s45 = sphi 0, %s45
    %s47 = sphi 0, %s45
    %s48 = sphi 0, %s47
    %s62 = sphi 0, %s48
    %s66 = sphi 0, %s66
    %s68 = sphi 0, %s66
    %s69 = sphi 0, %s68
    %s83 = sphi 0, %s69
    %s87 = sphi 0, %s87
    %s89 = sphi 0, %s87
    %s90 = sphi 0, %s89
    %s104 = sphi 0, %s90
    %s108 = sphi 0, %s108
    %s110 = sphi 0, %s108
    %s111 = sphi 0, %s110
    %s125 = sphi 0, %s111
    %s131 = sphi 0, %s133
    %s134 = sphi 0, %s131
    %s135 = sphi 0, %s134
    %s151 = sphi 0, %s135
  $region4: #{dcgan_generator_forward.7} parent=0 // loop_header_branch
    %14 = sbr.rel (%p12) target = $region8
  $region5: #{dcgan_generator_forward.7} parent=0 // loop_body
    %s16 = ssub.s32 %s11, 1
    %s17 = ssub.s32 %s11, 2
    %s18 = sadd.s32 %s11, 1
    %s19 = ssub.s32 %s11, %s18
    %p20 = scmp.eq.s32.totalorder %s19, 0
    %s22 = sadd.s32 %s21, 1
    %s23 = scalar_select %p20, %s21, %s22
    %p26 = pneg %p20
    %p27 = scmp.eq.s32.totalorder %s11, 7
    %p28 = por %p26, %p27
    %p29 = scmp.ne.s32.totalorder %s21, %s24
    %p30 = scmp.eq.s32.totalorder %s11, 0
    %p31 = por %p29, %p30
    %p32 = scmp.ne.s32.totalorder %s21, %s24
    %p33 = scmp.eq.s32.totalorder %s16, 7
    %p34 = por %p32, %p33
    %p35 = scmp.ne.s32.totalorder %s24, %s25
    %p36 = scmp.eq.s32.totalorder %s16, 0
    %p37 = por %p35, %p36
    %p38 = scmp.ne.s32.totalorder %s24, %s25
    %p39 = scmp.eq.s32.totalorder %s17, 7
    %p40 = por %p38, %p39
    %p42 = scmp.ne.s32.totalorder %s25, %s41
    %p43 = scmp.eq.s32.totalorder %s17, 0
    %p44 = por %p42, %p43
    %s46 = sadd.s32 %s45, 1
    %p49 = scmp.eq.s32.totalorder %s11, 7
    %p50 = scmp.ne.s32.totalorder %s45, %s47
    %p51 = scmp.eq.s32.totalorder %s11, 0
    %p52 = por %p50, %p51
    %p53 = scmp.ne.s32.totalorder %s45, %s47
    %p54 = scmp.eq.s32.totalorder %s16, 7
    %p55 = por %p53, %p54
    %p56 = scmp.ne.s32.totalorder %s47, %s48
    %p57 = scmp.eq.s32.totalorder %s16, 0
    %p58 = por %p56, %p57
    %p59 = scmp.ne.s32.totalorder %s47, %s48
    %p60 = scmp.eq.s32.totalorder %s17, 7
    %p61 = por %p59, %p60
    %p63 = scmp.ne.s32.totalorder %s48, %s62
    %p64 = scmp.eq.s32.totalorder %s17, 0
    %p65 = por %p63, %p64
    %s67 = sadd.s32 %s66, 1
    %p70 = scmp.eq.s32.totalorder %s11, 7
    %p71 = scmp.ne.s32.totalorder %s66, %s68
    %p72 = scmp.eq.s32.totalorder %s11, 0
    %p73 = por %p71, %p72
    %p74 = scmp.ne.s32.totalorder %s66, %s68
    %p75 = scmp.eq.s32.totalorder %s16, 7
    %p76 = por %p74, %p75
    %p77 = scmp.ne.s32.totalorder %s68, %s69
    %p78 = scmp.eq.s32.totalorder %s16, 0
    %p79 = por %p77, %p78
    %p80 = scmp.ne.s32.totalorder %s68, %s69
    %p81 = scmp.eq.s32.totalorder %s17, 7
    %p82 = por %p80, %p81
    %p84 = scmp.ne.s32.totalorder %s69, %s83
    %p85 = scmp.eq.s32.totalorder %s17, 0
    %p86 = por %p84, %p85
    %s88 = sadd.s32 %s87, 1
    %p91 = scmp.eq.s32.totalorder %s11, 7
    %p92 = scmp.ne.s32.totalorder %s87, %s89
    %p93 = scmp.eq.s32.totalorder %s11, 0
    %p94 = por %p92, %p93
    %p95 = scmp.ne.s32.totalorder %s87, %s89
    %p96 = scmp.eq.s32.totalorder %s16, 7
    %p97 = por %p95, %p96
    %p98 = scmp.ne.s32.totalorder %s89, %s90
    %p99 = scmp.eq.s32.totalorder %s16, 0
    %p100 = por %p98, %p99
    %p101 = scmp.ne.s32.totalorder %s89, %s90
    %p102 = scmp.eq.s32.totalorder %s17, 7
    %p103 = por %p101, %p102
    %p105 = scmp.ne.s32.totalorder %s90, %s104
    %p106 = scmp.eq.s32.totalorder %s17, 0
    %p107 = por %p105, %p106
    %s109 = sadd.s32 %s108, 1
    %p112 = scmp.eq.s32.totalorder %s11, 7
    %p113 = scmp.ne.s32.totalorder %s108, %s110
    %p114 = scmp.eq.s32.totalorder %s11, 0
    %p115 = por %p113, %p114
    %p116 = scmp.ne.s32.totalorder %s108, %s110
    %p117 = scmp.eq.s32.totalorder %s16, 7
    %p118 = por %p116, %p117
    %p119 = scmp.ne.s32.totalorder %s110, %s111
    %p120 = scmp.eq.s32.totalorder %s16, 0
    %p121 = por %p119, %p120
    %p122 = scmp.ne.s32.totalorder %s110, %s111
    %p123 = scmp.eq.s32.totalorder %s17, 7
    %p124 = por %p122, %p123
    %p126 = scmp.ne.s32.totalorder %s111, %s125
    %p127 = scmp.eq.s32.totalorder %s17, 0
    %p128 = por %p126, %p127
    %s129 = ssub.s32 %s11, %s18
    %p130 = scmp.eq.s32.totalorder %s129, 0
    %s132 = sadd.s32 %s131, 1
    %s133 = scalar_select %p130, %s131, %s132
    %p136 = pneg %p130
    %p137 = scmp.eq.s32.totalorder %s11, 7
    %p138 = por %p136, %p137
    %p139 = scmp.ne.s32.totalorder %s131, %s134
    %p140 = scmp.eq.s32.totalorder %s11, 0
    %p141 = por %p139, %p140
    %p142 = scmp.ne.s32.totalorder %s131, %s134
    %p143 = scmp.eq.s32.totalorder %s16, 7
    %p144 = por %p142, %p143
    %p145 = scmp.ne.s32.totalorder %s134, %s135
    %p146 = scmp.eq.s32.totalorder %s16, 0
    %p147 = por %p145, %p146
    %p148 = scmp.ne.s32.totalorder %s134, %s135
    %p149 = scmp.eq.s32.totalorder %s17, 7
    %p150 = por %p148, %p149
    %p152 = scmp.ne.s32.totalorder %s135, %s151
    %p153 = scmp.eq.s32.totalorder %s17, 0
    %p154 = por %p152, %p153
    %p155 = scmp.le.s32.totalorder 1, %s11
    %p156 = scmp.lt.s32.totalorder %s11, 9
    %p157 = pnand %p155, %p156
    %p158 = pneg %p157
    // Predicated region
    $region9: #{dcgan_generator_forward.7} parent=5 // pred_check
      _
    $region10: #{dcgan_generator_forward.7} parent=5 // pred_check_branch
      %160 = sbr.rel (%p157) target = $region12
    $region11: #{dcgan_generator_forward.7} parent=5 // pred_region
      %s161 = ssub.s32 %s11, 1
      // Predicated region
      $region13: #{dcgan_generator_forward.7} parent=11 // pred_check
        %p162 = pneg %p58
      $region14: #{dcgan_generator_forward.7} parent=11 // pred_check_branch
        %164 = sbr.rel (%p162) target = $region16
      $region15: #{dcgan_generator_forward.7} parent=11 // pred_region
        _
      $region16: #{dcgan_generator_forward.7} parent=11 // pred_fallthru
        _
      // Predicated region
      $region17: #{dcgan_generator_forward.7} parent=11 // pred_check
        %p165 = pneg %p79
      $region18: #{dcgan_generator_forward.7} parent=11 // pred_check_branch
        %167 = sbr.rel (%p165) target = $region20
      $region19: #{dcgan_generator_forward.7} parent=11 // pred_region
        _
      $region20: #{dcgan_generator_forward.7} parent=11 // pred_fallthru
        _
      // Predicated region
      $region21: #{dcgan_generator_forward.7} parent=11 // pred_check
        %p168 = pneg %p100
      $region22: #{dcgan_generator_forward.7} parent=11 // pred_check_branch
        %170 = sbr.rel (%p168) target = $region24
      $region23: #{dcgan_generator_forward.7} parent=11 // pred_region
        _
      $region24: #{dcgan_generator_forward.7} parent=11 // pred_fallthru
        _
      // Predicated region
      $region25: #{dcgan_generator_forward.7} parent=11 // pred_check
        %p171 = pneg %p121
      $region26: #{dcgan_generator_forward.7} parent=11 // pred_check_branch
        %173 = sbr.rel (%p171) target = $region28
      $region27: #{dcgan_generator_forward.7} parent=11 // pred_region
        _
      $region28: #{dcgan_generator_forward.7} parent=11 // pred_fallthru
        _
    $region12: #{dcgan_generator_forward.7} parent=5 // pred_fallthru
      _
    %p174 = scmp.lt.s32.totalorder %s11, 8
    // Predicated region
    $region29: #{dcgan_generator_forward.7} parent=5 // pred_check
      %p175 = pneg %p174
    $region30: #{dcgan_generator_forward.7} parent=5 // pred_check_branch
      %177 = sbr.rel (%p175) target = $region32
    $region31: #{dcgan_generator_forward.7} parent=5 // pred_region
      // Predicated region
      $region33: #{dcgan_generator_forward.7} parent=31 // pred_check
        %p178 = pneg %p31
      $region34: #{dcgan_generator_forward.7} parent=31 // pred_check_branch
        %180 = sbr.rel (%p178) target = $region36
      $region35: #{dcgan_generator_forward.7} parent=31 // pred_region
        %s181 = smul.u32 64, %s11
        %p182 = scmp.lt.s32.totalorder %s181, 511
        %s183 = scalar_select %p182, %s181, 511
        %s184 = smul.addr %s183, 8
        %s185 = scalar_lea.vmem %s0, %s184
        %s186 = smul.u32 64, %s11
      $region36: #{dcgan_generator_forward.7} parent=31 // pred_fallthru
        _
    $region32: #{dcgan_generator_forward.7} parent=5 // pred_fallthru
      _
    %p187 = scmp.le.s32.totalorder 1, %s11
    %p188 = scmp.lt.s32.totalorder %s11, 9
    %p189 = pnand %p187, %p188
    %p190 = pneg %p189
    // Predicated region
    $region37: #{dcgan_generator_forward.7} parent=5 // pred_check
      _
    $region38: #{dcgan_generator_forward.7} parent=5 // pred_check_branch
      %192 = sbr.rel (%p189) target = $region40
    $region39: #{dcgan_generator_forward.7} parent=5 // pred_region
      %s193 = ssub.s32 %s11, 1
      %s194 = smul.u32 64, %s16
      %p195 = scmp.lt.s32.totalorder %s194, 511
      %s196 = scalar_select %p195, %s194, 511
      %s197 = smul.addr %s196, 8
      %s198 = scalar_lea.vmem %s0, %s197
      %p199 = pneg %p37
      %p200 = pneg %p34
      %p201 = pneg %p58
      %p202 = pneg %p55
      %p203 = pneg %p79
      %p204 = pneg %p76
      %p205 = pneg %p100
      %p206 = pneg %p97
      %p207 = pneg %p121
      %p208 = pneg %p118
      %p209 = pneg %p147
      %p210 = pneg %p144
      %s211 = smul.u32 64, %s16
      %p212 = scmp.lt.s32.totalorder %s211, 511
      %s213 = scalar_select %p212, %s211, 511
      %s214 = smul.addr %s213, 8
      %s215 = scalar_lea.vmem %s5, %s214
      %s216 = smul.u32 64, %s16
      %p217 = scmp.lt.s32.totalorder %s216, 511
      %s218 = scalar_select %p217, %s216, 511
      %s219 = smul.addr %s218, 8
      %s220 = scalar_lea.vmem %s0, %s219
      %s221 = smul.u32 64, %s16
      %s222 = smul.u32 64, %s16
      %p223 = scmp.lt.s32.totalorder %s222, 511
      %s224 = scalar_select %p223, %s222, 511
      %s225 = smul.addr %s224, 8
      %s226 = scalar_lea.vmem %s5, %s225
      %s227 = smul.u32 64, %s16
      %v229 = vld [vmem:[%s220] sm:$0xff]
      %v230 = vld [vmem:[%s220 + $0x8] sm:$0xff]
      %v231 = vld [vmem:[%s220 + $0x10] sm:$0xff]
      %v232 = vld [vmem:[%s220 + $0x18] sm:$0xff]
      %v233 = vld [vmem:[%s220 + $0x20] sm:$0xff]
      %v234 = vld [vmem:[%s220 + $0x28] sm:$0xff]
      %v235 = vld [vmem:[%s220 + $0x30] sm:$0xff]
      %v236 = vld [vmem:[%s220 + $0x38] sm:$0xff]
      %v237 = vld [vmem:[%s220 + $0x40] sm:$0xff]
      %v238 = vld [vmem:[%s220 + $0x48] sm:$0xff]
      %v239 = vld [vmem:[%s220 + $0x50] sm:$0xff]
      %v240 = vld [vmem:[%s220 + $0x58] sm:$0xff]
      %v241 = vld [vmem:[%s220 + $0x60] sm:$0xff]
      %v242 = vld [vmem:[%s220 + $0x68] sm:$0xff]
      %v243 = vld [vmem:[%s220 + $0x70] sm:$0xff]
      %v244 = vld [vmem:[%s220 + $0x78] sm:$0xff]
      %v245 = vld [vmem:[%s220 + $0x80] sm:$0xff]
      %v246 = vld [vmem:[%s220 + $0x88] sm:$0xff]
      %v247 = vld [vmem:[%s220 + $0x90] sm:$0xff]
      %v248 = vld [vmem:[%s220 + $0x98] sm:$0xff]
      %v249 = vld [vmem:[%s220 + $0xa0] sm:$0xff]
      %v250 = vld [vmem:[%s220 + $0xa8] sm:$0xff]
      %v251 = vld [vmem:[%s220 + $0xb0] sm:$0xff]
      %v252 = vld [vmem:[%s220 + $0xb8] sm:$0xff]
      %v253 = vld [vmem:[%s220 + $0xc0] sm:$0xff]
      %v254 = vld [vmem:[%s220 + $0xc8] sm:$0xff]
      %v255 = vld [vmem:[%s220 + $0xd0] sm:$0xff]
      %v256 = vld [vmem:[%s220 + $0xd8] sm:$0xff]
      %v257 = vld [vmem:[%s220 + $0xe0] sm:$0xff]
      %v258 = vld [vmem:[%s220 + $0xe8] sm:$0xff]
      %v259 = vld [vmem:[%s220 + $0xf0] sm:$0xff]
      %v260 = vld [vmem:[%s220 + $0xf8] sm:$0xff]
      %v261 = vld [vmem:[%s220 + $0x100] sm:$0xff]
      %v262 = vld [vmem:[%s220 + $0x108] sm:$0xff]
      %v263 = vld [vmem:[%s220 + $0x110] sm:$0xff]
      %v264 = vld [vmem:[%s220 + $0x118] sm:$0xff]
      %v265 = vld [vmem:[%s220 + $0x120] sm:$0xff]
      %v266 = vld [vmem:[%s220 + $0x128] sm:$0xff]
      %v267 = vld [vmem:[%s220 + $0x130] sm:$0xff]
      %v268 = vld [vmem:[%s220 + $0x138] sm:$0xff]
      %v269 = vld [vmem:[%s220 + $0x140] sm:$0xff]
      %v270 = vld [vmem:[%s220 + $0x148] sm:$0xff]
      %v271 = vld [vmem:[%s220 + $0x150] sm:$0xff]
      %v272 = vld [vmem:[%s220 + $0x158] sm:$0xff]
      %v273 = vld [vmem:[%s220 + $0x160] sm:$0xff]
      %v274 = vld [vmem:[%s220 + $0x168] sm:$0xff]
      %v275 = vld [vmem:[%s220 + $0x170] sm:$0xff]
      %v276 = vld [vmem:[%s220 + $0x178] sm:$0xff]
      %v277 = vld [vmem:[%s220 + $0x180] sm:$0xff]
      %v278 = vld [vmem:[%s220 + $0x188] sm:$0xff]
      %v279 = vld [vmem:[%s220 + $0x190] sm:$0xff]
      %v280 = vld [vmem:[%s220 + $0x198] sm:$0xff]
      %v281 = vld [vmem:[%s220 + $0x1a0] sm:$0xff]
      %v282 = vld [vmem:[%s220 + $0x1a8] sm:$0xff]
      %v283 = vld [vmem:[%s220 + $0x1b0] sm:$0xff]
      %v284 = vld [vmem:[%s220 + $0x1b8] sm:$0xff]
      %v285 = vld [vmem:[%s220 + $0x1c0] sm:$0xff]
      %v286 = vld [vmem:[%s220 + $0x1c8] sm:$0xff]
      %v287 = vld [vmem:[%s220 + $0x1d0] sm:$0xff]
      %v288 = vld [vmem:[%s220 + $0x1d8] sm:$0xff]
      %v289 = vld [vmem:[%s220 + $0x1e0] sm:$0xff]
      %v290 = vld [vmem:[%s220 + $0x1e8] sm:$0xff]
      %v291 = vld [vmem:[%s220 + $0x1f0] sm:$0xff]
      %v292 = vld [vmem:[%s220 + $0x1f8] sm:$0xff]
      %v293 = vld [vmem:[%s1] sm:$0x1]
      %v295 = vlaneseq
      %v296 = vshrl.u32 %v295, 7
      %v297 = vsub.s32 0, %v296
      %v298 = vrot.slane %v293, %v297
      %v300 = vmul.f32 %v229, %v298
      %v301 = vmul.f32 %v230, %v298
      %v302 = vmul.f32 %v231, %v298
      %v303 = vmul.f32 %v232, %v298
      %v304 = vmul.f32 %v233, %v298
      %v305 = vmul.f32 %v234, %v298
      %v306 = vmul.f32 %v235, %v298
      %v307 = vmul.f32 %v236, %v298
      %v308 = vmul.f32 %v237, %v298
      %v309 = vmul.f32 %v238, %v298
      %v310 = vmul.f32 %v239, %v298
      %v311 = vmul.f32 %v240, %v298
      %v312 = vmul.f32 %v241, %v298
      %v313 = vmul.f32 %v242, %v298
      %v314 = vmul.f32 %v243, %v298
      %v315 = vmul.f32 %v244, %v298
      %v316 = vmul.f32 %v245, %v298
      %v317 = vmul.f32 %v246, %v298
      %v318 = vmul.f32 %v247, %v298
      %v319 = vmul.f32 %v248, %v298
      %v320 = vmul.f32 %v249, %v298
      %v321 = vmul.f32 %v250, %v298
      %v322 = vmul.f32 %v251, %v298
      %v323 = vmul.f32 %v252, %v298
      %v324 = vmul.f32 %v253, %v298
      %v325 = vmul.f32 %v254, %v298
      %v326 = vmul.f32 %v255, %v298
      %v327 = vmul.f32 %v256, %v298
      %v328 = vmul.f32 %v257, %v298
      %v329 = vmul.f32 %v258, %v298
      %v330 = vmul.f32 %v259, %v298
      %v331 = vmul.f32 %v260, %v298
      %v332 = vmul.f32 %v261, %v298
      %v333 = vmul.f32 %v262, %v298
      %v334 = vmul.f32 %v263, %v298
      %v335 = vmul.f32 %v264, %v298
      %v336 = vmul.f32 %v265, %v298
      %v337 = vmul.f32 %v266, %v298
      %v338 = vmul.f32 %v267, %v298
      %v339 = vmul.f32 %v268, %v298
      %v340 = vmul.f32 %v269, %v298
      %v341 = vmul.f32 %v270, %v298
      %v342 = vmul.f32 %v271, %v298
      %v343 = vmul.f32 %v272, %v298
      %v344 = vmul.f32 %v273, %v298
      %v345 = vmul.f32 %v274, %v298
      %v346 = vmul.f32 %v275, %v298
      %v347 = vmul.f32 %v276, %v298
      %v348 = vmul.f32 %v277, %v298
      %v349 = vmul.f32 %v278, %v298
      %v350 = vmul.f32 %v279, %v298
      %v351 = vmul.f32 %v280, %v298
      %v352 = vmul.f32 %v281, %v298
      %v353 = vmul.f32 %v282, %v298
      %v354 = vmul.f32 %v283, %v298
      %v355 = vmul.f32 %v284, %v298
      %v356 = vmul.f32 %v285, %v298
      %v357 = vmul.f32 %v286, %v298
      %v358 = vmul.f32 %v287, %v298
      %v359 = vmul.f32 %v288, %v298
      %v360 = vmul.f32 %v289, %v298
      %v361 = vmul.f32 %v290, %v298
      %v362 = vmul.f32 %v291, %v298
      %v363 = vmul.f32 %v292, %v298
      %v364 = vld [vmem:[%s2] sm:$0x1]
      %v366 = vlaneseq
      %v367 = vshrl.u32 %v366, 7
      %v368 = vsub.s32 0, %v367
      %v369 = vrot.slane %v364, %v368
      %v371 = vadd.f32 %v300, %v369
      %v372 = vadd.f32 %v301, %v369
      %v373 = vadd.f32 %v302, %v369
      %v374 = vadd.f32 %v303, %v369
      %v375 = vadd.f32 %v304, %v369
      %v376 = vadd.f32 %v305, %v369
      %v377 = vadd.f32 %v306, %v369
      %v378 = vadd.f32 %v307, %v369
      %v379 = vadd.f32 %v308, %v369
      %v380 = vadd.f32 %v309, %v369
      %v381 = vadd.f32 %v310, %v369
      %v382 = vadd.f32 %v311, %v369
      %v383 = vadd.f32 %v312, %v369
      %v384 = vadd.f32 %v313, %v369
      %v385 = vadd.f32 %v314, %v369
      %v386 = vadd.f32 %v315, %v369
      %v387 = vadd.f32 %v316, %v369
      %v388 = vadd.f32 %v317, %v369
      %v389 = vadd.f32 %v318, %v369
      %v390 = vadd.f32 %v319, %v369
      %v391 = vadd.f32 %v320, %v369
      %v392 = vadd.f32 %v321, %v369
      %v393 = vadd.f32 %v322, %v369
      %v394 = vadd.f32 %v323, %v369
      %v395 = vadd.f32 %v324, %v369
      %v396 = vadd.f32 %v325, %v369
      %v397 = vadd.f32 %v326, %v369
      %v398 = vadd.f32 %v327, %v369
      %v399 = vadd.f32 %v328, %v369
      %v400 = vadd.f32 %v329, %v369
      %v401 = vadd.f32 %v330, %v369
      %v402 = vadd.f32 %v331, %v369
      %v403 = vadd.f32 %v332, %v369
      %v404 = vadd.f32 %v333, %v369
      %v405 = vadd.f32 %v334, %v369
      %v406 = vadd.f32 %v335, %v369
      %v407 = vadd.f32 %v336, %v369
      %v408 = vadd.f32 %v337, %v369
      %v409 = vadd.f32 %v338, %v369
      %v410 = vadd.f32 %v339, %v369
      %v411 = vadd.f32 %v340, %v369
      %v412 = vadd.f32 %v341, %v369
      %v413 = vadd.f32 %v342, %v369
      %v414 = vadd.f32 %v343, %v369
      %v415 = vadd.f32 %v344, %v369
      %v416 = vadd.f32 %v345, %v369
      %v417 = vadd.f32 %v346, %v369
      %v418 = vadd.f32 %v347, %v369
      %v419 = vadd.f32 %v348, %v369
      %v420 = vadd.f32 %v349, %v369
      %v421 = vadd.f32 %v350, %v369
      %v422 = vadd.f32 %v351, %v369
      %v423 = vadd.f32 %v352, %v369
      %v424 = vadd.f32 %v353, %v369
      %v425 = vadd.f32 %v354, %v369
      %v426 = vadd.f32 %v355, %v369
      %v427 = vadd.f32 %v356, %v369
      %v428 = vadd.f32 %v357, %v369
      %v429 = vadd.f32 %v358, %v369
      %v430 = vadd.f32 %v359, %v369
      %v431 = vadd.f32 %v360, %v369
      %v432 = vadd.f32 %v361, %v369
      %v433 = vadd.f32 %v362, %v369
      %v434 = vadd.f32 %v363, %v369
      %v435 = vmax.f32 %v371, 0.0
      %v436 = vmax.f32 %v372, 0.0
      %v437 = vmax.f32 %v373, 0.0
      %v438 = vmax.f32 %v374, 0.0
      %v439 = vmax.f32 %v375, 0.0
      %v440 = vmax.f32 %v376, 0.0
      %v441 = vmax.f32 %v377, 0.0
      %v442 = vmax.f32 %v378, 0.0
      %v443 = vmax.f32 %v379, 0.0
      %v444 = vmax.f32 %v380, 0.0
      %v445 = vmax.f32 %v381, 0.0
      %v446 = vmax.f32 %v382, 0.0
      %v447 = vmax.f32 %v383, 0.0
      %v448 = vmax.f32 %v384, 0.0
      %v449 = vmax.f32 %v385, 0.0
      %v450 = vmax.f32 %v386, 0.0
      %v451 = vmax.f32 %v387, 0.0
      %v452 = vmax.f32 %v388, 0.0
      %v453 = vmax.f32 %v389, 0.0
      %v454 = vmax.f32 %v390, 0.0
      %v455 = vmax.f32 %v391, 0.0
      %v456 = vmax.f32 %v392, 0.0
      %v457 = vmax.f32 %v393, 0.0
      %v458 = vmax.f32 %v394, 0.0
      %v459 = vmax.f32 %v395, 0.0
      %v460 = vmax.f32 %v396, 0.0
      %v461 = vmax.f32 %v397, 0.0
      %v462 = vmax.f32 %v398, 0.0
      %v463 = vmax.f32 %v399, 0.0
      %v464 = vmax.f32 %v400, 0.0
      %v465 = vmax.f32 %v401, 0.0
      %v466 = vmax.f32 %v402, 0.0
      %v467 = vmax.f32 %v403, 0.0
      %v468 = vmax.f32 %v404, 0.0
      %v469 = vmax.f32 %v405, 0.0
      %v470 = vmax.f32 %v406, 0.0
      %v471 = vmax.f32 %v407, 0.0
      %v472 = vmax.f32 %v408, 0.0
      %v473 = vmax.f32 %v409, 0.0
      %v474 = vmax.f32 %v410, 0.0
      %v475 = vmax.f32 %v411, 0.0
      %v476 = vmax.f32 %v412, 0.0
      %v477 = vmax.f32 %v413, 0.0
      %v478 = vmax.f32 %v414, 0.0
      %v479 = vmax.f32 %v415, 0.0
      %v480 = vmax.f32 %v416, 0.0
      %v481 = vmax.f32 %v417, 0.0
      %v482 = vmax.f32 %v418, 0.0
      %v483 = vmax.f32 %v419, 0.0
      %v484 = vmax.f32 %v420, 0.0
      %v485 = vmax.f32 %v421, 0.0
      %v486 = vmax.f32 %v422, 0.0
      %v487 = vmax.f32 %v423, 0.0
      %v488 = vmax.f32 %v424, 0.0
      %v489 = vmax.f32 %v425, 0.0
      %v490 = vmax.f32 %v426, 0.0
      %v491 = vmax.f32 %v427, 0.0
      %v492 = vmax.f32 %v428, 0.0
      %v493 = vmax.f32 %v429, 0.0
      %v494 = vmax.f32 %v430, 0.0
      %v495 = vmax.f32 %v431, 0.0
      %v496 = vmax.f32 %v432, 0.0
      %v497 = vmax.f32 %v433, 0.0
      %v498 = vmax.f32 %v434, 0.0
      %v499 = vpack.c.bf16 %v436, %v435
      %v500 = vpack.c.bf16 %v438, %v437
      %v501 = vpack.c.bf16 %v440, %v439
      %v502 = vpack.c.bf16 %v442, %v441
      %v503 = vpack.c.bf16 %v444, %v443
      %v504 = vpack.c.bf16 %v446, %v445
      %v505 = vpack.c.bf16 %v448, %v447
      %v506 = vpack.c.bf16 %v450, %v449
      %v507 = vpack.c.bf16 %v452, %v451
      %v508 = vpack.c.bf16 %v454, %v453
      %v509 = vpack.c.bf16 %v456, %v455
      %v510 = vpack.c.bf16 %v458, %v457
      %v511 = vpack.c.bf16 %v460, %v459
      %v512 = vpack.c.bf16 %v462, %v461
      %v513 = vpack.c.bf16 %v464, %v463
      %v514 = vpack.c.bf16 %v466, %v465
      %v515 = vpack.c.bf16 %v468, %v467
      %v516 = vpack.c.bf16 %v470, %v469
      %v517 = vpack.c.bf16 %v472, %v471
      %v518 = vpack.c.bf16 %v474, %v473
      %v519 = vpack.c.bf16 %v476, %v475
      %v520 = vpack.c.bf16 %v478, %v477
      %v521 = vpack.c.bf16 %v480, %v479
      %v522 = vpack.c.bf16 %v482, %v481
      %v523 = vpack.c.bf16 %v484, %v483
      %v524 = vpack.c.bf16 %v486, %v485
      %v525 = vpack.c.bf16 %v488, %v487
      %v526 = vpack.c.bf16 %v490, %v489
      %v527 = vpack.c.bf16 %v492, %v491
      %v528 = vpack.c.bf16 %v494, %v493
      %v529 = vpack.c.bf16 %v496, %v495
      %v530 = vpack.c.bf16 %v498, %v497
      %v531 = vld [vmem:[%s3] sm:$0xf]
      %v532 = vld [vmem:[%s4] sm:$0x1]
      %v534 = vlaneseq
      %v535 = vshrl.u32 %v534, 7
      %v536 = vsub.s32 0, %v535
      %v537 = vrot.slane %v532, %v536
      %vm539 = vcmask 64512
      %v541 = vsel %vm539, %v499, 0
      %v544 = vsel %vm539, %v500, 0
      %v547 = vsel %vm539, %v501, 0
      %v550 = vsel %vm539, %v502, 0
      %v553 = vsel %vm539, %v503, 0
      %v556 = vsel %vm539, %v504, 0
      %v559 = vsel %vm539, %v505, 0
      %v562 = vsel %vm539, %v506, 0
      %v565 = vsel %vm539, %v507, 0
      %v568 = vsel %vm539, %v508, 0
      %v571 = vsel %vm539, %v509, 0
      %v574 = vsel %vm539, %v510, 0
      %v577 = vsel %vm539, %v511, 0
      %v580 = vsel %vm539, %v512, 0
      %v583 = vsel %vm539, %v513, 0
      %v586 = vsel %vm539, %v514, 0
      %v589 = vsel %vm539, %v515, 0
      %v592 = vsel %vm539, %v516, 0
      %v595 = vsel %vm539, %v517, 0
      %v598 = vsel %vm539, %v518, 0
      %v601 = vsel %vm539, %v519, 0
      %v604 = vsel %vm539, %v520, 0
      %v607 = vsel %vm539, %v521, 0
      %v610 = vsel %vm539, %v522, 0
      %v613 = vsel %vm539, %v523, 0
      %v616 = vsel %vm539, %v524, 0
      %v619 = vsel %vm539, %v525, 0
      %v622 = vsel %vm539, %v526, 0
      %v625 = vsel %vm539, %v527, 0
      %v628 = vsel %vm539, %v528, 0
      %v631 = vsel %vm539, %v529, 0
      %v634 = vsel %vm539, %v530, 0
      %vm636 = vcmask 1043456
      %v638 = vsel %vm636, %v531, 0
      %640 = vmatprep.subr.bf16.mxu0 0
      %641 = vmatpush1.bf16.msra.mxu0 %v638
      %642 = vmatprep.subr.bf16.mxu0 0
      %643 = vmatpush1.bf16.msra.mxu0 0
      %644 = vmatprep.subr.bf16.mxu0 0
      %645 = vmatpush1.bf16.msra.mxu0 0
      %646 = vmatprep.subr.bf16.mxu0 0
      %647 = vmatpush1.bf16.msra.mxu0 0
      %648 = vmatprep.subr.bf16.mxu0 0
      %649 = vmatpush1.bf16.msra.mxu0 0
      %650 = vmatprep.subr.bf16.mxu0 0
      %651 = vmatpush1.bf16.msra.mxu0 0
      %652 = vmatprep.subr.bf16.mxu0 0
      %653 = vmatpush1.bf16.msra.mxu0 0
      %654 = vmatprep.subr.bf16.mxu0 0
      %655 = vmatpush1.bf16.msra.mxu0 0
      %656 = vmatprep.subr.bf16.mxu0 0
      %657 = vmatpush1.bf16.msra.mxu0 0
      %658 = vmatprep.subr.bf16.mxu0 0
      %659 = vmatpush1.bf16.msra.mxu0 0
      %660 = vmatprep.subr.bf16.mxu0 0
      %661 = vmatpush1.bf16.msra.mxu0 0
      %662 = vmatprep.subr.bf16.mxu0 0
      %663 = vmatpush1.bf16.msra.mxu0 0
      %664 = vmatprep.subr.bf16.mxu0 0
      %665 = vmatpush1.bf16.msra.mxu0 0
      %666 = vmatprep.subr.bf16.mxu0 0
      %667 = vmatpush1.bf16.msra.mxu0 0
      %668 = vmatprep.subr.bf16.mxu0 0
      %669 = vmatpush1.bf16.msra.mxu0 0
      %670 = vmatprep.subr.bf16.mxu0 0
      %671 = vmatpush1.bf16.msra.mxu0 0
      %672 = vmatprep.mubr.bf16.mxu0 0
      %673 = vmatmul.mubr.bf16.gmra.mrb[0].mxu0 %v541
      %v674 = vpop.f32.mrb[0].mxu0
      %v675 = vadd.f32 %v537, %v674
      %v676 = vpop.f32.mrb[0].mxu0
      %v677 = vpop.f32.mrb[0].mxu0
      %v678 = vadd.f32 %v537, %v677
      %v679 = vpop.f32.mrb[0].mxu0
      %680 = vmatprep.mubr.bf16.mxu0 0
      %681 = vmatmul.mubr.bf16.gmra.mrb[0].mxu0 %v544
      %v682 = vpop.f32.mrb[0].mxu0
      %v683 = vadd.f32 %v537, %v682
      %v684 = vpop.f32.mrb[0].mxu0
      %v685 = vpop.f32.mrb[0].mxu0
      %v686 = vadd.f32 %v537, %v685
      %v687 = vpop.f32.mrb[0].mxu0
      %688 = vmatprep.mubr.bf16.mxu0 0
      %689 = vmatmul.mubr.bf16.gmra.mrb[0].mxu0 %v547
      %v690 = vpop.f32.mrb[0].mxu0
      %v691 = vadd.f32 %v537, %v690
      %v692 = vpop.f32.mrb[0].mxu0
      %v693 = vpop.f32.mrb[0].mxu0
      %v694 = vadd.f32 %v537, %v693
      %v695 = vpop.f32.mrb[0].mxu0
      %696 = vmatprep.mubr.bf16.mxu0 0
      %697 = vmatmul.mubr.bf16.gmra.mrb[0].mxu0 %v550
      %v698 = vpop.f32.mrb[0].mxu0
      %v699 = vadd.f32 %v537, %v698
      %v700 = vpop.f32.mrb[0].mxu0
      %v701 = vpop.f32.mrb[0].mxu0
      %v702 = vadd.f32 %v537, %v701
      %v703 = vpop.f32.mrb[0].mxu0
      %704 = vmatprep.mubr.bf16.mxu0 0
      %705 = vmatmul.mubr.bf16.gmra.mrb[0].mxu0 %v553
      %v706 = vpop.f32.mrb[0].mxu0
      %v707 = vadd.f32 %v537, %v706
      %v708 = vpop.f32.mrb[0].mxu0
      %v709 = vpop.f32.mrb[0].mxu0
      %v710 = vadd.f32 %v537, %v709
      %v711 = vpop.f32.mrb[0].mxu0
      %712 = vmatprep.mubr.bf16.mxu0 0
      %713 = vmatmul.mubr.bf16.gmra.mrb[0].mxu0 %v556
      %v714 = vpop.f32.mrb[0].mxu0
      %v715 = vadd.f32 %v537, %v714
      %v716 = vpop.f32.mrb[0].mxu0
      %v717 = vpop.f32.mrb[0].mxu0
      %v718 = vadd.f32 %v537, %v717
      %v719 = vpop.f32.mrb[0].mxu0
      %720 = vmatprep.mubr.bf16.mxu0 0
      %721 = vmatmul.mubr.bf16.gmra.mrb[0].mxu0 %v559
      %v722 = vpop.f32.mrb[0].mxu0
      %v723 = vadd.f32 %v537, %v722
      %v724 = vpop.f32.mrb[0].mxu0
      %v725 = vpop.f32.mrb[0].mxu0
      %v726 = vadd.f32 %v537, %v725
      %v727 = vpop.f32.mrb[0].mxu0
      %728 = vmatprep.mubr.bf16.mxu0 0
      %729 = vmatmul.mubr.bf16.gmra.mrb[0].mxu0 %v562
      %v730 = vpop.f32.mrb[0].mxu0
      %v731 = vadd.f32 %v537, %v730
      %v732 = vpop.f32.mrb[0].mxu0
      %v733 = vpop.f32.mrb[0].mxu0
      %v734 = vadd.f32 %v537, %v733
      %v735 = vpop.f32.mrb[0].mxu0
      %736 = vmatprep.mubr.bf16.mxu0 0
      %737 = vmatmul.mubr.bf16.gmra.mrb[0].mxu0 %v565
      %v738 = vpop.f32.mrb[0].mxu0
      %v739 = vadd.f32 %v537, %v738
      %v740 = vpop.f32.mrb[0].mxu0
      %v741 = vpop.f32.mrb[0].mxu0
      %v742 = vadd.f32 %v537, %v741
      %v743 = vpop.f32.mrb[0].mxu0
      %744 = vmatprep.mubr.bf16.mxu0 0
      %745 = vmatmul.mubr.bf16.gmra.mrb[0].mxu0 %v568
      %v746 = vpop.f32.mrb[0].mxu0
      %v747 = vadd.f32 %v537, %v746
      %v748 = vpop.f32.mrb[0].mxu0
      %v749 = vpop.f32.mrb[0].mxu0
      %v750 = vadd.f32 %v537, %v749
      %v751 = vpop.f32.mrb[0].mxu0
      %752 = vmatprep.mubr.bf16.mxu0 0
      %753 = vmatmul.mubr.bf16.gmra.mrb[0].mxu0 %v571
      %v754 = vpop.f32.mrb[0].mxu0
      %v755 = vadd.f32 %v537, %v754
      %v756 = vpop.f32.mrb[0].mxu0
      %v757 = vpop.f32.mrb[0].mxu0
      %v758 = vadd.f32 %v537, %v757
      %v759 = vpop.f32.mrb[0].mxu0
      %760 = vmatprep.mubr.bf16.mxu0 0
      %761 = vmatmul.mubr.bf16.gmra.mrb[0].mxu0 %v574
      %v762 = vpop.f32.mrb[0].mxu0
      %v763 = vadd.f32 %v537, %v762
      %v764 = vpop.f32.mrb[0].mxu0
      %v765 = vpop.f32.mrb[0].mxu0
      %v766 = vadd.f32 %v537, %v765
      %v767 = vpop.f32.mrb[0].mxu0
      %768 = vmatprep.mubr.bf16.mxu0 0
      %769 = vmatmul.mubr.bf16.gmra.mrb[0].mxu0 %v577
      %v770 = vpop.f32.mrb[0].mxu0
      %v771 = vadd.f32 %v537, %v770
      %v772 = vpop.f32.mrb[0].mxu0
      %v773 = vpop.f32.mrb[0].mxu0
      %v774 = vadd.f32 %v537, %v773
      %v775 = vpop.f32.mrb[0].mxu0
      %776 = vmatprep.mubr.bf16.mxu0 0
      %777 = vmatmul.mubr.bf16.gmra.mrb[0].mxu0 %v580
      %v778 = vpop.f32.mrb[0].mxu0
      %v779 = vadd.f32 %v537, %v778
      %v780 = vpop.f32.mrb[0].mxu0
      %v781 = vpop.f32.mrb[0].mxu0
      %v782 = vadd.f32 %v537, %v781
      %v783 = vpop.f32.mrb[0].mxu0
      %784 = vmatprep.mubr.bf16.mxu0 0
      %785 = vmatmul.mubr.bf16.gmra.mrb[0].mxu0 %v583
      %v786 = vpop.f32.mrb[0].mxu0
      %v787 = vadd.f32 %v537, %v786
      %v788 = vpop.f32.mrb[0].mxu0
      %v789 = vpop.f32.mrb[0].mxu0
      %v790 = vadd.f32 %v537, %v789
      %v791 = vpop.f32.mrb[0].mxu0
      %792 = vmatprep.mubr.bf16.mxu0 0
      %793 = vmatmul.mubr.bf16.gmra.mrb[0].mxu0 %v586
      %v794 = vpop.f32.mrb[0].mxu0
      %v795 = vadd.f32 %v537, %v794
      %v796 = vpop.f32.mrb[0].mxu0
      %v797 = vpop.f32.mrb[0].mxu0
      %v798 = vadd.f32 %v537, %v797
      %v799 = vpop.f32.mrb[0].mxu0
      %800 = vmatprep.mubr.bf16.mxu0 0
      %801 = vmatmul.mubr.bf16.gmra.mrb[0].mxu0 %v589
      %v802 = vpop.f32.mrb[0].mxu0
      %v803 = vadd.f32 %v537, %v802
      %v804 = vpop.f32.mrb[0].mxu0
      %v805 = vpop.f32.mrb[0].mxu0
      %v806 = vadd.f32 %v537, %v805
      %v807 = vpop.f32.mrb[0].mxu0
      %808 = vmatprep.mubr.bf16.mxu0 0
      %809 = vmatmul.mubr.bf16.gmra.mrb[0].mxu0 %v592
      %v810 = vpop.f32.mrb[0].mxu0
      %v811 = vadd.f32 %v537, %v810
      %v812 = vpop.f32.mrb[0].mxu0
      %v813 = vpop.f32.mrb[0].mxu0
      %v814 = vadd.f32 %v537, %v813
      %v815 = vpop.f32.mrb[0].mxu0
      %816 = vmatprep.mubr.bf16.mxu0 0
      %817 = vmatmul.mubr.bf16.gmra.mrb[0].mxu0 %v595
      %v818 = vpop.f32.mrb[0].mxu0
      %v819 = vadd.f32 %v537, %v818
      %v820 = vpop.f32.mrb[0].mxu0
      %v821 = vpop.f32.mrb[0].mxu0
      %v822 = vadd.f32 %v537, %v821
      %v823 = vpop.f32.mrb[0].mxu0
      %824 = vmatprep.mubr.bf16.mxu0 0
      %825 = vmatmul.mubr.bf16.gmra.mrb[0].mxu0 %v598
      %v826 = vpop.f32.mrb[0].mxu0
      %v827 = vadd.f32 %v537, %v826
      %v828 = vpop.f32.mrb[0].mxu0
      %v829 = vpop.f32.mrb[0].mxu0
      %v830 = vadd.f32 %v537, %v829
      %v831 = vpop.f32.mrb[0].mxu0
      %832 = vmatprep.mubr.bf16.mxu0 0
      %833 = vmatmul.mubr.bf16.gmra.mrb[0].mxu0 %v601
      %v834 = vpop.f32.mrb[0].mxu0
      %v835 = vadd.f32 %v537, %v834
      %v836 = vpop.f32.mrb[0].mxu0
      %v837 = vpop.f32.mrb[0].mxu0
      %v838 = vadd.f32 %v537, %v837
      %v839 = vpop.f32.mrb[0].mxu0
      %840 = vmatprep.mubr.bf16.mxu0 0
      %841 = vmatmul.mubr.bf16.gmra.mrb[0].mxu0 %v604
      %v842 = vpop.f32.mrb[0].mxu0
      %v843 = vadd.f32 %v537, %v842
      %v844 = vpop.f32.mrb[0].mxu0
      %v845 = vpop.f32.mrb[0].mxu0
      %v846 = vadd.f32 %v537, %v845
      %v847 = vpop.f32.mrb[0].mxu0
      %848 = vmatprep.mubr.bf16.mxu0 0
      %849 = vmatmul.mubr.bf16.gmra.mrb[0].mxu0 %v607
      %v850 = vpop.f32.mrb[0].mxu0
      %v851 = vadd.f32 %v537, %v850
      %v852 = vpop.f32.mrb[0].mxu0
      %v853 = vpop.f32.mrb[0].mxu0
      %v854 = vadd.f32 %v537, %v853
      %v855 = vpop.f32.mrb[0].mxu0
      %856 = vmatprep.mubr.bf16.mxu0 0
      %857 = vmatmul.mubr.bf16.gmra.mrb[0].mxu0 %v610
      %v858 = vpop.f32.mrb[0].mxu0
      %v859 = vadd.f32 %v537, %v858
      %v860 = vpop.f32.mrb[0].mxu0
      %v861 = vpop.f32.mrb[0].mxu0
      %v862 = vadd.f32 %v537, %v861
      %v863 = vpop.f32.mrb[0].mxu0
      %864 = vmatprep.mubr.bf16.mxu0 0
      %865 = vmatmul.mubr.bf16.gmra.mrb[0].mxu0 %v613
      %v866 = vpop.f32.mrb[0].mxu0
      %v867 = vadd.f32 %v537, %v866
      %v868 = vpop.f32.mrb[0].mxu0
      %v869 = vpop.f32.mrb[0].mxu0
      %v870 = vadd.f32 %v537, %v869
      %v871 = vpop.f32.mrb[0].mxu0
      %872 = vmatprep.mubr.bf16.mxu0 0
      %873 = vmatmul.mubr.bf16.gmra.mrb[0].mxu0 %v616
      %v874 = vpop.f32.mrb[0].mxu0
      %v875 = vadd.f32 %v537, %v874
      %v876 = vpop.f32.mrb[0].mxu0
      %v877 = vpop.f32.mrb[0].mxu0
      %v878 = vadd.f32 %v537, %v877
      %v879 = vpop.f32.mrb[0].mxu0
      %880 = vmatprep.mubr.bf16.mxu0 0
      %881 = vmatmul.mubr.bf16.gmra.mrb[0].mxu0 %v619
      %v882 = vpop.f32.mrb[0].mxu0
      %v883 = vadd.f32 %v537, %v882
      %v884 = vpop.f32.mrb[0].mxu0
      %v885 = vpop.f32.mrb[0].mxu0
      %v886 = vadd.f32 %v537, %v885
      %v887 = vpop.f32.mrb[0].mxu0
      %888 = vmatprep.mubr.bf16.mxu0 0
      %889 = vmatmul.mubr.bf16.gmra.mrb[0].mxu0 %v622
      %v890 = vpop.f32.mrb[0].mxu0
      %v891 = vadd.f32 %v537, %v890
      %v892 = vpop.f32.mrb[0].mxu0
      %v893 = vpop.f32.mrb[0].mxu0
      %v894 = vadd.f32 %v537, %v893
      %v895 = vpop.f32.mrb[0].mxu0
      %896 = vmatprep.mubr.bf16.mxu0 0
      %897 = vmatmul.mubr.bf16.gmra.mrb[0].mxu0 %v625
      %v898 = vpop.f32.mrb[0].mxu0
      %v899 = vadd.f32 %v537, %v898
      %v900 = vpop.f32.mrb[0].mxu0
      %v901 = vpop.f32.mrb[0].mxu0
      %v902 = vadd.f32 %v537, %v901
      %v903 = vpop.f32.mrb[0].mxu0
      %904 = vmatprep.mubr.bf16.mxu0 0
      %905 = vmatmul.mubr.bf16.gmra.mrb[0].mxu0 %v628
      %v906 = vpop.f32.mrb[0].mxu0
      %v907 = vadd.f32 %v537, %v906
      %v908 = vpop.f32.mrb[0].mxu0
      %v909 = vpop.f32.mrb[0].mxu0
      %v910 = vadd.f32 %v537, %v909
      %v911 = vpop.f32.mrb[0].mxu0
      %912 = vmatprep.mubr.bf16.mxu0 0
      %913 = vmatmul.mubr.bf16.gmra.mrb[0].mxu0 %v631
      %v914 = vpop.f32.mrb[0].mxu0
      %v915 = vadd.f32 %v537, %v914
      %v916 = vpop.f32.mrb[0].mxu0
      %v917 = vpop.f32.mrb[0].mxu0
      %v918 = vadd.f32 %v537, %v917
      %v919 = vpop.f32.mrb[0].mxu0
      %920 = vmatprep.mubr.bf16.mxu0 0
      %921 = vmatmul.mubr.bf16.gmra.mrb[0].mxu0 %v634
      %v922 = vpop.f32.mrb[0].mxu0
      %v923 = vadd.f32 %v537, %v922
      %v924 = vpop.f32.mrb[0].mxu0
      %v925 = vpop.f32.mrb[0].mxu0
      %v926 = vadd.f32 %v537, %v925
      %v927 = vpop.f32.mrb[0].mxu0
      %928 = vdwg.mxu0
      %929 = vst [vmem:[%s226] sm:$0xff] %v675
      %930 = vst [vmem:[%s226 + $0x8] sm:$0xff] %v678
      %931 = vst [vmem:[%s226 + $0x10] sm:$0xff] %v683
      %932 = vst [vmem:[%s226 + $0x18] sm:$0xff] %v686
      %933 = vst [vmem:[%s226 + $0x20] sm:$0xff] %v691
      %934 = vst [vmem:[%s226 + $0x28] sm:$0xff] %v694
      %935 = vst [vmem:[%s226 + $0x30] sm:$0xff] %v699
      %936 = vst [vmem:[%s226 + $0x38] sm:$0xff] %v702
      %937 = vst [vmem:[%s226 + $0x40] sm:$0xff] %v707
      %938 = vst [vmem:[%s226 + $0x48] sm:$0xff] %v710
      %939 = vst [vmem:[%s226 + $0x50] sm:$0xff] %v715
      %940 = vst [vmem:[%s226 + $0x58] sm:$0xff] %v718
      %941 = vst [vmem:[%s226 + $0x60] sm:$0xff] %v723
      %942 = vst [vmem:[%s226 + $0x68] sm:$0xff] %v726
      %943 = vst [vmem:[%s226 + $0x70] sm:$0xff] %v731
      %944 = vst [vmem:[%s226 + $0x78] sm:$0xff] %v734
      %945 = vst [vmem:[%s226 + $0x80] sm:$0xff] %v739
      %946 = vst [vmem:[%s226 + $0x88] sm:$0xff] %v742
      %947 = vst [vmem:[%s226 + $0x90] sm:$0xff] %v747
      %948 = vst [vmem:[%s226 + $0x98] sm:$0xff] %v750
      %949 = vst [vmem:[%s226 + $0xa0] sm:$0xff] %v755
      %950 = vst [vmem:[%s226 + $0xa8] sm:$0xff] %v758
      %951 = vst [vmem:[%s226 + $0xb0] sm:$0xff] %v763
      %952 = vst [vmem:[%s226 + $0xb8] sm:$0xff] %v766
      %953 = vst [vmem:[%s226 + $0xc0] sm:$0xff] %v771
      %954 = vst [vmem:[%s226 + $0xc8] sm:$0xff] %v774
      %955 = vst [vmem:[%s226 + $0xd0] sm:$0xff] %v779
      %956 = vst [vmem:[%s226 + $0xd8] sm:$0xff] %v782
      %957 = vst [vmem:[%s226 + $0xe0] sm:$0xff] %v787
      %958 = vst [vmem:[%s226 + $0xe8] sm:$0xff] %v790
      %959 = vst [vmem:[%s226 + $0xf0] sm:$0xff] %v795
      %960 = vst [vmem:[%s226 + $0xf8] sm:$0xff] %v798
      %961 = vst [vmem:[%s226 + $0x100] sm:$0xff] %v803
      %962 = vst [vmem:[%s226 + $0x108] sm:$0xff] %v806
      %963 = vst [vmem:[%s226 + $0x110] sm:$0xff] %v811
      %964 = vst [vmem:[%s226 + $0x118] sm:$0xff] %v814
      %965 = vst [vmem:[%s226 + $0x120] sm:$0xff] %v819
      %966 = vst [vmem:[%s226 + $0x128] sm:$0xff] %v822
      %967 = vst [vmem:[%s226 + $0x130] sm:$0xff] %v827
      %968 = vst [vmem:[%s226 + $0x138] sm:$0xff] %v830
      %969 = vst [vmem:[%s226 + $0x140] sm:$0xff] %v835
      %970 = vst [vmem:[%s226 + $0x148] sm:$0xff] %v838
      %971 = vst [vmem:[%s226 + $0x150] sm:$0xff] %v843
      %972 = vst [vmem:[%s226 + $0x158] sm:$0xff] %v846
      %973 = vst [vmem:[%s226 + $0x160] sm:$0xff] %v851
      %974 = vst [vmem:[%s226 + $0x168] sm:$0xff] %v854
      %975 = vst [vmem:[%s226 + $0x170] sm:$0xff] %v859
      %976 = vst [vmem:[%s226 + $0x178] sm:$0xff] %v862
      %977 = vst [vmem:[%s226 + $0x180] sm:$0xff] %v867
      %978 = vst [vmem:[%s226 + $0x188] sm:$0xff] %v870
      %979 = vst [vmem:[%s226 + $0x190] sm:$0xff] %v875
      %980 = vst [vmem:[%s226 + $0x198] sm:$0xff] %v878
      %981 = vst [vmem:[%s226 + $0x1a0] sm:$0xff] %v883
      %982 = vst [vmem:[%s226 + $0x1a8] sm:$0xff] %v886
      %983 = vst [vmem:[%s226 + $0x1b0] sm:$0xff] %v891
      %984 = vst [vmem:[%s226 + $0x1b8] sm:$0xff] %v894
      %985 = vst [vmem:[%s226 + $0x1c0] sm:$0xff] %v899
      %986 = vst [vmem:[%s226 + $0x1c8] sm:$0xff] %v902
      %987 = vst [vmem:[%s226 + $0x1d0] sm:$0xff] %v907
      %988 = vst [vmem:[%s226 + $0x1d8] sm:$0xff] %v910
      %989 = vst [vmem:[%s226 + $0x1e0] sm:$0xff] %v915
      %990 = vst [vmem:[%s226 + $0x1e8] sm:$0xff] %v918
      %991 = vst [vmem:[%s226 + $0x1f0] sm:$0xff] %v923
      %992 = vst [vmem:[%s226 + $0x1f8] sm:$0xff] %v926
      %s993 = smul.u32 64, %s16
      %p994 = scmp.lt.s32.totalorder %s993, 511
      %s995 = scalar_select %p994, %s993, 511
      %s996 = smul.addr %s995, 8
      %s997 = scalar_lea.vmem %s5, %s996
      // Predicated region
      $region41: #{dcgan_generator_forward.7} parent=39 // pred_check
        %p998 = pneg %p144
      $region42: #{dcgan_generator_forward.7} parent=39 // pred_check_branch
        %1000 = sbr.rel (%p998) target = $region44
      $region43: #{dcgan_generator_forward.7} parent=39 // pred_region
        %s1001 = smul.u32 64, %s16
      $region44: #{dcgan_generator_forward.7} parent=39 // pred_fallthru
        _
    $region40: #{dcgan_generator_forward.7} parent=5 // pred_fallthru
      _
    %p1002 = scmp.le.s32.totalorder 2, %s11
    // Predicated region
    $region45: #{dcgan_generator_forward.7} parent=5 // pred_check
      %p1003 = pneg %p1002
    $region46: #{dcgan_generator_forward.7} parent=5 // pred_check_branch
      %1005 = sbr.rel (%p1003) target = $region48
    $region47: #{dcgan_generator_forward.7} parent=5 // pred_region
      %s1006 = ssub.s32 %s11, 2
      // Predicated region
      $region49: #{dcgan_generator_forward.7} parent=47 // pred_check
        %p1007 = pneg %p150
      $region50: #{dcgan_generator_forward.7} parent=47 // pred_check_branch
        %1009 = sbr.rel (%p1007) target = $region52
      $region51: #{dcgan_generator_forward.7} parent=47 // pred_region
        %s1010 = smul.u32 64, %s17
        %p1011 = scmp.lt.s32.totalorder %s1010, 511
        %s1012 = scalar_select %p1011, %s1010, 511
        %s1013 = smul.addr %s1012, 8
        %s1014 = scalar_lea.vmem %s5, %s1013
      $region52: #{dcgan_generator_forward.7} parent=47 // pred_fallthru
        _
    $region48: #{dcgan_generator_forward.7} parent=5 // pred_fallthru
      _
  $region6: #{dcgan_generator_forward.7} parent=0 // loop_footer
    %s15 = sadd.s32 1, %s11
  $region7: #{dcgan_generator_forward.7} parent=0 // loop_footer_branch
    %10 = sbr.rel target = $region3
  $region8: #{dcgan_generator_forward.7} parent=0 // loop_exit
    _

// kernel: dcgan_generator_forward.6
$region0: #{dcgan_generator_forward.6}
  #allocation0 [shape = 'u32[]', space=smem, size = 0x4, offset = 0x4, fixed_abs, tag = 'smem constant byte address 0x4 - core index']
  #allocation1 [shape = 'u32[144,128]{1,0:T(1,128)}', space=vmem, size = 0x12000, scoped, tag = 'internal scratch']
  %s0 = inlined_call_operand.vmem [shape: f32[1024,16], index: 0, kind: input, shape index: {}]
  %s1 = inlined_call_operand.vmem [shape: f32[1,16], index: 1, kind: input, shape index: {}]
  %s2 = inlined_call_operand.vmem [shape: f32[1,16], index: 2, kind: input, shape index: {}]
  %s3 = inlined_call_operand.hbm [shape: bf16[16,32], index: 3, kind: input, shape index: {}]
  %s4 = inlined_call_operand.hbm [shape: f32[1,32], index: 4, kind: input, shape index: {}]
  %s5 = inlined_call_operand.vmem [shape: f32[1024,32], index: 5, kind: output, shape index: {0}]
  %s6 = inlined_call_operand.vmem [shape: f32[2,1,32], index: 6, kind: output, shape index: {1}]
  %s7 = inlined_call_operand.vmem [shape: f32[2,1,32], index: 7, kind: output, shape index: {2}]
  %8 = xla_tuple %s5, %s6, %s7
  %s9 = sld [smem:[#allocation0]]
  $region77: #{dcgan_generator_forward.6} parent=0
    _
  %s11 = ssub.s32 1, %s9
  %s12 = scalar_select 0, %s11, %s9
  $region1: #{dcgan_generator_forward.6} parent=0
    #allocation2 [shape = 'u8[4096]{0}', space=vmem, size = 0x1000, scoped, tag = 'input window, operand 3, single buffered']
    #allocation3 [shape = 's32[2]{0}', space=sflag, size = 0x8, scoped, tag = 'scoped memory for dcgan_generator_forward.6']
    #allocation4 [shape = 'u8[512]{0}', space=vmem, size = 0x400, scoped, tag = 'input window, operand 4, single buffered']
    #allocation5 [shape = 's32[1]{0}', space=sflag, size = 0x4, scoped, tag = 'scoped memory for dcgan_generator_forward.6']
    %13 = vsyncpa [#allocation3], 0
    %14 = vsyncpa [#allocation5], 0
    loop: start=0, step=1, limit=4
    $region2: #{dcgan_generator_forward.6} parent=1 // loop_pre_header
      _
    $region3: #{dcgan_generator_forward.6} parent=1 // loop_header
      %s16 = sphi 0, %s20
      %p17 = scmp.ge.s32.totalorder %s16, 4
      %s26 = sphi 0, %s28
      %s29 = sphi 0, %s26
      %s30 = sphi 0, %s29
      %s46 = sphi 0, %s30
      %s50 = sphi 0, %s50
      %s52 = sphi 0, %s50
      %s53 = sphi 0, %s52
      %s67 = sphi 0, %s53
      %s71 = sphi 0, %s71
      %s73 = sphi 0, %s71
      %s74 = sphi 0, %s73
      %s88 = sphi 0, %s74
      %s92 = sphi 0, %s92
      %s94 = sphi 0, %s92
      %s95 = sphi 0, %s94
      %s109 = sphi 0, %s95
      %s113 = sphi 0, %s113
      %s115 = sphi 0, %s113
      %s116 = sphi 0, %s115
      %s130 = sphi 0, %s116
      %s136 = sphi 0, %s138
      %s139 = sphi 0, %s136
      %s140 = sphi 0, %s139
      %s156 = sphi 0, %s140
      %s162 = sphi 0, %s164
      %s165 = sphi 0, %s162
      %s166 = sphi 0, %s165
      %s182 = sphi 0, %s166
      %s188 = sphi 0, %s190
      %s191 = sphi 0, %s188
      %s192 = sphi 0, %s191
      %s208 = sphi 0, %s192
    $region4: #{dcgan_generator_forward.6} parent=1 // loop_header_branch
      %19 = sbr.rel (%p17) target = $region8
    $region5: #{dcgan_generator_forward.6} parent=1 // loop_body
      %s21 = ssub.s32 %s16, 1
      %s22 = ssub.s32 %s16, 2
      %s23 = sadd.s32 %s16, 1
      %s24 = ssub.s32 %s16, %s23
      %p25 = scmp.eq.s32.totalorder %s24, 0
      %s27 = sadd.s32 %s26, 1
      %s28 = scalar_select %p25, %s26, %s27
      %p31 = pneg %p25
      %p32 = scmp.eq.s32.totalorder %s16, 1
      %p33 = por %p31, %p32
      %p34 = scmp.ne.s32.totalorder %s26, %s29
      %p35 = scmp.eq.s32.totalorder %s16, 0
      %p36 = por %p34, %p35
      %p37 = scmp.ne.s32.totalorder %s26, %s29
      %p38 = scmp.eq.s32.totalorder %s21, 1
      %p39 = por %p37, %p38
      %p40 = scmp.ne.s32.totalorder %s29, %s30
      %p41 = scmp.eq.s32.totalorder %s21, 0
      %p42 = por %p40, %p41
      %p43 = scmp.ne.s32.totalorder %s29, %s30
      %p44 = scmp.eq.s32.totalorder %s22, 1
      %p45 = por %p43, %p44
      %p47 = scmp.ne.s32.totalorder %s30, %s46
      %p48 = scmp.eq.s32.totalorder %s22, 0
      %p49 = por %p47, %p48
      %s51 = sadd.s32 %s50, 1
      %p54 = scmp.eq.s32.totalorder %s16, 1
      %p55 = scmp.ne.s32.totalorder %s50, %s52
      %p56 = scmp.eq.s32.totalorder %s16, 0
      %p57 = por %p55, %p56
      %p58 = scmp.ne.s32.totalorder %s50, %s52
      %p59 = scmp.eq.s32.totalorder %s21, 1
      %p60 = por %p58, %p59
      %p61 = scmp.ne.s32.totalorder %s52, %s53
      %p62 = scmp.eq.s32.totalorder %s21, 0
      %p63 = por %p61, %p62
      %p64 = scmp.ne.s32.totalorder %s52, %s53
      %p65 = scmp.eq.s32.totalorder %s22, 1
      %p66 = por %p64, %p65
      %p68 = scmp.ne.s32.totalorder %s53, %s67
      %p69 = scmp.eq.s32.totalorder %s22, 0
      %p70 = por %p68, %p69
      %s72 = sadd.s32 %s71, 1
      %p75 = scmp.eq.s32.totalorder %s16, 1
      %p76 = scmp.ne.s32.totalorder %s71, %s73
      %p77 = scmp.eq.s32.totalorder %s16, 0
      %p78 = por %p76, %p77
      %p79 = scmp.ne.s32.totalorder %s71, %s73
      %p80 = scmp.eq.s32.totalorder %s21, 1
      %p81 = por %p79, %p80
      %p82 = scmp.ne.s32.totalorder %s73, %s74
      %p83 = scmp.eq.s32.totalorder %s21, 0
      %p84 = por %p82, %p83
      %p85 = scmp.ne.s32.totalorder %s73, %s74
      %p86 = scmp.eq.s32.totalorder %s22, 1
      %p87 = por %p85, %p86
      %p89 = scmp.ne.s32.totalorder %s74, %s88
      %p90 = scmp.eq.s32.totalorder %s22, 0
      %p91 = por %p89, %p90
      %s93 = sadd.s32 %s92, 1
      %p96 = scmp.eq.s32.totalorder %s16, 1
      %p97 = scmp.ne.s32.totalorder %s92, %s94
      %p98 = scmp.eq.s32.totalorder %s16, 0
      %p99 = por %p97, %p98
      %p100 = scmp.ne.s32.totalorder %s92, %s94
      %p101 = scmp.eq.s32.totalorder %s21, 1
      %p102 = por %p100, %p101
      %p103 = scmp.ne.s32.totalorder %s94, %s95
      %p104 = scmp.eq.s32.totalorder %s21, 0
      %p105 = por %p103, %p104
      %p106 = scmp.ne.s32.totalorder %s94, %s95
      %p107 = scmp.eq.s32.totalorder %s22, 1
      %p108 = por %p106, %p107
      %p110 = scmp.ne.s32.totalorder %s95, %s109
      %p111 = scmp.eq.s32.totalorder %s22, 0
      %p112 = por %p110, %p111
      %s114 = sadd.s32 %s113, 1
      %p117 = scmp.eq.s32.totalorder %s16, 1
      %p118 = scmp.ne.s32.totalorder %s113, %s115
      %p119 = scmp.eq.s32.totalorder %s16, 0
      %p120 = por %p118, %p119
      %p121 = scmp.ne.s32.totalorder %s113, %s115
      %p122 = scmp.eq.s32.totalorder %s21, 1
      %p123 = por %p121, %p122
      %p124 = scmp.ne.s32.totalorder %s115, %s116
      %p125 = scmp.eq.s32.totalorder %s21, 0
      %p126 = por %p124, %p125
      %p127 = scmp.ne.s32.totalorder %s115, %s116
      %p128 = scmp.eq.s32.totalorder %s22, 1
      %p129 = por %p127, %p128
      %p131 = scmp.ne.s32.totalorder %s116, %s130
      %p132 = scmp.eq.s32.totalorder %s22, 0
      %p133 = por %p131, %p132
      %s134 = ssub.s32 %s16, %s23
      %p135 = scmp.eq.s32.totalorder %s134, 0
      %s137 = sadd.s32 %s136, 1
      %s138 = scalar_select %p135, %s136, %s137
      %p141 = pneg %p135
      %p142 = scmp.eq.s32.totalorder %s16, 1
      %p143 = por %p141, %p142
      %p144 = scmp.ne.s32.totalorder %s136, %s139
      %p145 = scmp.eq.s32.totalorder %s16, 0
      %p146 = por %p144, %p145
      %p147 = scmp.ne.s32.totalorder %s136, %s139
      %p148 = scmp.eq.s32.totalorder %s21, 1
      %p149 = por %p147, %p148
      %p150 = scmp.ne.s32.totalorder %s139, %s140
      %p151 = scmp.eq.s32.totalorder %s21, 0
      %p152 = por %p150, %p151
      %p153 = scmp.ne.s32.totalorder %s139, %s140
      %p154 = scmp.eq.s32.totalorder %s22, 1
      %p155 = por %p153, %p154
      %p157 = scmp.ne.s32.totalorder %s140, %s156
      %p158 = scmp.eq.s32.totalorder %s22, 0
      %p159 = por %p157, %p158
      %s160 = ssub.s32 %s16, %s23
      %p161 = scmp.eq.s32.totalorder %s160, 0
      %s163 = sadd.s32 %s162, 1
      %s164 = scalar_select %p161, %s162, %s163
      %p167 = pneg %p161
      %p168 = scmp.eq.s32.totalorder %s16, 1
      %p169 = por %p167, %p168
      %p170 = scmp.ne.s32.totalorder %s162, %s165
      %p171 = scmp.eq.s32.totalorder %s16, 0
      %p172 = por %p170, %p171
      %p173 = scmp.ne.s32.totalorder %s162, %s165
      %p174 = scmp.eq.s32.totalorder %s21, 1
      %p175 = por %p173, %p174
      %p176 = scmp.ne.s32.totalorder %s165, %s166
      %p177 = scmp.eq.s32.totalorder %s21, 0
      %p178 = por %p176, %p177
      %p179 = scmp.ne.s32.totalorder %s165, %s166
      %p180 = scmp.eq.s32.totalorder %s22, 1
      %p181 = por %p179, %p180
      %p183 = scmp.ne.s32.totalorder %s166, %s182
      %p184 = scmp.eq.s32.totalorder %s22, 0
      %p185 = por %p183, %p184
      %s186 = ssub.s32 %s16, %s23
      %p187 = scmp.eq.s32.totalorder %s186, 0
      %s189 = sadd.s32 %s188, 1
      %s190 = scalar_select %p187, %s188, %s189
      %p193 = pneg %p187
      %p194 = scmp.eq.s32.totalorder %s16, 1
      %p195 = por %p193, %p194
      %p196 = scmp.ne.s32.totalorder %s188, %s191
      %p197 = scmp.eq.s32.totalorder %s16, 0
      %p198 = por %p196, %p197
      %p199 = scmp.ne.s32.totalorder %s188, %s191
      %p200 = scmp.eq.s32.totalorder %s21, 1
      %p201 = por %p199, %p200
      %p202 = scmp.ne.s32.totalorder %s191, %s192
      %p203 = scmp.eq.s32.totalorder %s21, 0
      %p204 = por %p202, %p203
      %p205 = scmp.ne.s32.totalorder %s191, %s192
      %p206 = scmp.eq.s32.totalorder %s22, 1
      %p207 = por %p205, %p206
      %p209 = scmp.ne.s32.totalorder %s192, %s208
      %p210 = scmp.eq.s32.totalorder %s22, 0
      %p211 = por %p209, %p210
      %p212 = scmp.le.s32.totalorder 1, %s16
      %p213 = scmp.lt.s32.totalorder %s16, 3
      %p214 = pnand %p212, %p213
      %p215 = pneg %p214
      // Predicated region
      $region9: #{dcgan_generator_forward.6} parent=5 // pred_check
        _
      $region10: #{dcgan_generator_forward.6} parent=5 // pred_check_branch
        %217 = sbr.rel (%p214) target = $region12
      $region11: #{dcgan_generator_forward.6} parent=5 // pred_region
        %s218 = ssub.s32 %s16, 1
        // Predicated region
        $region13: #{dcgan_generator_forward.6} parent=11 // pred_check
          %p219 = pneg %p63
        $region14: #{dcgan_generator_forward.6} parent=11 // pred_check_branch
          %221 = sbr.rel (%p219) target = $region16
        $region15: #{dcgan_generator_forward.6} parent=11 // pred_region
          _
        $region16: #{dcgan_generator_forward.6} parent=11 // pred_fallthru
          _
        // Predicated region
        $region17: #{dcgan_generator_forward.6} parent=11 // pred_check
          %p222 = pneg %p84
        $region18: #{dcgan_generator_forward.6} parent=11 // pred_check_branch
          %224 = sbr.rel (%p222) target = $region20
        $region19: #{dcgan_generator_forward.6} parent=11 // pred_region
          _
        $region20: #{dcgan_generator_forward.6} parent=11 // pred_fallthru
          _
        // Predicated region
        $region21: #{dcgan_generator_forward.6} parent=11 // pred_check
          %p225 = pneg %p105
        $region22: #{dcgan_generator_forward.6} parent=11 // pred_check_branch
          %227 = sbr.rel (%p225) target = $region24
        $region23: #{dcgan_generator_forward.6} parent=11 // pred_region
          %s229 = ssub.s32 128, 128
          %230 = vsyncadd [#allocation3], %s229
          %s231 = sshll.u32 [#allocation2], 4
          %s232 = int_to_ptr.vmem [resolvable:$true] %s231
          %237 = dma.hbm_to_vmem [thread:$0]  %s3, 128, %s232, [#allocation3], 64, 64, 4
        $region24: #{dcgan_generator_forward.6} parent=11 // pred_fallthru
          _
        // Predicated region
        $region25: #{dcgan_generator_forward.6} parent=11 // pred_check
          %p238 = pneg %p126
        $region26: #{dcgan_generator_forward.6} parent=11 // pred_check_branch
          %240 = sbr.rel (%p238) target = $region28
        $region27: #{dcgan_generator_forward.6} parent=11 // pred_region
          %s242 = ssub.s32 16, 16
          %243 = vsyncadd [#allocation5], %s242
          %s245 = sshll.u32 [#allocation4], 4
          %s246 = int_to_ptr.vmem [resolvable:$true] %s245
          %248 = dma.hbm_to_vmem [thread:$0]  %s4, 16, %s246, [#allocation5]
        $region28: #{dcgan_generator_forward.6} parent=11 // pred_fallthru
          _
      $region12: #{dcgan_generator_forward.6} parent=5 // pred_fallthru
        _
      %p249 = scmp.lt.s32.totalorder %s16, 2
      // Predicated region
      $region29: #{dcgan_generator_forward.6} parent=5 // pred_check
        %p250 = pneg %p249
      $region30: #{dcgan_generator_forward.6} parent=5 // pred_check_branch
        %252 = sbr.rel (%p250) target = $region32
      $region31: #{dcgan_generator_forward.6} parent=5 // pred_region
        // Predicated region
        $region33: #{dcgan_generator_forward.6} parent=31 // pred_check
          %p253 = pneg %p36
        $region34: #{dcgan_generator_forward.6} parent=31 // pred_check_branch
          %255 = sbr.rel (%p253) target = $region36
        $region35: #{dcgan_generator_forward.6} parent=31 // pred_region
          %s256 = smul.u32 64, %s16
          %p257 = scmp.lt.s32.totalorder %s256, 127
          %s258 = scalar_select %p257, %s256, 127
          %s259 = smul.addr %s258, 8
          %s260 = scalar_lea.vmem %s0, %s259
          %s261 = smul.u32 64, %s16
        $region36: #{dcgan_generator_forward.6} parent=31 // pred_fallthru
          _
      $region32: #{dcgan_generator_forward.6} parent=5 // pred_fallthru
        _
      %p262 = scmp.le.s32.totalorder 1, %s16
      %p263 = scmp.lt.s32.totalorder %s16, 3
      %p264 = pnand %p262, %p263
      %p265 = pneg %p264
      // Predicated region
      $region37: #{dcgan_generator_forward.6} parent=5 // pred_check
        _
      $region38: #{dcgan_generator_forward.6} parent=5 // pred_check_branch
        %267 = sbr.rel (%p264) target = $region40
      $region39: #{dcgan_generator_forward.6} parent=5 // pred_region
        %s268 = ssub.s32 %s16, 1
        // Predicated region
        $region41: #{dcgan_generator_forward.6} parent=39 // pred_check
          %p269 = pneg %p105
        $region42: #{dcgan_generator_forward.6} parent=39 // pred_check_branch
          %271 = sbr.rel (%p269) target = $region44
        $region43: #{dcgan_generator_forward.6} parent=39 // pred_region
          %272 = dma.done [#allocation3], 128
        $region44: #{dcgan_generator_forward.6} parent=39 // pred_fallthru
          _
        // Predicated region
        $region45: #{dcgan_generator_forward.6} parent=39 // pred_check
          %p273 = pneg %p126
        $region46: #{dcgan_generator_forward.6} parent=39 // pred_check_branch
          %275 = sbr.rel (%p273) target = $region48
        $region47: #{dcgan_generator_forward.6} parent=39 // pred_region
          %276 = dma.done [#allocation5], 16
        $region48: #{dcgan_generator_forward.6} parent=39 // pred_fallthru
          _
        %s277 = smul.u32 64, %s21
        %p278 = scmp.lt.s32.totalorder %s277, 127
        %s279 = scalar_select %p278, %s277, 127
        %s280 = smul.addr %s279, 8
        %s281 = scalar_lea.vmem %s0, %s280
        %p282 = pneg %p42
        %p283 = pneg %p39
        %p284 = pneg %p63
        %p285 = pneg %p60
        %p286 = pneg %p84
        %p287 = pneg %p81
        %p288 = pneg %p105
        %p289 = pneg %p102
        %p290 = pneg %p126
        %p291 = pneg %p123
        %p292 = pneg %p152
        %p293 = pneg %p149
        %s294 = smul.u32 64, %s21
        %p295 = scmp.lt.s32.totalorder %s294, 127
        %s296 = scalar_select %p295, %s294, 127
        %s297 = smul.addr %s296, 8
        %s298 = scalar_lea.vmem %s5, %s297
        %p299 = pneg %p178
        %p300 = pneg %p175
        %p301 = scmp.lt.s32.totalorder %s21, 1
        %s302 = scalar_select %p301, %s21, 1
        %s303 = scalar_lea.vmem %s6, %s302
        %p304 = pneg %p204
        %p305 = pneg %p201
        %p306 = scmp.lt.s32.totalorder %s21, 1
        %s307 = scalar_select %p306, %s21, 1
        %s308 = scalar_lea.vmem %s7, %s307
        %s309 = smul.u32 64, %s21
        %p310 = scmp.lt.s32.totalorder %s309, 127
        %s311 = scalar_select %p310, %s309, 127
        %s312 = smul.addr %s311, 8
        %s313 = scalar_lea.vmem %s0, %s312
        %s314 = smul.u32 64, %s21
        %s315 = smul.u32 64, %s21
        %p316 = scmp.lt.s32.totalorder %s315, 127
        %s317 = scalar_select %p316, %s315, 127
        %s318 = smul.addr %s317, 8
        %s319 = scalar_lea.vmem %s5, %s318
        %s320 = smul.u32 64, %s21
        %p321 = scmp.lt.s32.totalorder %s21, 1
        %s322 = scalar_select %p321, %s21, 1
        %s323 = scalar_lea.vmem %s6, %s322
        %p324 = scmp.lt.s32.totalorder %s21, 1
        %s325 = scalar_select %p324, %s21, 1
        %s326 = scalar_lea.vmem %s7, %s325
        %v328 = vld [vmem:[%s313] sm:$0xff]
        %v329 = vld [vmem:[%s313 + $0x8] sm:$0xff]
        %v330 = vld [vmem:[%s313 + $0x10] sm:$0xff]
        %v331 = vld [vmem:[%s313 + $0x18] sm:$0xff]
        %v332 = vld [vmem:[%s313 + $0x20] sm:$0xff]
        %v333 = vld [vmem:[%s313 + $0x28] sm:$0xff]
        %v334 = vld [vmem:[%s313 + $0x30] sm:$0xff]
        %v335 = vld [vmem:[%s313 + $0x38] sm:$0xff]
        %v336 = vld [vmem:[%s313 + $0x40] sm:$0xff]
        %v337 = vld [vmem:[%s313 + $0x48] sm:$0xff]
        %v338 = vld [vmem:[%s313 + $0x50] sm:$0xff]
        %v339 = vld [vmem:[%s313 + $0x58] sm:$0xff]
        %v340 = vld [vmem:[%s313 + $0x60] sm:$0xff]
        %v341 = vld [vmem:[%s313 + $0x68] sm:$0xff]
        %v342 = vld [vmem:[%s313 + $0x70] sm:$0xff]
        %v343 = vld [vmem:[%s313 + $0x78] sm:$0xff]
        %v344 = vld [vmem:[%s313 + $0x80] sm:$0xff]
        %v345 = vld [vmem:[%s313 + $0x88] sm:$0xff]
        %v346 = vld [vmem:[%s313 + $0x90] sm:$0xff]
        %v347 = vld [vmem:[%s313 + $0x98] sm:$0xff]
        %v348 = vld [vmem:[%s313 + $0xa0] sm:$0xff]
        %v349 = vld [vmem:[%s313 + $0xa8] sm:$0xff]
        %v350 = vld [vmem:[%s313 + $0xb0] sm:$0xff]
        %v351 = vld [vmem:[%s313 + $0xb8] sm:$0xff]
        %v352 = vld [vmem:[%s313 + $0xc0] sm:$0xff]
        %v353 = vld [vmem:[%s313 + $0xc8] sm:$0xff]
        %v354 = vld [vmem:[%s313 + $0xd0] sm:$0xff]
        %v355 = vld [vmem:[%s313 + $0xd8] sm:$0xff]
        %v356 = vld [vmem:[%s313 + $0xe0] sm:$0xff]
        %v357 = vld [vmem:[%s313 + $0xe8] sm:$0xff]
        %v358 = vld [vmem:[%s313 + $0xf0] sm:$0xff]
        %v359 = vld [vmem:[%s313 + $0xf8] sm:$0xff]
        %v360 = vld [vmem:[%s313 + $0x100] sm:$0xff]
        %v361 = vld [vmem:[%s313 + $0x108] sm:$0xff]
        %v362 = vld [vmem:[%s313 + $0x110] sm:$0xff]
        %v363 = vld [vmem:[%s313 + $0x118] sm:$0xff]
        %v364 = vld [vmem:[%s313 + $0x120] sm:$0xff]
        %v365 = vld [vmem:[%s313 + $0x128] sm:$0xff]
        %v366 = vld [vmem:[%s313 + $0x130] sm:$0xff]
        %v367 = vld [vmem:[%s313 + $0x138] sm:$0xff]
        %v368 = vld [vmem:[%s313 + $0x140] sm:$0xff]
        %v369 = vld [vmem:[%s313 + $0x148] sm:$0xff]
        %v370 = vld [vmem:[%s313 + $0x150] sm:$0xff]
        %v371 = vld [vmem:[%s313 + $0x158] sm:$0xff]
        %v372 = vld [vmem:[%s313 + $0x160] sm:$0xff]
        %v373 = vld [vmem:[%s313 + $0x168] sm:$0xff]
        %v374 = vld [vmem:[%s313 + $0x170] sm:$0xff]
        %v375 = vld [vmem:[%s313 + $0x178] sm:$0xff]
        %v376 = vld [vmem:[%s313 + $0x180] sm:$0xff]
        %v377 = vld [vmem:[%s313 + $0x188] sm:$0xff]
        %v378 = vld [vmem:[%s313 + $0x190] sm:$0xff]
        %v379 = vld [vmem:[%s313 + $0x198] sm:$0xff]
        %v380 = vld [vmem:[%s313 + $0x1a0] sm:$0xff]
        %v381 = vld [vmem:[%s313 + $0x1a8] sm:$0xff]
        %v382 = vld [vmem:[%s313 + $0x1b0] sm:$0xff]
        %v383 = vld [vmem:[%s313 + $0x1b8] sm:$0xff]
        %v384 = vld [vmem:[%s313 + $0x1c0] sm:$0xff]
        %v385 = vld [vmem:[%s313 + $0x1c8] sm:$0xff]
        %v386 = vld [vmem:[%s313 + $0x1d0] sm:$0xff]
        %v387 = vld [vmem:[%s313 + $0x1d8] sm:$0xff]
        %v388 = vld [vmem:[%s313 + $0x1e0] sm:$0xff]
        %v389 = vld [vmem:[%s313 + $0x1e8] sm:$0xff]
        %v390 = vld [vmem:[%s313 + $0x1f0] sm:$0xff]
        %v391 = vld [vmem:[%s313 + $0x1f8] sm:$0xff]
        %v392 = vld [vmem:[%s1] sm:$0x1]
        %v394 = vlaneseq
        %v395 = vshrl.u32 %v394, 7
        %v396 = vsub.s32 0, %v395
        %v397 = vrot.slane %v392, %v396
        %v399 = vmul.f32 %v328, %v397
        %v400 = vmul.f32 %v329, %v397
        %v401 = vmul.f32 %v330, %v397
        %v402 = vmul.f32 %v331, %v397
        %v403 = vmul.f32 %v332, %v397
        %v404 = vmul.f32 %v333, %v397
        %v405 = vmul.f32 %v334, %v397
        %v406 = vmul.f32 %v335, %v397
        %v407 = vmul.f32 %v336, %v397
        %v408 = vmul.f32 %v337, %v397
        %v409 = vmul.f32 %v338, %v397
        %v410 = vmul.f32 %v339, %v397
        %v411 = vmul.f32 %v340, %v397
        %v412 = vmul.f32 %v341, %v397
        %v413 = vmul.f32 %v342, %v397
        %v414 = vmul.f32 %v343, %v397
        %v415 = vmul.f32 %v344, %v397
        %v416 = vmul.f32 %v345, %v397
        %v417 = vmul.f32 %v346, %v397
        %v418 = vmul.f32 %v347, %v397
        %v419 = vmul.f32 %v348, %v397
        %v420 = vmul.f32 %v349, %v397
        %v421 = vmul.f32 %v350, %v397
        %v422 = vmul.f32 %v351, %v397
        %v423 = vmul.f32 %v352, %v397
        %v424 = vmul.f32 %v353, %v397
        %v425 = vmul.f32 %v354, %v397
        %v426 = vmul.f32 %v355, %v397
        %v427 = vmul.f32 %v356, %v397
        %v428 = vmul.f32 %v357, %v397
        %v429 = vmul.f32 %v358, %v397
        %v430 = vmul.f32 %v359, %v397
        %v431 = vmul.f32 %v360, %v397
        %v432 = vmul.f32 %v361, %v397
        %v433 = vmul.f32 %v362, %v397
        %v434 = vmul.f32 %v363, %v397
        %v435 = vmul.f32 %v364, %v397
        %v436 = vmul.f32 %v365, %v397
        %v437 = vmul.f32 %v366, %v397
        %v438 = vmul.f32 %v367, %v397
        %v439 = vmul.f32 %v368, %v397
        %v440 = vmul.f32 %v369, %v397
        %v441 = vmul.f32 %v370, %v397
        %v442 = vmul.f32 %v371, %v397
        %v443 = vmul.f32 %v372, %v397
        %v444 = vmul.f32 %v373, %v397
        %v445 = vmul.f32 %v374, %v397
        %v446 = vmul.f32 %v375, %v397
        %v447 = vmul.f32 %v376, %v397
        %v448 = vmul.f32 %v377, %v397
        %v449 = vmul.f32 %v378, %v397
        %v450 = vmul.f32 %v379, %v397
        %v451 = vmul.f32 %v380, %v397
        %v452 = vmul.f32 %v381, %v397
        %v453 = vmul.f32 %v382, %v397
        %v454 = vmul.f32 %v383, %v397
        %v455 = vmul.f32 %v384, %v397
        %v456 = vmul.f32 %v385, %v397
        %v457 = vmul.f32 %v386, %v397
        %v458 = vmul.f32 %v387, %v397
        %v459 = vmul.f32 %v388, %v397
        %v460 = vmul.f32 %v389, %v397
        %v461 = vmul.f32 %v390, %v397
        %v462 = vmul.f32 %v391, %v397
        %v463 = vld [vmem:[%s2] sm:$0x1]
        %v465 = vlaneseq
        %v466 = vshrl.u32 %v465, 7
        %v467 = vsub.s32 0, %v466
        %v468 = vrot.slane %v463, %v467
        %v470 = vadd.f32 %v399, %v468
        %v471 = vadd.f32 %v400, %v468
        %v472 = vadd.f32 %v401, %v468
        %v473 = vadd.f32 %v402, %v468
        %v474 = vadd.f32 %v403, %v468
        %v475 = vadd.f32 %v404, %v468
        %v476 = vadd.f32 %v405, %v468
        %v477 = vadd.f32 %v406, %v468
        %v478 = vadd.f32 %v407, %v468
        %v479 = vadd.f32 %v408, %v468
        %v480 = vadd.f32 %v409, %v468
        %v481 = vadd.f32 %v410, %v468
        %v482 = vadd.f32 %v411, %v468
        %v483 = vadd.f32 %v412, %v468
        %v484 = vadd.f32 %v413, %v468
        %v485 = vadd.f32 %v414, %v468
        %v486 = vadd.f32 %v415, %v468
        %v487 = vadd.f32 %v416, %v468
        %v488 = vadd.f32 %v417, %v468
        %v489 = vadd.f32 %v418, %v468
        %v490 = vadd.f32 %v419, %v468
        %v491 = vadd.f32 %v420, %v468
        %v492 = vadd.f32 %v421, %v468
        %v493 = vadd.f32 %v422, %v468
        %v494 = vadd.f32 %v423, %v468
        %v495 = vadd.f32 %v424, %v468
        %v496 = vadd.f32 %v425, %v468
        %v497 = vadd.f32 %v426, %v468
        %v498 = vadd.f32 %v427, %v468
        %v499 = vadd.f32 %v428, %v468
        %v500 = vadd.f32 %v429, %v468
        %v501 = vadd.f32 %v430, %v468
        %v502 = vadd.f32 %v431, %v468
        %v503 = vadd.f32 %v432, %v468
        %v504 = vadd.f32 %v433, %v468
        %v505 = vadd.f32 %v434, %v468
        %v506 = vadd.f32 %v435, %v468
        %v507 = vadd.f32 %v436, %v468
        %v508 = vadd.f32 %v437, %v468
        %v509 = vadd.f32 %v438, %v468
        %v510 = vadd.f32 %v439, %v468
        %v511 = vadd.f32 %v440, %v468
        %v512 = vadd.f32 %v441, %v468
        %v513 = vadd.f32 %v442, %v468
        %v514 = vadd.f32 %v443, %v468
        %v515 = vadd.f32 %v444, %v468
        %v516 = vadd.f32 %v445, %v468
        %v517 = vadd.f32 %v446, %v468
        %v518 = vadd.f32 %v447, %v468
        %v519 = vadd.f32 %v448, %v468
        %v520 = vadd.f32 %v449, %v468
        %v521 = vadd.f32 %v450, %v468
        %v522 = vadd.f32 %v451, %v468
        %v523 = vadd.f32 %v452, %v468
        %v524 = vadd.f32 %v453, %v468
        %v525 = vadd.f32 %v454, %v468
        %v526 = vadd.f32 %v455, %v468
        %v527 = vadd.f32 %v456, %v468
        %v528 = vadd.f32 %v457, %v468
        %v529 = vadd.f32 %v458, %v468
        %v530 = vadd.f32 %v459, %v468
        %v531 = vadd.f32 %v460, %v468
        %v532 = vadd.f32 %v461, %v468
        %v533 = vadd.f32 %v462, %v468
        %v534 = vmax.f32 %v470, 0.0
        %v535 = vmax.f32 %v471, 0.0
        %v536 = vmax.f32 %v472, 0.0
        %v537 = vmax.f32 %v473, 0.0
        %v538 = vmax.f32 %v474, 0.0
        %v539 = vmax.f32 %v475, 0.0
        %v540 = vmax.f32 %v476, 0.0
        %v541 = vmax.f32 %v477, 0.0
        %v542 = vmax.f32 %v478, 0.0
        %v543 = vmax.f32 %v479, 0.0
        %v544 = vmax.f32 %v480, 0.0
        %v545 = vmax.f32 %v481, 0.0
        %v546 = vmax.f32 %v482, 0.0
        %v547 = vmax.f32 %v483, 0.0
        %v548 = vmax.f32 %v484, 0.0
        %v549 = vmax.f32 %v485, 0.0
        %v550 = vmax.f32 %v486, 0.0
        %v551 = vmax.f32 %v487, 0.0
        %v552 = vmax.f32 %v488, 0.0
        %v553 = vmax.f32 %v489, 0.0
        %v554 = vmax.f32 %v490, 0.0
        %v555 = vmax.f32 %v491, 0.0
        %v556 = vmax.f32 %v492, 0.0
        %v557 = vmax.f32 %v493, 0.0
        %v558 = vmax.f32 %v494, 0.0
        %v559 = vmax.f32 %v495, 0.0
        %v560 = vmax.f32 %v496, 0.0
        %v561 = vmax.f32 %v497, 0.0
        %v562 = vmax.f32 %v498, 0.0
        %v563 = vmax.f32 %v499, 0.0
        %v564 = vmax.f32 %v500, 0.0
        %v565 = vmax.f32 %v501, 0.0
        %v566 = vmax.f32 %v502, 0.0
        %v567 = vmax.f32 %v503, 0.0
        %v568 = vmax.f32 %v504, 0.0
        %v569 = vmax.f32 %v505, 0.0
        %v570 = vmax.f32 %v506, 0.0
        %v571 = vmax.f32 %v507, 0.0
        %v572 = vmax.f32 %v508, 0.0
        %v573 = vmax.f32 %v509, 0.0
        %v574 = vmax.f32 %v510, 0.0
        %v575 = vmax.f32 %v511, 0.0
        %v576 = vmax.f32 %v512, 0.0
        %v577 = vmax.f32 %v513, 0.0
        %v578 = vmax.f32 %v514, 0.0
        %v579 = vmax.f32 %v515, 0.0
        %v580 = vmax.f32 %v516, 0.0
        %v581 = vmax.f32 %v517, 0.0
        %v582 = vmax.f32 %v518, 0.0
        %v583 = vmax.f32 %v519, 0.0
        %v584 = vmax.f32 %v520, 0.0
        %v585 = vmax.f32 %v521, 0.0
        %v586 = vmax.f32 %v522, 0.0
        %v587 = vmax.f32 %v523, 0.0
        %v588 = vmax.f32 %v524, 0.0
        %v589 = vmax.f32 %v525, 0.0
        %v590 = vmax.f32 %v526, 0.0
        %v591 = vmax.f32 %v527, 0.0
        %v592 = vmax.f32 %v528, 0.0
        %v593 = vmax.f32 %v529, 0.0
        %v594 = vmax.f32 %v530, 0.0
        %v595 = vmax.f32 %v531, 0.0
        %v596 = vmax.f32 %v532, 0.0
        %v597 = vmax.f32 %v533, 0.0
        %v598 = vpack.c.bf16 %v535, %v534
        %v599 = vpack.c.bf16 %v537, %v536
        %v600 = vpack.c.bf16 %v539, %v538
        %v601 = vpack.c.bf16 %v541, %v540
        %v602 = vpack.c.bf16 %v543, %v542
        %v603 = vpack.c.bf16 %v545, %v544
        %v604 = vpack.c.bf16 %v547, %v546
        %v605 = vpack.c.bf16 %v549, %v548
        %v606 = vpack.c.bf16 %v551, %v550
        %v607 = vpack.c.bf16 %v553, %v552
        %v608 = vpack.c.bf16 %v555, %v554
        %v609 = vpack.c.bf16 %v557, %v556
        %v610 = vpack.c.bf16 %v559, %v558
        %v611 = vpack.c.bf16 %v561, %v560
        %v612 = vpack.c.bf16 %v563, %v562
        %v613 = vpack.c.bf16 %v565, %v564
        %v614 = vpack.c.bf16 %v567, %v566
        %v615 = vpack.c.bf16 %v569, %v568
        %v616 = vpack.c.bf16 %v571, %v570
        %v617 = vpack.c.bf16 %v573, %v572
        %v618 = vpack.c.bf16 %v575, %v574
        %v619 = vpack.c.bf16 %v577, %v576
        %v620 = vpack.c.bf16 %v579, %v578
        %v621 = vpack.c.bf16 %v581, %v580
        %v622 = vpack.c.bf16 %v583, %v582
        %v623 = vpack.c.bf16 %v585, %v584
        %v624 = vpack.c.bf16 %v587, %v586
        %v625 = vpack.c.bf16 %v589, %v588
        %v626 = vpack.c.bf16 %v591, %v590
        %v627 = vpack.c.bf16 %v593, %v592
        %v628 = vpack.c.bf16 %v595, %v594
        %v629 = vpack.c.bf16 %v597, %v596
        %v630 = vld [vmem:[#allocation2] sm:$0xf]
        %v631 = vld [vmem:[#allocation2 + $0x4] sm:$0xf]
        %v632 = vld [vmem:[#allocation4] sm:$0x1]
        %v634 = vlaneseq
        %v635 = vshrl.u32 %v634, 7
        %v636 = vsub.s32 0, %v635
        %v637 = vrot.slane %v632, %v636
        %v641 = vunpack.c.l.b16 %v630
        %v642 = vunpack.c.l.b16 %v631
        %v643 = vpack.c.b16 %v642, %v641
        %vm645 = vcmask 130048
        %v647 = vsel %vm645, %v598, 0
        %v650 = vsel %vm645, %v599, 0
        %v653 = vsel %vm645, %v600, 0
        %v656 = vsel %vm645, %v601, 0
        %v659 = vsel %vm645, %v602, 0
        %v662 = vsel %vm645, %v603, 0
        %v665 = vsel %vm645, %v604, 0
        %v668 = vsel %vm645, %v605, 0
        %v671 = vsel %vm645, %v606, 0
        %v674 = vsel %vm645, %v607, 0
        %v677 = vsel %vm645, %v608, 0
        %v680 = vsel %vm645, %v609, 0
        %v683 = vsel %vm645, %v610, 0
        %v686 = vsel %vm645, %v611, 0
        %v689 = vsel %vm645, %v612, 0
        %v692 = vsel %vm645, %v613, 0
        %v695 = vsel %vm645, %v614, 0
        %v698 = vsel %vm645, %v615, 0
        %v701 = vsel %vm645, %v616, 0
        %v704 = vsel %vm645, %v617, 0
        %v707 = vsel %vm645, %v618, 0
        %v710 = vsel %vm645, %v619, 0
        %v713 = vsel %vm645, %v620, 0
        %v716 = vsel %vm645, %v621, 0
        %v719 = vsel %vm645, %v622, 0
        %v722 = vsel %vm645, %v623, 0
        %v725 = vsel %vm645, %v624, 0
        %v728 = vsel %vm645, %v625, 0
        %v731 = vsel %vm645, %v626, 0
        %v734 = vsel %vm645, %v627, 0
        %v737 = vsel %vm645, %v628, 0
        %v740 = vsel %vm645, %v629, 0
        %742 = vmatprep.subr.bf16.mxu0 0
        %743 = vmatpush1.bf16.msra.mxu0 %v643
        %744 = vmatprep.subr.bf16.mxu0 0
        %745 = vmatpush1.bf16.msra.mxu0 0
        %746 = vmatprep.subr.bf16.mxu0 0
        %747 = vmatpush1.bf16.msra.mxu0 0
        %748 = vmatprep.subr.bf16.mxu0 0
        %749 = vmatpush1.bf16.msra.mxu0 0
        %750 = vmatprep.subr.bf16.mxu0 0
        %751 = vmatpush1.bf16.msra.mxu0 0
        %752 = vmatprep.subr.bf16.mxu0 0
        %753 = vmatpush1.bf16.msra.mxu0 0
        %754 = vmatprep.subr.bf16.mxu0 0
        %755 = vmatpush1.bf16.msra.mxu0 0
        %756 = vmatprep.subr.bf16.mxu0 0
        %757 = vmatpush1.bf16.msra.mxu0 0
        %758 = vmatprep.subr.bf16.mxu0 0
        %759 = vmatpush1.bf16.msra.mxu0 0
        %760 = vmatprep.subr.bf16.mxu0 0
        %761 = vmatpush1.bf16.msra.mxu0 0
        %762 = vmatprep.subr.bf16.mxu0 0
        %763 = vmatpush1.bf16.msra.mxu0 0
        %764 = vmatprep.subr.bf16.mxu0 0
        %765 = vmatpush1.bf16.msra.mxu0 0
        %766 = vmatprep.subr.bf16.mxu0 0
        %767 = vmatpush1.bf16.msra.mxu0 0
        %768 = vmatprep.subr.bf16.mxu0 0
        %769 = vmatpush1.bf16.msra.mxu0 0
        %770 = vmatprep.subr.bf16.mxu0 0
        %771 = vmatpush1.bf16.msra.mxu0 0
        %772 = vmatprep.subr.bf16.mxu0 0
        %773 = vmatpush1.bf16.msra.mxu0 0
        %774 = vmatprep.mubr.bf16.mxu0 0
        %775 = vmatmul.mubr.bf16.gmra.mrb[0].mxu0 %v647
        %v776 = vpop.f32.mrb[0].mxu0
        %v777 = vadd.f32 %v637, %v776
        %v778 = vpop.f32.mrb[0].mxu0
        %v779 = vpop.f32.mrb[0].mxu0
        %v780 = vadd.f32 %v637, %v779
        %v781 = vpop.f32.mrb[0].mxu0
        %782 = vmatprep.mubr.bf16.mxu0 0
        %783 = vmatmul.mubr.bf16.gmra.mrb[0].mxu0 %v650
        %v784 = vpop.f32.mrb[0].mxu0
        %v785 = vadd.f32 %v637, %v784
        %v786 = vpop.f32.mrb[0].mxu0
        %v787 = vpop.f32.mrb[0].mxu0
        %v788 = vadd.f32 %v637, %v787
        %v789 = vpop.f32.mrb[0].mxu0
        %790 = vmatprep.mubr.bf16.mxu0 0
        %791 = vmatmul.mubr.bf16.gmra.mrb[0].mxu0 %v653
        %v792 = vpop.f32.mrb[0].mxu0
        %v793 = vadd.f32 %v637, %v792
        %v794 = vpop.f32.mrb[0].mxu0
        %v795 = vpop.f32.mrb[0].mxu0
        %v796 = vadd.f32 %v637, %v795
        %v797 = vpop.f32.mrb[0].mxu0
        %798 = vmatprep.mubr.bf16.mxu0 0
        %799 = vmatmul.mubr.bf16.gmra.mrb[0].mxu0 %v656
        %v800 = vpop.f32.mrb[0].mxu0
        %v801 = vadd.f32 %v637, %v800
        %v802 = vpop.f32.mrb[0].mxu0
        %v803 = vpop.f32.mrb[0].mxu0
        %v804 = vadd.f32 %v637, %v803
        %v805 = vpop.f32.mrb[0].mxu0
        %806 = vmatprep.mubr.bf16.mxu0 0
        %807 = vmatmul.mubr.bf16.gmra.mrb[0].mxu0 %v659
        %v808 = vpop.f32.mrb[0].mxu0
        %v809 = vadd.f32 %v637, %v808
        %v810 = vpop.f32.mrb[0].mxu0
        %v811 = vpop.f32.mrb[0].mxu0
        %v812 = vadd.f32 %v637, %v811
        %v813 = vpop.f32.mrb[0].mxu0
        %814 = vmatprep.mubr.bf16.mxu0 0
        %815 = vmatmul.mubr.bf16.gmra.mrb[0].mxu0 %v662
        %v816 = vpop.f32.mrb[0].mxu0
        %v817 = vadd.f32 %v637, %v816
        %v818 = vpop.f32.mrb[0].mxu0
        %v819 = vpop.f32.mrb[0].mxu0
        %v820 = vadd.f32 %v637, %v819
        %v821 = vpop.f32.mrb[0].mxu0
        %822 = vmatprep.mubr.bf16.mxu0 0
        %823 = vmatmul.mubr.bf16.gmra.mrb[0].mxu0 %v665
        %v824 = vpop.f32.mrb[0].mxu0
        %v825 = vadd.f32 %v637, %v824
        %v826 = vpop.f32.mrb[0].mxu0
        %v827 = vpop.f32.mrb[0].mxu0
        %v828 = vadd.f32 %v637, %v827
        %v829 = vpop.f32.mrb[0].mxu0
        %830 = vmatprep.mubr.bf16.mxu0 0
        %831 = vmatmul.mubr.bf16.gmra.mrb[0].mxu0 %v668
        %v832 = vpop.f32.mrb[0].mxu0
        %v833 = vadd.f32 %v637, %v832
        %v834 = vpop.f32.mrb[0].mxu0
        %v835 = vpop.f32.mrb[0].mxu0
        %v836 = vadd.f32 %v637, %v835
        %v837 = vpop.f32.mrb[0].mxu0
        %838 = vmatprep.mubr.bf16.mxu0 0
        %839 = vmatmul.mubr.bf16.gmra.mrb[0].mxu0 %v671
        %v840 = vpop.f32.mrb[0].mxu0
        %v841 = vadd.f32 %v637, %v840
        %v842 = vpop.f32.mrb[0].mxu0
        %v843 = vpop.f32.mrb[0].mxu0
        %v844 = vadd.f32 %v637, %v843
        %v845 = vpop.f32.mrb[0].mxu0
        %846 = vmatprep.mubr.bf16.mxu0 0
        %847 = vmatmul.mubr.bf16.gmra.mrb[0].mxu0 %v674
        %v848 = vpop.f32.mrb[0].mxu0
        %v849 = vadd.f32 %v637, %v848
        %v850 = vpop.f32.mrb[0].mxu0
        %v851 = vpop.f32.mrb[0].mxu0
        %v852 = vadd.f32 %v637, %v851
        %v853 = vpop.f32.mrb[0].mxu0
        %854 = vmatprep.mubr.bf16.mxu0 0
        %855 = vmatmul.mubr.bf16.gmra.mrb[0].mxu0 %v677
        %v856 = vpop.f32.mrb[0].mxu0
        %v857 = vadd.f32 %v637, %v856
        %v858 = vpop.f32.mrb[0].mxu0
        %v859 = vpop.f32.mrb[0].mxu0
        %v860 = vadd.f32 %v637, %v859
        %v861 = vpop.f32.mrb[0].mxu0
        %862 = vmatprep.mubr.bf16.mxu0 0
        %863 = vmatmul.mubr.bf16.gmra.mrb[0].mxu0 %v680
        %v864 = vpop.f32.mrb[0].mxu0
        %v865 = vadd.f32 %v637, %v864
        %v866 = vpop.f32.mrb[0].mxu0
        %v867 = vpop.f32.mrb[0].mxu0
        %v868 = vadd.f32 %v637, %v867
        %v869 = vpop.f32.mrb[0].mxu0
        %870 = vmatprep.mubr.bf16.mxu0 0
        %871 = vmatmul.mubr.bf16.gmra.mrb[0].mxu0 %v683
        %v872 = vpop.f32.mrb[0].mxu0
        %v873 = vadd.f32 %v637, %v872
        %v874 = vpop.f32.mrb[0].mxu0
        %v875 = vpop.f32.mrb[0].mxu0
        %v876 = vadd.f32 %v637, %v875
        %v877 = vpop.f32.mrb[0].mxu0
        %878 = vmatprep.mubr.bf16.mxu0 0
        %879 = vmatmul.mubr.bf16.gmra.mrb[0].mxu0 %v686
        %v880 = vpop.f32.mrb[0].mxu0
        %v881 = vadd.f32 %v637, %v880
        %v882 = vpop.f32.mrb[0].mxu0
        %v883 = vpop.f32.mrb[0].mxu0
        %v884 = vadd.f32 %v637, %v883
        %v885 = vpop.f32.mrb[0].mxu0
        %886 = vmatprep.mubr.bf16.mxu0 0
        %887 = vmatmul.mubr.bf16.gmra.mrb[0].mxu0 %v689
        %v888 = vpop.f32.mrb[0].mxu0
        %v889 = vadd.f32 %v637, %v888
        %v890 = vpop.f32.mrb[0].mxu0
        %v891 = vpop.f32.mrb[0].mxu0
        %v892 = vadd.f32 %v637, %v891
        %v893 = vpop.f32.mrb[0].mxu0
        %894 = vmatprep.mubr.bf16.mxu0 0
        %895 = vmatmul.mubr.bf16.gmra.mrb[0].mxu0 %v692
        %v896 = vpop.f32.mrb[0].mxu0
        %v897 = vadd.f32 %v637, %v896
        %v898 = vpop.f32.mrb[0].mxu0
        %v899 = vpop.f32.mrb[0].mxu0
        %v900 = vadd.f32 %v637, %v899
        %v901 = vpop.f32.mrb[0].mxu0
        %902 = vmatprep.mubr.bf16.mxu0 0
        %903 = vmatmul.mubr.bf16.gmra.mrb[0].mxu0 %v695
        %v904 = vpop.f32.mrb[0].mxu0
        %v905 = vadd.f32 %v637, %v904
        %v906 = vpop.f32.mrb[0].mxu0
        %v907 = vpop.f32.mrb[0].mxu0
        %v908 = vadd.f32 %v637, %v907
        %v909 = vpop.f32.mrb[0].mxu0
        %910 = vmatprep.mubr.bf16.mxu0 0
        %911 = vmatmul.mubr.bf16.gmra.mrb[0].mxu0 %v698
        %v912 = vpop.f32.mrb[0].mxu0
        %v913 = vadd.f32 %v637, %v912
        %v914 = vpop.f32.mrb[0].mxu0
        %v915 = vpop.f32.mrb[0].mxu0
        %v916 = vadd.f32 %v637, %v915
        %v917 = vpop.f32.mrb[0].mxu0
        %918 = vmatprep.mubr.bf16.mxu0 0
        %919 = vmatmul.mubr.bf16.gmra.mrb[0].mxu0 %v701
        %v920 = vpop.f32.mrb[0].mxu0
        %v921 = vadd.f32 %v637, %v920
        %v922 = vpop.f32.mrb[0].mxu0
        %v923 = vpop.f32.mrb[0].mxu0
        %v924 = vadd.f32 %v637, %v923
        %v925 = vpop.f32.mrb[0].mxu0
        %926 = vmatprep.mubr.bf16.mxu0 0
        %927 = vmatmul.mubr.bf16.gmra.mrb[0].mxu0 %v704
        %v928 = vpop.f32.mrb[0].mxu0
        %v929 = vadd.f32 %v637, %v928
        %v930 = vpop.f32.mrb[0].mxu0
        %v931 = vpop.f32.mrb[0].mxu0
        %v932 = vadd.f32 %v637, %v931
        %v933 = vpop.f32.mrb[0].mxu0
        %934 = vmatprep.mubr.bf16.mxu0 0
        %935 = vmatmul.mubr.bf16.gmra.mrb[0].mxu0 %v707
        %v936 = vpop.f32.mrb[0].mxu0
        %v937 = vadd.f32 %v637, %v936
        %v938 = vpop.f32.mrb[0].mxu0
        %v939 = vpop.f32.mrb[0].mxu0
        %v940 = vadd.f32 %v637, %v939
        %v941 = vpop.f32.mrb[0].mxu0
        %942 = vmatprep.mubr.bf16.mxu0 0
        %943 = vmatmul.mubr.bf16.gmra.mrb[0].mxu0 %v710
        %v944 = vpop.f32.mrb[0].mxu0
        %v945 = vadd.f32 %v637, %v944
        %v946 = vpop.f32.mrb[0].mxu0
        %v947 = vpop.f32.mrb[0].mxu0
        %v948 = vadd.f32 %v637, %v947
        %v949 = vpop.f32.mrb[0].mxu0
        %950 = vmatprep.mubr.bf16.mxu0 0
        %951 = vmatmul.mubr.bf16.gmra.mrb[0].mxu0 %v713
        %v952 = vpop.f32.mrb[0].mxu0
        %v953 = vadd.f32 %v637, %v952
        %v954 = vpop.f32.mrb[0].mxu0
        %v955 = vpop.f32.mrb[0].mxu0
        %v956 = vadd.f32 %v637, %v955
        %v957 = vpop.f32.mrb[0].mxu0
        %958 = vmatprep.mubr.bf16.mxu0 0
        %959 = vmatmul.mubr.bf16.gmra.mrb[0].mxu0 %v716
        %v960 = vpop.f32.mrb[0].mxu0
        %v961 = vadd.f32 %v637, %v960
        %v962 = vpop.f32.mrb[0].mxu0
        %v963 = vpop.f32.mrb[0].mxu0
        %v964 = vadd.f32 %v637, %v963
        %v965 = vpop.f32.mrb[0].mxu0
        %966 = vmatprep.mubr.bf16.mxu0 0
        %967 = vmatmul.mubr.bf16.gmra.mrb[0].mxu0 %v719
        %v968 = vpop.f32.mrb[0].mxu0
        %v969 = vadd.f32 %v637, %v968
        %v970 = vpop.f32.mrb[0].mxu0
        %v971 = vpop.f32.mrb[0].mxu0
        %v972 = vadd.f32 %v637, %v971
        %v973 = vpop.f32.mrb[0].mxu0
        %974 = vmatprep.mubr.bf16.mxu0 0
        %975 = vmatmul.mubr.bf16.gmra.mrb[0].mxu0 %v722
        %v976 = vpop.f32.mrb[0].mxu0
        %v977 = vadd.f32 %v637, %v976
        %v978 = vpop.f32.mrb[0].mxu0
        %v979 = vpop.f32.mrb[0].mxu0
        %v980 = vadd.f32 %v637, %v979
        %v981 = vpop.f32.mrb[0].mxu0
        %982 = vmatprep.mubr.bf16.mxu0 0
        %983 = vmatmul.mubr.bf16.gmra.mrb[0].mxu0 %v725
        %v984 = vpop.f32.mrb[0].mxu0
        %v985 = vadd.f32 %v637, %v984
        %v986 = vpop.f32.mrb[0].mxu0
        %v987 = vpop.f32.mrb[0].mxu0
        %v988 = vadd.f32 %v637, %v987
        %v989 = vpop.f32.mrb[0].mxu0
        %990 = vmatprep.mubr.bf16.mxu0 0
        %991 = vmatmul.mubr.bf16.gmra.mrb[0].mxu0 %v728
        %v992 = vpop.f32.mrb[0].mxu0
        %v993 = vadd.f32 %v637, %v992
        %v994 = vpop.f32.mrb[0].mxu0
        %v995 = vpop.f32.mrb[0].mxu0
        %v996 = vadd.f32 %v637, %v995
        %v997 = vpop.f32.mrb[0].mxu0
        %998 = vmatprep.mubr.bf16.mxu0 0
        %999 = vmatmul.mubr.bf16.gmra.mrb[0].mxu0 %v731
        %v1000 = vpop.f32.mrb[0].mxu0
        %v1001 = vadd.f32 %v637, %v1000
        %v1002 = vpop.f32.mrb[0].mxu0
        %v1003 = vpop.f32.mrb[0].mxu0
        %v1004 = vadd.f32 %v637, %v1003
        %v1005 = vpop.f32.mrb[0].mxu0
        %1006 = vmatprep.mubr.bf16.mxu0 0
        %1007 = vmatmul.mubr.bf16.gmra.mrb[0].mxu0 %v734
        %v1008 = vpop.f32.mrb[0].mxu0
        %v1009 = vadd.f32 %v637, %v1008
        %v1010 = vpop.f32.mrb[0].mxu0
        %v1011 = vpop.f32.mrb[0].mxu0
        %v1012 = vadd.f32 %v637, %v1011
        %v1013 = vpop.f32.mrb[0].mxu0
        %1014 = vmatprep.mubr.bf16.mxu0 0
        %1015 = vmatmul.mubr.bf16.gmra.mrb[0].mxu0 %v737
        %v1016 = vpop.f32.mrb[0].mxu0
        %v1017 = vadd.f32 %v637, %v1016
        %v1018 = vpop.f32.mrb[0].mxu0
        %v1019 = vpop.f32.mrb[0].mxu0
        %v1020 = vadd.f32 %v637, %v1019
        %v1021 = vpop.f32.mrb[0].mxu0
        %1022 = vmatprep.mubr.bf16.mxu0 0
        %1023 = vmatmul.mubr.bf16.gmra.mrb[0].mxu0 %v740
        %v1024 = vpop.f32.mrb[0].mxu0
        %v1025 = vadd.f32 %v637, %v1024
        %v1026 = vpop.f32.mrb[0].mxu0
        %v1027 = vpop.f32.mrb[0].mxu0
        %v1028 = vadd.f32 %v637, %v1027
        %v1029 = vpop.f32.mrb[0].mxu0
        %1030 = vdwg.mxu0
        %vm1031 = vcmask 261120
        %1032 = vst.msk [vmem:[%s319] sm:$0xff] %vm1031, %v777
        %1033 = vst.msk [vmem:[%s319 + $0x8] sm:$0xff] %vm1031, %v780
        %1034 = vst.msk [vmem:[%s319 + $0x10] sm:$0xff] %vm1031, %v785
        %1035 = vst.msk [vmem:[%s319 + $0x18] sm:$0xff] %vm1031, %v788
        %1036 = vst.msk [vmem:[%s319 + $0x20] sm:$0xff] %vm1031, %v793
        %1037 = vst.msk [vmem:[%s319 + $0x28] sm:$0xff] %vm1031, %v796
        %1038 = vst.msk [vmem:[%s319 + $0x30] sm:$0xff] %vm1031, %v801
        %1039 = vst.msk [vmem:[%s319 + $0x38] sm:$0xff] %vm1031, %v804
        %1040 = vst.msk [vmem:[%s319 + $0x40] sm:$0xff] %vm1031, %v809
        %1041 = vst.msk [vmem:[%s319 + $0x48] sm:$0xff] %vm1031, %v812
        %1042 = vst.msk [vmem:[%s319 + $0x50] sm:$0xff] %vm1031, %v817
        %1043 = vst.msk [vmem:[%s319 + $0x58] sm:$0xff] %vm1031, %v820
        %1044 = vst.msk [vmem:[%s319 + $0x60] sm:$0xff] %vm1031, %v825
        %1045 = vst.msk [vmem:[%s319 + $0x68] sm:$0xff] %vm1031, %v828
        %1046 = vst.msk [vmem:[%s319 + $0x70] sm:$0xff] %vm1031, %v833
        %1047 = vst.msk [vmem:[%s319 + $0x78] sm:$0xff] %vm1031, %v836
        %1048 = vst.msk [vmem:[%s319 + $0x80] sm:$0xff] %vm1031, %v841
        %1049 = vst.msk [vmem:[%s319 + $0x88] sm:$0xff] %vm1031, %v844
        %1050 = vst.msk [vmem:[%s319 + $0x90] sm:$0xff] %vm1031, %v849
        %1051 = vst.msk [vmem:[%s319 + $0x98] sm:$0xff] %vm1031, %v852
        %1052 = vst.msk [vmem:[%s319 + $0xa0] sm:$0xff] %vm1031, %v857
        %1053 = vst.msk [vmem:[%s319 + $0xa8] sm:$0xff] %vm1031, %v860
        %1054 = vst.msk [vmem:[%s319 + $0xb0] sm:$0xff] %vm1031, %v865
        %1055 = vst.msk [vmem:[%s319 + $0xb8] sm:$0xff] %vm1031, %v868
        %1056 = vst.msk [vmem:[%s319 + $0xc0] sm:$0xff] %vm1031, %v873
        %1057 = vst.msk [vmem:[%s319 + $0xc8] sm:$0xff] %vm1031, %v876
        %1058 = vst.msk [vmem:[%s319 + $0xd0] sm:$0xff] %vm1031, %v881
        %1059 = vst.msk [vmem:[%s319 + $0xd8] sm:$0xff] %vm1031, %v884
        %1060 = vst.msk [vmem:[%s319 + $0xe0] sm:$0xff] %vm1031, %v889
        %1061 = vst.msk [vmem:[%s319 + $0xe8] sm:$0xff] %vm1031, %v892
        %1062 = vst.msk [vmem:[%s319 + $0xf0] sm:$0xff] %vm1031, %v897
        %1063 = vst.msk [vmem:[%s319 + $0xf8] sm:$0xff] %vm1031, %v900
        %1064 = vst.msk [vmem:[%s319 + $0x100] sm:$0xff] %vm1031, %v905
        %1065 = vst.msk [vmem:[%s319 + $0x108] sm:$0xff] %vm1031, %v908
        %1066 = vst.msk [vmem:[%s319 + $0x110] sm:$0xff] %vm1031, %v913
        %1067 = vst.msk [vmem:[%s319 + $0x118] sm:$0xff] %vm1031, %v916
        %1068 = vst.msk [vmem:[%s319 + $0x120] sm:$0xff] %vm1031, %v921
        %1069 = vst.msk [vmem:[%s319 + $0x128] sm:$0xff] %vm1031, %v924
        %1070 = vst.msk [vmem:[%s319 + $0x130] sm:$0xff] %vm1031, %v929
        %1071 = vst.msk [vmem:[%s319 + $0x138] sm:$0xff] %vm1031, %v932
        %1072 = vst.msk [vmem:[%s319 + $0x140] sm:$0xff] %vm1031, %v937
        %1073 = vst.msk [vmem:[%s319 + $0x148] sm:$0xff] %vm1031, %v940
        %1074 = vst.msk [vmem:[%s319 + $0x150] sm:$0xff] %vm1031, %v945
        %1075 = vst.msk [vmem:[%s319 + $0x158] sm:$0xff] %vm1031, %v948
        %1076 = vst.msk [vmem:[%s319 + $0x160] sm:$0xff] %vm1031, %v953
        %1077 = vst.msk [vmem:[%s319 + $0x168] sm:$0xff] %vm1031, %v956
        %1078 = vst.msk [vmem:[%s319 + $0x170] sm:$0xff] %vm1031, %v961
        %1079 = vst.msk [vmem:[%s319 + $0x178] sm:$0xff] %vm1031, %v964
        %1080 = vst.msk [vmem:[%s319 + $0x180] sm:$0xff] %vm1031, %v969
        %1081 = vst.msk [vmem:[%s319 + $0x188] sm:$0xff] %vm1031, %v972
        %1082 = vst.msk [vmem:[%s319 + $0x190] sm:$0xff] %vm1031, %v977
        %1083 = vst.msk [vmem:[%s319 + $0x198] sm:$0xff] %vm1031, %v980
        %1084 = vst.msk [vmem:[%s319 + $0x1a0] sm:$0xff] %vm1031, %v985
        %1085 = vst.msk [vmem:[%s319 + $0x1a8] sm:$0xff] %vm1031, %v988
        %1086 = vst.msk [vmem:[%s319 + $0x1b0] sm:$0xff] %vm1031, %v993
        %1087 = vst.msk [vmem:[%s319 + $0x1b8] sm:$0xff] %vm1031, %v996
        %1088 = vst.msk [vmem:[%s319 + $0x1c0] sm:$0xff] %vm1031, %v1001
        %1089 = vst.msk [vmem:[%s319 + $0x1c8] sm:$0xff] %vm1031, %v1004
        %1090 = vst.msk [vmem:[%s319 + $0x1d0] sm:$0xff] %vm1031, %v1009
        %1091 = vst.msk [vmem:[%s319 + $0x1d8] sm:$0xff] %vm1031, %v1012
        %1092 = vst.msk [vmem:[%s319 + $0x1e0] sm:$0xff] %vm1031, %v1017
        %1093 = vst.msk [vmem:[%s319 + $0x1e8] sm:$0xff] %vm1031, %v1020
        %1094 = vst.msk [vmem:[%s319 + $0x1f0] sm:$0xff] %vm1031, %v1025
        %1095 = vst.msk [vmem:[%s319 + $0x1f8] sm:$0xff] %vm1031, %v1028
        %v1096 = vsel %vm1031, %v777, 0.0
        %v1097 = vsel %vm1031, %v780, 0.0
        %v1098 = vadd.f32 %v1096, %v1097
        %v1099 = vsel %vm1031, %v785, 0.0
        %v1100 = vadd.f32 %v1098, %v1099
        %v1101 = vsel %vm1031, %v788, 0.0
        %v1102 = vadd.f32 %v1100, %v1101
        %v1103 = vsel %vm1031, %v793, 0.0
        %v1104 = vadd.f32 %v1102, %v1103
        %v1105 = vsel %vm1031, %v796, 0.0
        %v1106 = vadd.f32 %v1104, %v1105
        %v1107 = vsel %vm1031, %v801, 0.0
        %v1108 = vadd.f32 %v1106, %v1107
        %v1109 = vsel %vm1031, %v804, 0.0
        %v1110 = vadd.f32 %v1108, %v1109
        %v1111 = vsel %vm1031, %v809, 0.0
        %v1112 = vadd.f32 %v1110, %v1111
        %v1113 = vsel %vm1031, %v812, 0.0
        %v1114 = vadd.f32 %v1112, %v1113
        %v1115 = vsel %vm1031, %v817, 0.0
        %v1116 = vadd.f32 %v1114, %v1115
        %v1117 = vsel %vm1031, %v820, 0.0
        %v1118 = vadd.f32 %v1116, %v1117
        %v1119 = vsel %vm1031, %v825, 0.0
        %v1120 = vadd.f32 %v1118, %v1119
        %v1121 = vsel %vm1031, %v828, 0.0
        %v1122 = vadd.f32 %v1120, %v1121
        %v1123 = vsel %vm1031, %v833, 0.0
        %v1124 = vadd.f32 %v1122, %v1123
        %v1125 = vsel %vm1031, %v836, 0.0
        %v1126 = vadd.f32 %v1124, %v1125
        %v1127 = vsel %vm1031, %v841, 0.0
        %v1128 = vadd.f32 %v1126, %v1127
        %v1129 = vsel %vm1031, %v844, 0.0
        %v1130 = vadd.f32 %v1128, %v1129
        %v1131 = vsel %vm1031, %v849, 0.0
        %v1132 = vadd.f32 %v1130, %v1131
        %v1133 = vsel %vm1031, %v852, 0.0
        %v1134 = vadd.f32 %v1132, %v1133
        %v1135 = vsel %vm1031, %v857, 0.0
        %v1136 = vadd.f32 %v1134, %v1135
        %v1137 = vsel %vm1031, %v860, 0.0
        %v1138 = vadd.f32 %v1136, %v1137
        %v1139 = vsel %vm1031, %v865, 0.0
        %v1140 = vadd.f32 %v1138, %v1139
        %v1141 = vsel %vm1031, %v868, 0.0
        %v1142 = vadd.f32 %v1140, %v1141
        %v1143 = vsel %vm1031, %v873, 0.0
        %v1144 = vadd.f32 %v1142, %v1143
        %v1145 = vsel %vm1031, %v876, 0.0
        %v1146 = vadd.f32 %v1144, %v1145
        %v1147 = vsel %vm1031, %v881, 0.0
        %v1148 = vadd.f32 %v1146, %v1147
        %v1149 = vsel %vm1031, %v884, 0.0
        %v1150 = vadd.f32 %v1148, %v1149
        %v1151 = vsel %vm1031, %v889, 0.0
        %v1152 = vadd.f32 %v1150, %v1151
        %v1153 = vsel %vm1031, %v892, 0.0
        %v1154 = vadd.f32 %v1152, %v1153
        %v1155 = vsel %vm1031, %v897, 0.0
        %v1156 = vadd.f32 %v1154, %v1155
        %v1157 = vsel %vm1031, %v900, 0.0
        %v1158 = vadd.f32 %v1156, %v1157
        %v1159 = vsel %vm1031, %v905, 0.0
        %v1160 = vadd.f32 %v1158, %v1159
        %v1161 = vsel %vm1031, %v908, 0.0
        %v1162 = vadd.f32 %v1160, %v1161
        %v1163 = vsel %vm1031, %v913, 0.0
        %v1164 = vadd.f32 %v1162, %v1163
        %v1165 = vsel %vm1031, %v916, 0.0
        %v1166 = vadd.f32 %v1164, %v1165
        %v1167 = vsel %vm1031, %v921, 0.0
        %v1168 = vadd.f32 %v1166, %v1167
        %v1169 = vsel %vm1031, %v924, 0.0
        %v1170 = vadd.f32 %v1168, %v1169
        %v1171 = vsel %vm1031, %v929, 0.0
        %v1172 = vadd.f32 %v1170, %v1171
        %v1173 = vsel %vm1031, %v932, 0.0
        %v1174 = vadd.f32 %v1172, %v1173
        %v1175 = vsel %vm1031, %v937, 0.0
        %v1176 = vadd.f32 %v1174, %v1175
        %v1177 = vsel %vm1031, %v940, 0.0
        %v1178 = vadd.f32 %v1176, %v1177
        %v1179 = vsel %vm1031, %v945, 0.0
        %v1180 = vadd.f32 %v1178, %v1179
        %v1181 = vsel %vm1031, %v948, 0.0
        %v1182 = vadd.f32 %v1180, %v1181
        %v1183 = vsel %vm1031, %v953, 0.0
        %v1184 = vadd.f32 %v1182, %v1183
        %v1185 = vsel %vm1031, %v956, 0.0
        %v1186 = vadd.f32 %v1184, %v1185
        %v1187 = vsel %vm1031, %v961, 0.0
        %v1188 = vadd.f32 %v1186, %v1187
        %v1189 = vsel %vm1031, %v964, 0.0
        %v1190 = vadd.f32 %v1188, %v1189
        %v1191 = vsel %vm1031, %v969, 0.0
        %v1192 = vadd.f32 %v1190, %v1191
        %v1193 = vsel %vm1031, %v972, 0.0
        %v1194 = vadd.f32 %v1192, %v1193
        %v1195 = vsel %vm1031, %v977, 0.0
        %v1196 = vadd.f32 %v1194, %v1195
        %v1197 = vsel %vm1031, %v980, 0.0
        %v1198 = vadd.f32 %v1196, %v1197
        %v1199 = vsel %vm1031, %v985, 0.0
        %v1200 = vadd.f32 %v1198, %v1199
        %v1201 = vsel %vm1031, %v988, 0.0
        %v1202 = vadd.f32 %v1200, %v1201
        %v1203 = vsel %vm1031, %v993, 0.0
        %v1204 = vadd.f32 %v1202, %v1203
        %v1205 = vsel %vm1031, %v996, 0.0
        %v1206 = vadd.f32 %v1204, %v1205
        %v1207 = vsel %vm1031, %v1001, 0.0
        %v1208 = vadd.f32 %v1206, %v1207
        %v1209 = vsel %vm1031, %v1004, 0.0
        %v1210 = vadd.f32 %v1208, %v1209
        %v1211 = vsel %vm1031, %v1009, 0.0
        %v1212 = vadd.f32 %v1210, %v1211
        %v1213 = vsel %vm1031, %v1012, 0.0
        %v1214 = vadd.f32 %v1212, %v1213
        %v1215 = vsel %vm1031, %v1017, 0.0
        %v1216 = vadd.f32 %v1214, %v1215
        %v1217 = vsel %vm1031, %v1020, 0.0
        %v1218 = vadd.f32 %v1216, %v1217
        %v1219 = vsel %vm1031, %v1025, 0.0
        %v1220 = vadd.f32 %v1218, %v1219
        %v1221 = vsel %vm1031, %v1028, 0.0
        %v1222 = vadd.f32 %v1220, %v1221
        %v1223 = vrot.slane %v1222, 4
        %v1224 = vadd.f32 %v1222, %v1223
        %v1225 = vrot.slane %v1224, 2
        %v1226 = vadd.f32 %v1224, %v1225
        %v1227 = vrot.slane %v1226, 1
        %v1228 = vadd.f32 %v1226, %v1227
        %vm1229 = vcmask 253952
        %1230 = vst.msk [vmem:[%s323] sm:$0x1] %vm1229, %v1228
        %v1231 = vmul.f32 %v777, %v777
        %v1232 = vmul.f32 %v780, %v780
        %v1233 = vmul.f32 %v785, %v785
        %v1234 = vmul.f32 %v788, %v788
        %v1235 = vmul.f32 %v793, %v793
        %v1236 = vmul.f32 %v796, %v796
        %v1237 = vmul.f32 %v801, %v801
        %v1238 = vmul.f32 %v804, %v804
        %v1239 = vmul.f32 %v809, %v809
        %v1240 = vmul.f32 %v812, %v812
        %v1241 = vmul.f32 %v817, %v817
        %v1242 = vmul.f32 %v820, %v820
        %v1243 = vmul.f32 %v825, %v825
        %v1244 = vmul.f32 %v828, %v828
        %v1245 = vmul.f32 %v833, %v833
        %v1246 = vmul.f32 %v836, %v836
        %v1247 = vmul.f32 %v841, %v841
        %v1248 = vmul.f32 %v844, %v844
        %v1249 = vmul.f32 %v849, %v849
        %v1250 = vmul.f32 %v852, %v852
        %v1251 = vmul.f32 %v857, %v857
        %v1252 = vmul.f32 %v860, %v860
        %v1253 = vmul.f32 %v865, %v865
        %v1254 = vmul.f32 %v868, %v868
        %v1255 = vmul.f32 %v873, %v873
        %v1256 = vmul.f32 %v876, %v876
        %v1257 = vmul.f32 %v881, %v881
        %v1258 = vmul.f32 %v884, %v884
        %v1259 = vmul.f32 %v889, %v889
        %v1260 = vmul.f32 %v892, %v892
        %v1261 = vmul.f32 %v897, %v897
        %v1262 = vmul.f32 %v900, %v900
        %v1263 = vmul.f32 %v905, %v905
        %v1264 = vmul.f32 %v908, %v908
        %v1265 = vmul.f32 %v913, %v913
        %v1266 = vmul.f32 %v916, %v916
        %v1267 = vmul.f32 %v921, %v921
        %v1268 = vmul.f32 %v924, %v924
        %v1269 = vmul.f32 %v929, %v929
        %v1270 = vmul.f32 %v932, %v932
        %v1271 = vmul.f32 %v937, %v937
        %v1272 = vmul.f32 %v940, %v940
        %v1273 = vmul.f32 %v945, %v945
        %v1274 = vmul.f32 %v948, %v948
        %v1275 = vmul.f32 %v953, %v953
        %v1276 = vmul.f32 %v956, %v956
        %v1277 = vmul.f32 %v961, %v961
        %v1278 = vmul.f32 %v964, %v964
        %v1279 = vmul.f32 %v969, %v969
        %v1280 = vmul.f32 %v972, %v972
        %v1281 = vmul.f32 %v977, %v977
        %v1282 = vmul.f32 %v980, %v980
        %v1283 = vmul.f32 %v985, %v985
        %v1284 = vmul.f32 %v988, %v988
        %v1285 = vmul.f32 %v993, %v993
        %v1286 = vmul.f32 %v996, %v996
        %v1287 = vmul.f32 %v1001, %v1001
        %v1288 = vmul.f32 %v1004, %v1004
        %v1289 = vmul.f32 %v1009, %v1009
        %v1290 = vmul.f32 %v1012, %v1012
        %v1291 = vmul.f32 %v1017, %v1017
        %v1292 = vmul.f32 %v1020, %v1020
        %v1293 = vmul.f32 %v1025, %v1025
        %v1294 = vmul.f32 %v1028, %v1028
        %v1295 = vsel %vm1031, %v1231, 0.0
        %v1296 = vsel %vm1031, %v1232, 0.0
        %v1297 = vadd.f32 %v1295, %v1296
        %v1298 = vsel %vm1031, %v1233, 0.0
        %v1299 = vadd.f32 %v1297, %v1298
        %v1300 = vsel %vm1031, %v1234, 0.0
        %v1301 = vadd.f32 %v1299, %v1300
        %v1302 = vsel %vm1031, %v1235, 0.0
        %v1303 = vadd.f32 %v1301, %v1302
        %v1304 = vsel %vm1031, %v1236, 0.0
        %v1305 = vadd.f32 %v1303, %v1304
        %v1306 = vsel %vm1031, %v1237, 0.0
        %v1307 = vadd.f32 %v1305, %v1306
        %v1308 = vsel %vm1031, %v1238, 0.0
        %v1309 = vadd.f32 %v1307, %v1308
        %v1310 = vsel %vm1031, %v1239, 0.0
        %v1311 = vadd.f32 %v1309, %v1310
        %v1312 = vsel %vm1031, %v1240, 0.0
        %v1313 = vadd.f32 %v1311, %v1312
        %v1314 = vsel %vm1031, %v1241, 0.0
        %v1315 = vadd.f32 %v1313, %v1314
        %v1316 = vsel %vm1031, %v1242, 0.0
        %v1317 = vadd.f32 %v1315, %v1316
        %v1318 = vsel %vm1031, %v1243, 0.0
        %v1319 = vadd.f32 %v1317, %v1318
        %v1320 = vsel %vm1031, %v1244, 0.0
        %v1321 = vadd.f32 %v1319, %v1320
        %v1322 = vsel %vm1031, %v1245, 0.0
        %v1323 = vadd.f32 %v1321, %v1322
        %v1324 = vsel %vm1031, %v1246, 0.0
        %v1325 = vadd.f32 %v1323, %v1324
        %v1326 = vsel %vm1031, %v1247, 0.0
        %v1327 = vadd.f32 %v1325, %v1326
        %v1328 = vsel %vm1031, %v1248, 0.0
        %v1329 = vadd.f32 %v1327, %v1328
        %v1330 = vsel %vm1031, %v1249, 0.0
        %v1331 = vadd.f32 %v1329, %v1330
        %v1332 = vsel %vm1031, %v1250, 0.0
        %v1333 = vadd.f32 %v1331, %v1332
        %v1334 = vsel %vm1031, %v1251, 0.0
        %v1335 = vadd.f32 %v1333, %v1334
        %v1336 = vsel %vm1031, %v1252, 0.0
        %v1337 = vadd.f32 %v1335, %v1336
        %v1338 = vsel %vm1031, %v1253, 0.0
        %v1339 = vadd.f32 %v1337, %v1338
        %v1340 = vsel %vm1031, %v1254, 0.0
        %v1341 = vadd.f32 %v1339, %v1340
        %v1342 = vsel %vm1031, %v1255, 0.0
        %v1343 = vadd.f32 %v1341, %v1342
        %v1344 = vsel %vm1031, %v1256, 0.0
        %v1345 = vadd.f32 %v1343, %v1344
        %v1346 = vsel %vm1031, %v1257, 0.0
        %v1347 = vadd.f32 %v1345, %v1346
        %v1348 = vsel %vm1031, %v1258, 0.0
        %v1349 = vadd.f32 %v1347, %v1348
        %v1350 = vsel %vm1031, %v1259, 0.0
        %v1351 = vadd.f32 %v1349, %v1350
        %v1352 = vsel %vm1031, %v1260, 0.0
        %v1353 = vadd.f32 %v1351, %v1352
        %v1354 = vsel %vm1031, %v1261, 0.0
        %v1355 = vadd.f32 %v1353, %v1354
        %v1356 = vsel %vm1031, %v1262, 0.0
        %v1357 = vadd.f32 %v1355, %v1356
        %v1358 = vsel %vm1031, %v1263, 0.0
        %v1359 = vadd.f32 %v1357, %v1358
        %v1360 = vsel %vm1031, %v1264, 0.0
        %v1361 = vadd.f32 %v1359, %v1360
        %v1362 = vsel %vm1031, %v1265, 0.0
        %v1363 = vadd.f32 %v1361, %v1362
        %v1364 = vsel %vm1031, %v1266, 0.0
        %v1365 = vadd.f32 %v1363, %v1364
        %v1366 = vsel %vm1031, %v1267, 0.0
        %v1367 = vadd.f32 %v1365, %v1366
        %v1368 = vsel %vm1031, %v1268, 0.0
        %v1369 = vadd.f32 %v1367, %v1368
        %v1370 = vsel %vm1031, %v1269, 0.0
        %v1371 = vadd.f32 %v1369, %v1370
        %v1372 = vsel %vm1031, %v1270, 0.0
        %v1373 = vadd.f32 %v1371, %v1372
        %v1374 = vsel %vm1031, %v1271, 0.0
        %v1375 = vadd.f32 %v1373, %v1374
        %v1376 = vsel %vm1031, %v1272, 0.0
        %v1377 = vadd.f32 %v1375, %v1376
        %v1378 = vsel %vm1031, %v1273, 0.0
        %v1379 = vadd.f32 %v1377, %v1378
        %v1380 = vsel %vm1031, %v1274, 0.0
        %v1381 = vadd.f32 %v1379, %v1380
        %v1382 = vsel %vm1031, %v1275, 0.0
        %v1383 = vadd.f32 %v1381, %v1382
        %v1384 = vsel %vm1031, %v1276, 0.0
        %v1385 = vadd.f32 %v1383, %v1384
        %v1386 = vsel %vm1031, %v1277, 0.0
        %v1387 = vadd.f32 %v1385, %v1386
        %v1388 = vsel %vm1031, %v1278, 0.0
        %v1389 = vadd.f32 %v1387, %v1388
        %v1390 = vsel %vm1031, %v1279, 0.0
        %v1391 = vadd.f32 %v1389, %v1390
        %v1392 = vsel %vm1031, %v1280, 0.0
        %v1393 = vadd.f32 %v1391, %v1392
        %v1394 = vsel %vm1031, %v1281, 0.0
        %v1395 = vadd.f32 %v1393, %v1394
        %v1396 = vsel %vm1031, %v1282, 0.0
        %v1397 = vadd.f32 %v1395, %v1396
        %v1398 = vsel %vm1031, %v1283, 0.0
        %v1399 = vadd.f32 %v1397, %v1398
        %v1400 = vsel %vm1031, %v1284, 0.0
        %v1401 = vadd.f32 %v1399, %v1400
        %v1402 = vsel %vm1031, %v1285, 0.0
        %v1403 = vadd.f32 %v1401, %v1402
        %v1404 = vsel %vm1031, %v1286, 0.0
        %v1405 = vadd.f32 %v1403, %v1404
        %v1406 = vsel %vm1031, %v1287, 0.0
        %v1407 = vadd.f32 %v1405, %v1406
        %v1408 = vsel %vm1031, %v1288, 0.0
        %v1409 = vadd.f32 %v1407, %v1408
        %v1410 = vsel %vm1031, %v1289, 0.0
        %v1411 = vadd.f32 %v1409, %v1410
        %v1412 = vsel %vm1031, %v1290, 0.0
        %v1413 = vadd.f32 %v1411, %v1412
        %v1414 = vsel %vm1031, %v1291, 0.0
        %v1415 = vadd.f32 %v1413, %v1414
        %v1416 = vsel %vm1031, %v1292, 0.0
        %v1417 = vadd.f32 %v1415, %v1416
        %v1418 = vsel %vm1031, %v1293, 0.0
        %v1419 = vadd.f32 %v1417, %v1418
        %v1420 = vsel %vm1031, %v1294, 0.0
        %v1421 = vadd.f32 %v1419, %v1420
        %v1422 = vrot.slane %v1421, 4
        %v1423 = vadd.f32 %v1421, %v1422
        %v1424 = vrot.slane %v1423, 2
        %v1425 = vadd.f32 %v1423, %v1424
        %v1426 = vrot.slane %v1425, 1
        %v1427 = vadd.f32 %v1425, %v1426
        %1428 = vst.msk [vmem:[%s326] sm:$0x1] %vm1229, %v1427
        %s1429 = smul.u32 64, %s21
        %p1430 = scmp.lt.s32.totalorder %s1429, 127
        %s1431 = scalar_select %p1430, %s1429, 127
        %s1432 = smul.addr %s1431, 8
        %s1433 = scalar_lea.vmem %s5, %s1432
        %p1434 = scmp.lt.s32.totalorder %s21, 1
        %s1435 = scalar_select %p1434, %s21, 1
        %s1436 = scalar_lea.vmem %s6, %s1435
        %p1437 = scmp.lt.s32.totalorder %s21, 1
        %s1438 = scalar_select %p1437, %s21, 1
        %s1439 = scalar_lea.vmem %s7, %s1438
        // Predicated region
        $region49: #{dcgan_generator_forward.6} parent=39 // pred_check
          %p1440 = pneg %p149
        $region50: #{dcgan_generator_forward.6} parent=39 // pred_check_branch
          %1442 = sbr.rel (%p1440) target = $region52
        $region51: #{dcgan_generator_forward.6} parent=39 // pred_region
          %s1443 = smul.u32 64, %s21
        $region52: #{dcgan_generator_forward.6} parent=39 // pred_fallthru
          _
        // Predicated region
        $region53: #{dcgan_generator_forward.6} parent=39 // pred_check
          %p1444 = pneg %p175
        $region54: #{dcgan_generator_forward.6} parent=39 // pred_check_branch
          %1446 = sbr.rel (%p1444) target = $region56
        $region55: #{dcgan_generator_forward.6} parent=39 // pred_region
          _
        $region56: #{dcgan_generator_forward.6} parent=39 // pred_fallthru
          _
        // Predicated region
        $region57: #{dcgan_generator_forward.6} parent=39 // pred_check
          %p1447 = pneg %p201
        $region58: #{dcgan_generator_forward.6} parent=39 // pred_check_branch
          %1449 = sbr.rel (%p1447) target = $region60
        $region59: #{dcgan_generator_forward.6} parent=39 // pred_region
          _
        $region60: #{dcgan_generator_forward.6} parent=39 // pred_fallthru
          _
      $region40: #{dcgan_generator_forward.6} parent=5 // pred_fallthru
        _
      %p1450 = scmp.le.s32.totalorder 2, %s16
      // Predicated region
      $region61: #{dcgan_generator_forward.6} parent=5 // pred_check
        %p1451 = pneg %p1450
      $region62: #{dcgan_generator_forward.6} parent=5 // pred_check_branch
        %1453 = sbr.rel (%p1451) target = $region64
      $region63: #{dcgan_generator_forward.6} parent=5 // pred_region
        %s1454 = ssub.s32 %s16, 2
        // Predicated region
        $region65: #{dcgan_generator_forward.6} parent=63 // pred_check
          %p1455 = pneg %p155
        $region66: #{dcgan_generator_forward.6} parent=63 // pred_check_branch
          %1457 = sbr.rel (%p1455) target = $region68
        $region67: #{dcgan_generator_forward.6} parent=63 // pred_region
          %s1458 = smul.u32 64, %s22
          %p1459 = scmp.lt.s32.totalorder %s1458, 127
          %s1460 = scalar_select %p1459, %s1458, 127
          %s1461 = smul.addr %s1460, 8
          %s1462 = scalar_lea.vmem %s5, %s1461
        $region68: #{dcgan_generator_forward.6} parent=63 // pred_fallthru
          _
        // Predicated region
        $region69: #{dcgan_generator_forward.6} parent=63 // pred_check
          %p1463 = pneg %p181
        $region70: #{dcgan_generator_forward.6} parent=63 // pred_check_branch
          %1465 = sbr.rel (%p1463) target = $region72
        $region71: #{dcgan_generator_forward.6} parent=63 // pred_region
          %p1466 = scmp.lt.s32.totalorder %s22, 1
          %s1467 = scalar_select %p1466, %s22, 1
          %s1468 = scalar_lea.vmem %s6, %s1467
        $region72: #{dcgan_generator_forward.6} parent=63 // pred_fallthru
          _
        // Predicated region
        $region73: #{dcgan_generator_forward.6} parent=63 // pred_check
          %p1469 = pneg %p207
        $region74: #{dcgan_generator_forward.6} parent=63 // pred_check_branch
          %1471 = sbr.rel (%p1469) target = $region76
        $region75: #{dcgan_generator_forward.6} parent=63 // pred_region
          %p1472 = scmp.lt.s32.totalorder %s22, 1
          %s1473 = scalar_select %p1472, %s22, 1
          %s1474 = scalar_lea.vmem %s7, %s1473
        $region76: #{dcgan_generator_forward.6} parent=63 // pred_fallthru
          _
      $region64: #{dcgan_generator_forward.6} parent=5 // pred_fallthru
        _
    $region6: #{dcgan_generator_forward.6} parent=1 // loop_footer
      %s20 = sadd.s32 1, %s16
    $region7: #{dcgan_generator_forward.6} parent=1 // loop_footer_branch
      %15 = sbr.rel target = $region3
    $region8: #{dcgan_generator_forward.6} parent=1 // loop_exit
      _
    %1475 = vsyncpa [#allocation3], 1
    %s1476 = scalar_lea.sflag [#allocation3], 1
    %1477 = vsyncpa %s1476, 1
    %1478 = vsyncpa [#allocation5], 1

</llo_original>
